<compile_context>
chip_gen: v7x
topology: tpu7x:2x2x1
jax: 0.10.0
libtpu: 0.0.40
codegen_flags: <defaults>
</compile_context>

<pallas_src>
import functools
import math

import jax
import jax.numpy as jnp
from jax.experimental import pallas as pl
from jax.experimental.pallas import tpu as pltpu


# Row tile for the M (= B*S or B*Ncls) dimension. 256 keeps double-buffered
# f32/bf16 FFN tiles under every generation's scoped-VMEM budget once the
# limit below is applied; v6e can go 512+ at BERT-base.
BLOCK_M = 256
# Raised scoped-VMEM limit (default is 16 MiB on v5e / 32 MiB on v6e+); 48 MiB
# leaves headroom under v7x's 64 MiB physical VMEM.
VMEM_LIMIT_BYTES = 48 * 1024 * 1024


def _mosaic(*sem):
    return pltpu.CompilerParams(dimension_semantics=tuple(sem),
                                vmem_limit_bytes=VMEM_LIMIT_BYTES)


def _pick_bm(m, block_m=BLOCK_M):
    """Row tile: as big as allowed, but keep >=2 grid steps when possible so
    the 'parallel' row axis can be sharded across both v7x TensorCores."""
    bm = min(block_m, m)
    if bm == m and m >= 16 and m % 16 == 0:
        bm = m // 2
    return bm


# ----------------------------------------------------------------------------
# Pallas kernels
# ----------------------------------------------------------------------------

def _dense_kernel(x_ref, w_ref, b_ref, o_ref, *, activation):
    # x: (TM, K) bf16, w: (K, N) bf16, b: (1, N) f32 -> o: (TM, N) bf16
    x = x_ref[...].astype(jnp.bfloat16)
    y = jnp.dot(x, w_ref[...], preferred_element_type=jnp.float32)
    y = y + b_ref[...]
    if activation == "gelu":
        # tanh-approx GELU in f32 (v5e has no bf16 VPU/EUP path).
        # TODO(synk): reference BERT uses erf GELU; tanh approx deviates slightly.
        y = 0.5 * y * (1.0 + jnp.tanh(0.7978845608028654
                                      * (y + 0.044715 * y * y * y)))
    o_ref[...] = y.astype(o_ref.dtype)


def dense(x, w, b, activation=None, block_m=BLOCK_M):
    m, k = x.shape
    _, n = w.shape
    bm = _pick_bm(m, block_m)
    cost = pl.CostEstimate(
        flops=2 * m * k * n,
        transcendentals=(m * n if activation == "gelu" else 0),
        bytes_accessed=m * k * x.dtype.itemsize + k * n * 2 + n * 4 + m * n * 2)
    return pl.pallas_call(
        functools.partial(_dense_kernel, activation=activation),
        out_shape=jax.ShapeDtypeStruct((m, n), jnp.bfloat16),
        grid=(pl.cdiv(m, bm),),
        in_specs=[
            pl.BlockSpec((bm, k), lambda i: (i, 0)),
            pl.BlockSpec((k, n), lambda i: (0, 0)),
            pl.BlockSpec((1, n), lambda i: (0, 0)),
        ],
        out_specs=pl.BlockSpec((bm, n), lambda i: (i, 0)),
        compiler_params=_mosaic("parallel"),
        cost_estimate=cost,
    )(x, w, b)


def _dense_add_ln_kernel(x_ref, w_ref, b_ref, r_ref, g_ref, bb_ref, o_ref,
                         *, eps):
    # matmul + bias + residual add + LayerNorm fused on one row tile.
    x = x_ref[...].astype(jnp.bfloat16)
    y = jnp.dot(x, w_ref[...], preferred_element_type=jnp.float32)
    y = y + b_ref[...] + r_ref[...].astype(jnp.float32)
    mu = jnp.mean(y, axis=-1, keepdims=True)
    yc = y - mu
    var = jnp.mean(yc * yc, axis=-1, keepdims=True)
    inv = jax.lax.rsqrt(var + eps)
    o_ref[...] = (yc * inv * g_ref[...] + bb_ref[...]).astype(o_ref.dtype)


def dense_add_ln(x, w, b, residual, gamma, beta, eps=1e-12, block_m=BLOCK_M):
    m, k = x.shape
    _, n = w.shape
    bm = _pick_bm(m, block_m)
    cost = pl.CostEstimate(
        flops=2 * m * k * n + 10 * m * n,
        transcendentals=m,
        bytes_accessed=(m * k * x.dtype.itemsize + k * n * 2 + 3 * n * 4
                        + m * n * residual.dtype.itemsize + m * n * 2))
    return pl.pallas_call(
        functools.partial(_dense_add_ln_kernel, eps=eps),
        out_shape=jax.ShapeDtypeStruct((m, n), jnp.bfloat16),
        grid=(pl.cdiv(m, bm),),
        in_specs=[
            pl.BlockSpec((bm, k), lambda i: (i, 0)),
            pl.BlockSpec((k, n), lambda i: (0, 0)),
            pl.BlockSpec((1, n), lambda i: (0, 0)),
            pl.BlockSpec((bm, n), lambda i: (i, 0)),
            pl.BlockSpec((1, n), lambda i: (0, 0)),
            pl.BlockSpec((1, n), lambda i: (0, 0)),
        ],
        out_specs=pl.BlockSpec((bm, n), lambda i: (i, 0)),
        compiler_params=_mosaic("parallel"),
        cost_estimate=cost,
    )(x, w, b, residual, gamma, beta)


def _embed_ln_kernel(we_ref, pe_ref, se_ref, g_ref, b_ref, o_ref, *, eps):
    # fused word+pos+segment embedding sum + LayerNorm (no HBM `emb` tensor).
    x = we_ref[...] + pe_ref[...] + se_ref[...]
    mu = jnp.mean(x, axis=-1, keepdims=True)
    xc = x - mu
    var = jnp.mean(xc * xc, axis=-1, keepdims=True)
    inv = jax.lax.rsqrt(var + eps)
    o_ref[...] = (xc * inv * g_ref[...] + b_ref[...]).astype(o_ref.dtype)


def embed_layernorm(word_e, pos_e, seg_e, gamma, beta, eps=1e-12,
                    block_m=BLOCK_M):
    m, hdim = word_e.shape
    bm = _pick_bm(m, block_m)
    cost = pl.CostEstimate(
        flops=10 * m * hdim, transcendentals=m,
        bytes_accessed=3 * m * hdim * 4 + 2 * hdim * 4 + m * hdim * 2)
    row_spec = pl.BlockSpec((bm, hdim), lambda i: (i, 0))
    vec_spec = pl.BlockSpec((1, hdim), lambda i: (0, 0))
    return pl.pallas_call(
        functools.partial(_embed_ln_kernel, eps=eps),
        out_shape=jax.ShapeDtypeStruct((m, hdim), jnp.bfloat16),
        grid=(pl.cdiv(m, bm),),
        in_specs=[row_spec, row_spec, row_spec, vec_spec, vec_spec],
        out_specs=pl.BlockSpec((bm, hdim), lambda i: (i, 0)),
        compiler_params=_mosaic("parallel"),
        cost_estimate=cost,
    )(word_e, pos_e, seg_e, gamma, beta)


def _attention_kernel(q_ref, k_ref, v_ref, neg_ref, o_ref, *, scale, hpb, dh):
    # q/k/v refs: (S, hpb*Dh) bf16 head-group slices of the fused QKV
    # activation; neg: (1, 1, S) f32 additive key-mask bias; o: (S, hpb*Dh).
    neg = neg_ref[0]                                  # (1, S) f32
    outs = []
    for h in range(hpb):                              # static unroll over heads
        q = q_ref[:, h * dh:(h + 1) * dh]             # (S, Dh) bf16
        k = k_ref[:, h * dh:(h + 1) * dh]
        v = v_ref[:, h * dh:(h + 1) * dh]
        s = jax.lax.dot_general(q, k, (((1,), (1,)), ((), ())),
                                preferred_element_type=jnp.float32) * scale
        s = s + neg
        s = s - jnp.max(s, axis=-1, keepdims=True)
        p = jnp.exp(s)
        denom = jnp.sum(p, axis=-1, keepdims=True)
        p = p * pl.reciprocal(denom, approx=True)     # EUP reciprocal, not VALU div
        outs.append(jnp.dot(p.astype(jnp.bfloat16), v,
                            preferred_element_type=jnp.float32))
    ctx = outs[0] if hpb == 1 else jnp.concatenate(outs, axis=-1)
    o_ref[...] = ctx.astype(o_ref.dtype)              # lane-dense (S, hpb*Dh) store


def attention_from_qkv(qkv, neg3, *, batch, seq, heads):
    """Multi-head self-attention reading Q/K/V straight out of the fused
    (B*S, 3H) activation and writing ctx in (B*S, H) layout (no transposes)."""
    m, three_h = qkv.shape
    hidden = three_h // 3
    dh = hidden // heads
    scale = 1.0 / math.sqrt(dh)

    # smallest head-group whose lane width is a 128 multiple (unmasked stores,
    # good MXU column occupancy on the 256-wide v6e/v7x MXU).
    hpb = None
    for cand in range(1, heads + 1):
        if heads % cand == 0 and (cand * dh) % 128 == 0:
            hpb = cand
            break

    cost = pl.CostEstimate(
        flops=4 * batch * heads * seq * seq * dh,
        transcendentals=batch * heads * seq * seq,
        bytes_accessed=3 * m * hidden * 2 + batch * seq * 4 + m * hidden * 2)

    if hpb is not None:
        n_grp = heads // hpb
        width = hpb * dh

        def q_map(b, g):
            return (b, g)

        def k_map(b, g):
            return (b, n_grp + g)

        def v_map(b, g):
            return (b, 2 * n_grp + g)

        return pl.pallas_call(
            functools.partial(_attention_kernel, scale=scale, hpb=hpb, dh=dh),
            out_shape=jax.ShapeDtypeStruct((m, hidden), jnp.bfloat16),
            grid=(batch, n_grp),
            in_specs=[
                pl.BlockSpec((seq, width), q_map),
                pl.BlockSpec((seq, width), k_map),
                pl.BlockSpec((seq, width), v_map),
                pl.BlockSpec((1, 1, seq), lambda b, g: (b, 0, 0)),
            ],
            out_specs=pl.BlockSpec((seq, width), q_map),
            compiler_params=_mosaic("parallel", "parallel"),
            cost_estimate=cost,
        )(qkv, qkv, qkv, neg3)

    # Fallback (head-group width can't reach a 128-lane multiple): materialize
    # per-head layouts in XLA — extra HBM traffic, but always block-legal.
    qkv4 = qkv.reshape(batch, seq, 3, heads, dh).transpose(2, 0, 3, 1, 4)
    q2 = qkv4[0].reshape(batch * heads * seq, dh)
    k2 = qkv4[1].reshape(batch * heads * seq, dh)
    v2 = qkv4[2].reshape(batch * heads * seq, dh)

    def head_map(b, h):
        return (b * heads + h, 0)

    ctx = pl.pallas_call(
        functools.partial(_attention_kernel, scale=scale, hpb=1, dh=dh),
        out_shape=jax.ShapeDtypeStruct((batch * heads * seq, dh), jnp.bfloat16),
        grid=(batch, heads),
        in_specs=[
            pl.BlockSpec((seq, dh), head_map),
            pl.BlockSpec((seq, dh), head_map),
            pl.BlockSpec((seq, dh), head_map),
            pl.BlockSpec((1, 1, seq), lambda b, h: (b, 0, 0)),
        ],
        out_specs=pl.BlockSpec((seq, dh), head_map),
        compiler_params=_mosaic("parallel", "parallel"),
        cost_estimate=cost,
    )(q2, k2, v2, neg3)
    return ctx.reshape(batch, heads, seq, dh).transpose(0, 2, 1, 3).reshape(m, hidden)


def _classifier_kernel(x_ref, w_ref, b_ref, m_ref, o_ref):
    # Linear(H -> 1) as a VPU row reduction + sigmoid, masked.
    x = x_ref[...].astype(jnp.float32)
    h = jnp.sum(x * w_ref[...], axis=-1, keepdims=True) + b_ref[...]
    o_ref[...] = jax.nn.sigmoid(h) * m_ref[...]


def classifier(x, w, b, mask, block_m=BLOCK_M):
    m, hdim = x.shape
    bm = _pick_bm(m, block_m)
    cost = pl.CostEstimate(
        flops=2 * m * hdim, transcendentals=m,
        bytes_accessed=m * hdim * x.dtype.itemsize + hdim * 4 + m * 4 + m * 4)
    return pl.pallas_call(
        _classifier_kernel,
        out_shape=jax.ShapeDtypeStruct((m, 1), jnp.float32),
        grid=(pl.cdiv(m, bm),),
        in_specs=[
            pl.BlockSpec((bm, hdim), lambda i: (i, 0)),
            pl.BlockSpec((1, hdim), lambda i: (0, 0)),
            pl.BlockSpec((1, 1), lambda i: (0, 0)),
            pl.BlockSpec((bm, 1), lambda i: (i, 0)),
        ],
        out_specs=pl.BlockSpec((bm, 1), lambda i: (i, 0)),
        compiler_params=_mosaic("parallel"),
        cost_estimate=cost,
    )(x, w, b, mask)


# ----------------------------------------------------------------------------
# Model (parameter init + forward, glue in plain JAX)
# ----------------------------------------------------------------------------

# Small demo config: H=128, heads=2 -> Dh=64 (same head width as BERT-base),
# so the 128-lane attention head-grouping fast path is exercised.
CFG = dict(vocab=64, hidden=128, layers=2, heads=2, inter=256, max_pos=64,
           type_vocab=2)


def init_params(key, cfg=CFG):
    H, nL, I = cfg["hidden"], cfg["layers"], cfg["inter"]

    def nrm(k, shape, scale=0.02):
        return scale * jax.random.normal(k, shape, dtype=jnp.float32)

    keys = iter(jax.random.split(key, 8 + nL * 8))
    p = {
        "word_emb": nrm(next(keys), (cfg["vocab"], H)),
        "pos_emb": nrm(next(keys), (cfg["max_pos"], H)),
        "seg_emb": nrm(next(keys), (cfg["type_vocab"], H)),
        "emb_ln_g": jnp.ones((1, H), jnp.float32),
        "emb_ln_b": jnp.zeros((1, H), jnp.float32),
        "cls_w": nrm(next(keys), (1, H)),            # row vector for VPU reduce
        "cls_b": jnp.zeros((1, 1), jnp.float32),
        "layers": [],
    }
    for _ in range(nL):
        wq = nrm(next(keys), (H, H))
        wk = nrm(next(keys), (H, H))
        wv = nrm(next(keys), (H, H))
        layer = {
            # fused QKV projection; matmul weights stored bf16 for the MXU
            "w_qkv": jnp.concatenate([wq, wk, wv], axis=1).astype(jnp.bfloat16),
            "b_qkv": jnp.zeros((1, 3 * H), jnp.float32),
            "wo": nrm(next(keys), (H, H)).astype(jnp.bfloat16),
            "bo": jnp.zeros((1, H), jnp.float32),
            "ln1_g": jnp.ones((1, H), jnp.float32),
            "ln1_b": jnp.zeros((1, H), jnp.float32),
            "w1": nrm(next(keys), (H, I)).astype(jnp.bfloat16),
            "b1": jnp.zeros((1, I), jnp.float32),
            "w2": nrm(next(keys), (I, H)).astype(jnp.bfloat16),
            "b2": jnp.zeros((1, H), jnp.float32),
            "ln2_g": jnp.ones((1, H), jnp.float32),
            "ln2_b": jnp.zeros((1, H), jnp.float32),
        }
        p["layers"].append(layer)
    return p


def bert_layer(p, h2d, neg3, *, batch, seq, heads):
    # h2d: (B*S, H) bf16 hidden state.
    qkv = dense(h2d, p["w_qkv"], p["b_qkv"])                       # (B*S, 3H) bf16
    ctx = attention_from_qkv(qkv, neg3, batch=batch, seq=seq,
                             heads=heads)                          # (B*S, H) bf16
    # output projection fused with residual add + LayerNorm
    h1 = dense_add_ln(ctx, p["wo"], p["bo"], h2d, p["ln1_g"], p["ln1_b"])
    inter = dense(h1, p["w1"], p["b1"], activation="gelu")         # (B*S, I) bf16
    # FFN down-projection fused with residual add + LayerNorm
    h2 = dense_add_ln(inter, p["w2"], p["b2"], h1, p["ln2_g"], p["ln2_b"])
    return h2                                                      # (B*S, H) bf16


def bert_encoder(params, article, segment_id, input_mask, *, heads):
    B, S = article.shape
    H = params["word_emb"].shape[1]
    word_e = params["word_emb"][article].reshape(B * S, H)
    seg_e = params["seg_emb"][segment_id].reshape(B * S, H)
    pos_e = jnp.broadcast_to(params["pos_emb"][:S][None, :, :],
                             (B, S, H)).reshape(B * S, H)
    # fused embedding-sum + LayerNorm -> bf16 hidden state
    h = embed_layernorm(word_e, pos_e, seg_e,
                        params["emb_ln_g"], params["emb_ln_b"])
    # additive attention-mask bias (key mask), computed once per forward pass
    neg3 = (1.0 - input_mask.astype(jnp.float32).reshape(B, 1, S)) * (-1e9)
    for lyr in params["layers"]:
        h = bert_layer(lyr, h, neg3, batch=B, seq=S, heads=heads)
    return h                                                       # (B*S, H) bf16


def bertsum_forward(params, article, segment_id, cls_id, *, heads):
    # input_mask = 1 - (article == 0) ; mask_cls = 1 - (cls_id == -1)
    input_mask = 1 - (article == 0).astype(jnp.int32)
    mask_cls = 1 - (cls_id == -1).astype(jnp.int32)

    B, S = article.shape
    H = params["word_emb"].shape[1]
    Ncls = cls_id.shape[1]

    h = bert_encoder(params, article, segment_id, input_mask, heads=heads)
    bert_out = h.reshape(B, S, H)

    # gather sentence ([CLS]) embeddings; padded cls_id=-1 positions are zeroed
    # by the classifier mask, so clamping the index to 0 is equivalent to the
    # PyTorch negative-index gather followed by masking.
    safe_cls = jnp.where(cls_id < 0, 0, cls_id)
    sent_emb = jnp.take_along_axis(bert_out, safe_cls[:, :, None], axis=1)

    x2 = sent_emb.reshape(B * Ncls, H)
    m2 = mask_cls.reshape(B * Ncls, 1).astype(jnp.float32)
    sent_scores = classifier(x2, params["cls_w"], params["cls_b"], m2)
    sent_scores = sent_scores.reshape(B, Ncls)
    return {"pred": sent_scores, "mask": mask_cls}


# ----------------------------------------------------------------------------
# main
# ----------------------------------------------------------------------------

if __name__ == "__main__":
    B, S, Ncls = 2, 16, 4
    heads = CFG["heads"]

    key = jax.random.PRNGKey(0)
    k_param, k_art, k_seg = jax.random.split(key, 3)

    params = init_params(k_param)

    # token ids (0 = padding); pad the tail of each sequence
    article = jax.random.randint(k_art, (B, S), 1, CFG["vocab"], dtype=jnp.int32)
    article = article.at[0, 12:].set(0)
    article = article.at[1, 14:].set(0)
    segment_id = jax.random.randint(k_seg, (B, S), 0, 2, dtype=jnp.int32)
    cls_id = jnp.array([[0, 4, 8, -1],
                        [0, 3, 7, 11]], dtype=jnp.int32)

    fwd = jax.jit(functools.partial(bertsum_forward, heads=heads))
    out = fwd(params, article, segment_id, cls_id)
    out = jax.block_until_ready(out)

    assert out["pred"].shape == (B, Ncls)
    assert out["mask"].shape == (B, Ncls)
    print("KERNEL_OK")
</pallas_src>

<mosaic_0001>
module attributes {stable_mosaic.version = 11 : i64} {
  func.func @_dense_kernel(%arg0: i32, %arg1: memref<16x128xbf16, #tpu.memory_space<vmem>>, %arg2: memref<128x384xbf16, #tpu.memory_space<vmem>>, %arg3: memref<1x384xf32, #tpu.memory_space<vmem>>, %arg4: memref<16x384xbf16, #tpu.memory_space<vmem>>) attributes {dimension_semantics = [#tpu.dimension_semantics<parallel>], iteration_bounds = array<i64: 2>, scalar_prefetch = 0 : i64, scratch_operands = 0 : i64, tpu.core_type = #tpu.core_type<tc>, window_params = [{transform_indices = @transform_0, window_bounds = array<i64: 16, 128>}, {pipeline_mode = #tpu.pipeline_mode<synchronous>, transform_indices = @transform_1, window_bounds = array<i64: 128, 384>}, {pipeline_mode = #tpu.pipeline_mode<synchronous>, transform_indices = @transform_2, window_bounds = array<i64: 1, 384>}, {transform_indices = @transform_3, window_bounds = array<i64: 16, 384>}]} {
    %c0 = arith.constant 0 : index
    %c0_0 = arith.constant 0 : index
    %0 = vector.load %arg1[%c0, %c0_0] : memref<16x128xbf16, #tpu.memory_space<vmem>>, vector<16x128xbf16>
    %c0_1 = arith.constant 0 : index
    %c0_2 = arith.constant 0 : index
    %1 = vector.load %arg2[%c0_1, %c0_2] : memref<128x384xbf16, #tpu.memory_space<vmem>>, vector<128x384xbf16>
    %cst = arith.constant dense<0.000000e+00> : vector<16x384xf32>
    %2 = tpu.matmul %0, %1, %cst {dimension_numbers = #tpu.dot_dimension_numbers<[1], [0], [0], [1], [0, 0, 1, 1], [], []>} : vector<16x128xbf16>, vector<128x384xbf16>, vector<16x384xf32> -> vector<16x384xf32>
    %c0_3 = arith.constant 0 : index
    %c0_4 = arith.constant 0 : index
    %3 = vector.load %arg3[%c0_3, %c0_4] : memref<1x384xf32, #tpu.memory_space<vmem>>, vector<1x384xf32>
    %4 = vector.broadcast %3 : vector<1x384xf32> to vector<16x384xf32>
    %5 = arith.addf %2, %4 : vector<16x384xf32>
    %6 = arith.truncf %5 : vector<16x384xf32> to vector<16x384xbf16>
    %c0_5 = arith.constant 0 : index
    %c0_6 = arith.constant 0 : index
    %7 = vector.load %arg4[%c0_5, %c0_6] : memref<16x384xbf16, #tpu.memory_space<vmem>>, vector<16x384xbf16>
    tpu.vector_store %arg4[%c0_5, %c0_6], %6 {strides = array<i32>} : memref<16x384xbf16, #tpu.memory_space<vmem>>, vector<16x384xbf16>,
    return
  }
  func.func @transform_0(%arg0: i32) -> (i32, i32) {
    %c0_i32 = arith.constant 0 : i32
    %c0_i32_0 = arith.constant 0 : i32
    return %arg0, %c0_i32 : i32, i32
  }
  func.func @transform_1(%arg0: i32) -> (i32, i32) {
    %c0_i32 = arith.constant 0 : i32
    %c0_i32_0 = arith.constant 0 : i32
    %c0_i32_1 = arith.constant 0 : i32
    return %c0_i32, %c0_i32_0 : i32, i32
  }
  func.func @transform_2(%arg0: i32) -> (i32, i32) {
    %c0_i32 = arith.constant 0 : i32
    %c0_i32_0 = arith.constant 0 : i32
    %c0_i32_1 = arith.constant 0 : i32
    return %c0_i32, %c0_i32_0 : i32, i32
  }
  func.func @transform_3(%arg0: i32) -> (i32, i32) {
    %c0_i32 = arith.constant 0 : i32
    %c0_i32_0 = arith.constant 0 : i32
    return %arg0, %c0_i32 : i32, i32
  }
}

module attributes {stable_mosaic.version = 11 : i64} {
  func.func @_embed_ln_kernel(%arg0: i32, %arg1: memref<16x128xf32, #tpu.memory_space<vmem>>, %arg2: memref<16x128xf32, #tpu.memory_space<vmem>>, %arg3: memref<16x128xf32, #tpu.memory_space<vmem>>, %arg4: memref<1x128xf32, #tpu.memory_space<vmem>>, %arg5: memref<1x128xf32, #tpu.memory_space<vmem>>, %arg6: memref<16x128xbf16, #tpu.memory_space<vmem>>) attributes {dimension_semantics = [#tpu.dimension_semantics<parallel>], iteration_bounds = array<i64: 2>, scalar_prefetch = 0 : i64, scratch_operands = 0 : i64, tpu.core_type = #tpu.core_type<tc>, window_params = [{transform_indices = @transform_0, window_bounds = array<i64: 16, 128>}, {transform_indices = @transform_1, window_bounds = array<i64: 16, 128>}, {transform_indices = @transform_2, window_bounds = array<i64: 16, 128>}, {pipeline_mode = #tpu.pipeline_mode<synchronous>, transform_indices = @transform_3, window_bounds = array<i64: 1, 128>}, {pipeline_mode = #tpu.pipeline_mode<synchronous>, transform_indices = @transform_4, window_bounds = array<i64: 1, 128>}, {transform_indices = @transform_5, window_bounds = array<i64: 16, 128>}]} {
    %c0 = arith.constant 0 : index
    %c0_0 = arith.constant 0 : index
    %0 = vector.load %arg1[%c0, %c0_0] : memref<16x128xf32, #tpu.memory_space<vmem>>, vector<16x128xf32>
    %c0_1 = arith.constant 0 : index
    %c0_2 = arith.constant 0 : index
    %1 = vector.load %arg2[%c0_1, %c0_2] : memref<16x128xf32, #tpu.memory_space<vmem>>, vector<16x128xf32>
    %2 = arith.addf %0, %1 : vector<16x128xf32>
    %c0_3 = arith.constant 0 : index
    %c0_4 = arith.constant 0 : index
    %3 = vector.load %arg3[%c0_3, %c0_4] : memref<16x128xf32, #tpu.memory_space<vmem>>, vector<16x128xf32>
    %4 = arith.addf %2, %3 : vector<16x128xf32>
    %cst = arith.constant dense<0.000000e+00> : vector<16xf32>
    %5 = vector.multi_reduction <add>, %4, %cst [1] : vector<16x128xf32> to vector<16xf32>
    %6 = vector.shape_cast %5 : vector<16xf32> to vector<16x1xf32>
    %cst_5 = arith.constant 1.280000e+02 : f32
    %7 = vector.broadcast %cst_5 : f32 to vector<16x1xf32>
    %8 = arith.divf %6, %7 : vector<16x1xf32>
    %9 = vector.broadcast %8 : vector<16x1xf32> to vector<16x128xf32>
    %10 = arith.subf %4, %9 : vector<16x128xf32>
    %11 = arith.mulf %10, %10 : vector<16x128xf32>
    %cst_6 = arith.constant dense<0.000000e+00> : vector<16xf32>
    %12 = vector.multi_reduction <add>, %11, %cst_6 [1] : vector<16x128xf32> to vector<16xf32>
    %13 = vector.shape_cast %12 : vector<16xf32> to vector<16x1xf32>
    %cst_7 = arith.constant 1.280000e+02 : f32
    %14 = vector.broadcast %cst_7 : f32 to vector<16x1xf32>
    %15 = arith.divf %13, %14 : vector<16x1xf32>
    %cst_8 = arith.constant 9.99999996E-13 : f32
    %16 = vector.broadcast %cst_8 : f32 to vector<16x1xf32>
    %17 = arith.addf %15, %16 : vector<16x1xf32>
    %18 = math.rsqrt %17 : vector<16x1xf32>
    %19 = vector.broadcast %18 : vector<16x1xf32> to vector<16x128xf32>
    %20 = arith.mulf %10, %19 : vector<16x128xf32>
    %c0_9 = arith.constant 0 : index
    %c0_10 = arith.constant 0 : index
    %21 = vector.load %arg4[%c0_9, %c0_10] : memref<1x128xf32, #tpu.memory_space<vmem>>, vector<1x128xf32>
    %22 = vector.broadcast %21 : vector<1x128xf32> to vector<16x128xf32>
    %23 = arith.mulf %20, %22 : vector<16x128xf32>
    %c0_11 = arith.constant 0 : index
    %c0_12 = arith.constant 0 : index
    %24 = vector.load %arg5[%c0_11, %c0_12] : memref<1x128xf32, #tpu.memory_space<vmem>>, vector<1x128xf32>
    %25 = vector.broadcast %24 : vector<1x128xf32> to vector<16x128xf32>
    %26 = arith.addf %23, %25 : vector<16x128xf32>
    %27 = arith.truncf %26 : vector<16x128xf32> to vector<16x128xbf16>
    %c0_13 = arith.constant 0 : index
    %c0_14 = arith.constant 0 : index
    %28 = vector.load %arg6[%c0_13, %c0_14] : memref<16x128xbf16, #tpu.memory_space<vmem>>, vector<16x128xbf16>
    tpu.vector_store %arg6[%c0_13, %c0_14], %27 {strides = array<i32>} : memref<16x128xbf16, #tpu.memory_space<vmem>>, vector<16x128xbf16>,
    return
  }
  func.func @transform_0(%arg0: i32) -> (i32, i32) {
    %c0_i32 = arith.constant 0 : i32
    %c0_i32_0 = arith.constant 0 : i32
    return %arg0, %c0_i32 : i32, i32
  }
  func.func @transform_1(%arg0: i32) -> (i32, i32) {
    %c0_i32 = arith.constant 0 : i32
    %c0_i32_0 = arith.constant 0 : i32
    return %arg0, %c0_i32 : i32, i32
  }
  func.func @transform_2(%arg0: i32) -> (i32, i32) {
    %c0_i32 = arith.constant 0 : i32
    %c0_i32_0 = arith.constant 0 : i32
    return %arg0, %c0_i32 : i32, i32
  }
  func.func @transform_3(%arg0: i32) -> (i32, i32) {
    %c0_i32 = arith.constant 0 : i32
    %c0_i32_0 = arith.constant 0 : i32
    %c0_i32_1 = arith.constant 0 : i32
    return %c0_i32, %c0_i32_0 : i32, i32
  }
  func.func @transform_4(%arg0: i32) -> (i32, i32) {
    %c0_i32 = arith.constant 0 : i32
    %c0_i32_0 = arith.constant 0 : i32
    %c0_i32_1 = arith.constant 0 : i32
    return %c0_i32, %c0_i32_0 : i32, i32
  }
  func.func @transform_5(%arg0: i32) -> (i32, i32) {
    %c0_i32 = arith.constant 0 : i32
    %c0_i32_0 = arith.constant 0 : i32
    return %arg0, %c0_i32 : i32, i32
  }
}

module attributes {stable_mosaic.version = 11 : i64} {
  func.func @_attention_kernel(%arg0: i32, %arg1: i32, %arg2: memref<16x128xbf16, #tpu.memory_space<vmem>>, %arg3: memref<16x128xbf16, #tpu.memory_space<vmem>>, %arg4: memref<16x128xbf16, #tpu.memory_space<vmem>>, %arg5: memref<1x1x16xf32, #tpu.memory_space<vmem>>, %arg6: memref<16x128xbf16, #tpu.memory_space<vmem>>) attributes {dimension_semantics = [#tpu.dimension_semantics<parallel>, #tpu.dimension_semantics<parallel>], iteration_bounds = array<i64: 2, 1>, scalar_prefetch = 0 : i64, scratch_operands = 0 : i64, tpu.core_type = #tpu.core_type<tc>, window_params = [{transform_indices = @transform_0, window_bounds = array<i64: 16, 128>}, {transform_indices = @transform_1, window_bounds = array<i64: 16, 128>}, {transform_indices = @transform_2, window_bounds = array<i64: 16, 128>}, {transform_indices = @transform_3, window_bounds = array<i64: 1, 1, 16>}, {transform_indices = @transform_4, window_bounds = array<i64: 16, 128>}]} {
    %c0 = arith.constant 0 : index
    %c0_0 = arith.constant 0 : index
    %c0_1 = arith.constant 0 : index
    %0 = vector.load %arg5[%c0, %c0_0, %c0_1] : memref<1x1x16xf32, #tpu.memory_space<vmem>>, vector<1x1x16xf32>
    %1 = vector.shape_cast %0 : vector<1x1x16xf32> to vector<1x16xf32>
    %c0_2 = arith.constant 0 : index
    %c0_3 = arith.constant 0 : index
    %2 = vector.load %arg2[%c0_2, %c0_3] : memref<16x128xbf16, #tpu.memory_space<vmem>>, vector<16x64xbf16>
    %c0_4 = arith.constant 0 : index
    %c0_5 = arith.constant 0 : index
    %3 = vector.load %arg3[%c0_4, %c0_5] : memref<16x128xbf16, #tpu.memory_space<vmem>>, vector<16x64xbf16>
    %c0_6 = arith.constant 0 : index
    %c0_7 = arith.constant 0 : index
    %4 = vector.load %arg4[%c0_6, %c0_7] : memref<16x128xbf16, #tpu.memory_space<vmem>>, vector<16x64xbf16>
    %cst = arith.constant dense<0.000000e+00> : vector<16x16xf32>
    %5 = tpu.matmul %2, %3, %cst {dimension_numbers = #tpu.dot_dimension_numbers<[1], [1], [0], [0], [0, 0, 1, 0], [], []>} : vector<16x64xbf16>, vector<16x64xbf16>, vector<16x16xf32> -> vector<16x16xf32>
    %cst_8 = arith.constant 1.250000e-01 : f32
    %6 = vector.broadcast %cst_8 : f32 to vector<16x16xf32>
    %7 = arith.mulf %5, %6 : vector<16x16xf32>
    %8 = vector.broadcast %1 : vector<1x16xf32> to vector<16x16xf32>
    %9 = arith.addf %7, %8 : vector<16x16xf32>
    %cst_9 = arith.constant dense<0xFF800000> : vector<16xf32>
    %10 = vector.multi_reduction <maximumf>, %9, %cst_9 [1] : vector<16x16xf32> to vector<16xf32>
    %11 = vector.shape_cast %10 : vector<16xf32> to vector<16x1xf32>
    %12 = vector.broadcast %11 : vector<16x1xf32> to vector<16x16xf32>
    %13 = arith.subf %9, %12 : vector<16x16xf32>
    %14 = math.exp %13 : vector<16x16xf32>
    %cst_10 = arith.constant dense<0.000000e+00> : vector<16xf32>
    %15 = vector.multi_reduction <add>, %14, %cst_10 [1] : vector<16x16xf32> to vector<16xf32>
    %16 = vector.shape_cast %15 : vector<16xf32> to vector<16x1xf32>
    %17 = tpu.reciprocal %16 {approx = true} : vector<16x1xf32> -> vector<16x1xf32>
    %18 = vector.broadcast %17 : vector<16x1xf32> to vector<16x16xf32>
    %19 = arith.mulf %14, %18 : vector<16x16xf32>
    %20 = arith.truncf %19 : vector<16x16xf32> to vector<16x16xbf16>
    %cst_11 = arith.constant dense<0.000000e+00> : vector<16x64xf32>
    %21 = tpu.matmul %20, %4, %cst_11 {dimension_numbers = #tpu.dot_dimension_numbers<[1], [0], [0], [1], [0, 0, 1, 1], [], []>} : vector<16x16xbf16>, vector<16x64xbf16>, vector<16x64xf32> -> vector<16x64xf32>
    %c0_12 = arith.constant 0 : index
    %c64 = arith.constant 64 : index
    %22 = vector.load %arg2[%c0_12, %c64] : memref<16x128xbf16, #tpu.memory_space<vmem>>, vector<16x64xbf16>
    %c0_13 = arith.constant 0 : index
    %c64_14 = arith.constant 64 : index
    %23 = vector.load %arg3[%c0_13, %c64_14] : memref<16x128xbf16, #tpu.memory_space<vmem>>, vector<16x64xbf16>
    %c0_15 = arith.constant 0 : index
    %c64_16 = arith.constant 64 : index
    %24 = vector.load %arg4[%c0_15, %c64_16] : memref<16x128xbf16, #tpu.memory_space<vmem>>, vector<16x64xbf16>
    %cst_17 = arith.constant dense<0.000000e+00> : vector<16x16xf32>
    %25 = tpu.matmul %22, %23, %cst_17 {dimension_numbers = #tpu.dot_dimension_numbers<[1], [1], [0], [0], [0, 0, 1, 0], [], []>} : vector<16x64xbf16>, vector<16x64xbf16>, vector<16x16xf32> -> vector<16x16xf32>
    %cst_18 = arith.constant 1.250000e-01 : f32
    %26 = vector.broadcast %cst_18 : f32 to vector<16x16xf32>
    %27 = arith.mulf %25, %26 : vector<16x16xf32>
    %28 = vector.broadcast %1 : vector<1x16xf32> to vector<16x16xf32>
    %29 = arith.addf %27, %28 : vector<16x16xf32>
    %cst_19 = arith.constant dense<0xFF800000> : vector<16xf32>
    %30 = vector.multi_reduction <maximumf>, %29, %cst_19 [1] : vector<16x16xf32> to vector<16xf32>
    %31 = vector.shape_cast %30 : vector<16xf32> to vector<16x1xf32>
    %32 = vector.broadcast %31 : vector<16x1xf32> to vector<16x16xf32>
    %33 = arith.subf %29, %32 : vector<16x16xf32>
    %34 = math.exp %33 : vector<16x16xf32>
    %cst_20 = arith.constant dense<0.000000e+00> : vector<16xf32>
    %35 = vector.multi_reduction <add>, %34, %cst_20 [1] : vector<16x16xf32> to vector<16xf32>
    %36 = vector.shape_cast %35 : vector<16xf32> to vector<16x1xf32>
    %37 = tpu.reciprocal %36 {approx = true} : vector<16x1xf32> -> vector<16x1xf32>
    %38 = vector.broadcast %37 : vector<16x1xf32> to vector<16x16xf32>
    %39 = arith.mulf %34, %38 : vector<16x16xf32>
    %40 = arith.truncf %39 : vector<16x16xf32> to vector<16x16xbf16>
    %cst_21 = arith.constant dense<0.000000e+00> : vector<16x64xf32>
    %41 = tpu.matmul %40, %24, %cst_21 {dimension_numbers = #tpu.dot_dimension_numbers<[1], [0], [0], [1], [0, 0, 1, 1], [], []>} : vector<16x16xbf16>, vector<16x64xbf16>, vector<16x64xf32> -> vector<16x64xf32>
    %42 = tpu.concatenate %21, %41 in 1 : vector<16x64xf32>, vector<16x64xf32> -> vector<16x128xf32>
    %43 = arith.truncf %42 : vector<16x128xf32> to vector<16x128xbf16>
    %c0_22 = arith.constant 0 : index
    %c0_23 = arith.constant 0 : index
    %44 = vector.load %arg6[%c0_22, %c0_23] : memref<16x128xbf16, #tpu.memory_space<vmem>>, vector<16x128xbf16>
    tpu.vector_store %arg6[%c0_22, %c0_23], %43 {strides = array<i32>} : memref<16x128xbf16, #tpu.memory_space<vmem>>, vector<16x128xbf16>,
    return
  }
  func.func @transform_0(%arg0: i32, %arg1: i32) -> (i32, i32) {
    %c0_i32 = arith.constant 0 : i32
    return %arg0, %arg1 : i32, i32
  }
  func.func @transform_1(%arg0: i32, %arg1: i32) -> (i32, i32) {
    %c1_i32 = arith.constant 1 : i32
    %0 = arith.addi %c1_i32, %arg1 : i32
    %c0_i32 = arith.constant 0 : i32
    return %arg0, %0 : i32, i32
  }
  func.func @transform_2(%arg0: i32, %arg1: i32) -> (i32, i32) {
    %c2_i32 = arith.constant 2 : i32
    %0 = arith.addi %c2_i32, %arg1 : i32
    %c0_i32 = arith.constant 0 : i32
    return %arg0, %0 : i32, i32
  }
  func.func @transform_3(%arg0: i32, %arg1: i32) -> (i32, i32, i32) {
    %c0_i32 = arith.constant 0 : i32
    %c0_i32_0 = arith.constant 0 : i32
    %c0_i32_1 = arith.constant 0 : i32
    return %arg0, %c0_i32, %c0_i32_0 : i32, i32, i32
  }
  func.func @transform_4(%arg0: i32, %arg1: i32) -> (i32, i32) {
    %c0_i32 = arith.constant 0 : i32
    return %arg0, %arg1 : i32, i32
  }
}

module attributes {stable_mosaic.version = 11 : i64} {
  func.func @_dense_add_ln_kernel(%arg0: i32, %arg1: memref<16x128xbf16, #tpu.memory_space<vmem>>, %arg2: memref<128x128xbf16, #tpu.memory_space<vmem>>, %arg3: memref<1x128xf32, #tpu.memory_space<vmem>>, %arg4: memref<16x128xbf16, #tpu.memory_space<vmem>>, %arg5: memref<1x128xf32, #tpu.memory_space<vmem>>, %arg6: memref<1x128xf32, #tpu.memory_space<vmem>>, %arg7: memref<16x128xbf16, #tpu.memory_space<vmem>>) attributes {dimension_semantics = [#tpu.dimension_semantics<parallel>], iteration_bounds = array<i64: 2>, scalar_prefetch = 0 : i64, scratch_operands = 0 : i64, tpu.core_type = #tpu.core_type<tc>, window_params = [{transform_indices = @transform_0, window_bounds = array<i64: 16, 128>}, {pipeline_mode = #tpu.pipeline_mode<synchronous>, transform_indices = @transform_1, window_bounds = array<i64: 128, 128>}, {pipeline_mode = #tpu.pipeline_mode<synchronous>, transform_indices = @transform_2, window_bounds = array<i64: 1, 128>}, {transform_indices = @transform_3, window_bounds = array<i64: 16, 128>}, {pipeline_mode = #tpu.pipeline_mode<synchronous>, transform_indices = @transform_4, window_bounds = array<i64: 1, 128>}, {pipeline_mode = #tpu.pipeline_mode<synchronous>, transform_indices = @transform_5, window_bounds = array<i64: 1, 128>}, {transform_indices = @transform_6, window_bounds = array<i64: 16, 128>}]} {
    %c0 = arith.constant 0 : index
    %c0_0 = arith.constant 0 : index
    %0 = vector.load %arg1[%c0, %c0_0] : memref<16x128xbf16, #tpu.memory_space<vmem>>, vector<16x128xbf16>
    %c0_1 = arith.constant 0 : index
    %c0_2 = arith.constant 0 : index
    %1 = vector.load %arg2[%c0_1, %c0_2] : memref<128x128xbf16, #tpu.memory_space<vmem>>, vector<128x128xbf16>
    %cst = arith.constant dense<0.000000e+00> : vector<16x128xf32>
    %2 = tpu.matmul %0, %1, %cst {dimension_numbers = #tpu.dot_dimension_numbers<[1], [0], [0], [1], [0, 0, 1, 1], [], []>} : vector<16x128xbf16>, vector<128x128xbf16>, vector<16x128xf32> -> vector<16x128xf32>
    %c0_3 = arith.constant 0 : index
    %c0_4 = arith.constant 0 : index
    %3 = vector.load %arg3[%c0_3, %c0_4] : memref<1x128xf32, #tpu.memory_space<vmem>>, vector<1x128xf32>
    %4 = vector.broadcast %3 : vector<1x128xf32> to vector<16x128xf32>
    %5 = arith.addf %2, %4 : vector<16x128xf32>
    %c0_5 = arith.constant 0 : index
    %c0_6 = arith.constant 0 : index
    %6 = vector.load %arg4[%c0_5, %c0_6] : memref<16x128xbf16, #tpu.memory_space<vmem>>, vector<16x128xbf16>
    %7 = arith.extf %6 : vector<16x128xbf16> to vector<16x128xf32>
    %8 = arith.addf %5, %7 : vector<16x128xf32>
    %cst_7 = arith.constant dense<0.000000e+00> : vector<16xf32>
    %9 = vector.multi_reduction <add>, %8, %cst_7 [1] : vector<16x128xf32> to vector<16xf32>
    %10 = vector.shape_cast %9 : vector<16xf32> to vector<16x1xf32>
    %cst_8 = arith.constant 1.280000e+02 : f32
    %11 = vector.broadcast %cst_8 : f32 to vector<16x1xf32>
    %12 = arith.divf %10, %11 : vector<16x1xf32>
    %13 = vector.broadcast %12 : vector<16x1xf32> to vector<16x128xf32>
    %14 = arith.subf %8, %13 : vector<16x128xf32>
    %15 = arith.mulf %14, %14 : vector<16x128xf32>
    %cst_9 = arith.constant dense<0.000000e+00> : vector<16xf32>
    %16 = vector.multi_reduction <add>, %15, %cst_9 [1] : vector<16x128xf32> to vector<16xf32>
    %17 = vector.shape_cast %16 : vector<16xf32> to vector<16x1xf32>
    %cst_10 = arith.constant 1.280000e+02 : f32
    %18 = vector.broadcast %cst_10 : f32 to vector<16x1xf32>
    %19 = arith.divf %17, %18 : vector<16x1xf32>
    %cst_11 = arith.constant 9.99999996E-13 : f32
    %20 = vector.broadcast %cst_11 : f32 to vector<16x1xf32>
    %21 = arith.addf %19, %20 : vector<16x1xf32>
    %22 = math.rsqrt %21 : vector<16x1xf32>
    %23 = vector.broadcast %22 : vector<16x1xf32> to vector<16x128xf32>
    %24 = arith.mulf %14, %23 : vector<16x128xf32>
    %c0_12 = arith.constant 0 : index
    %c0_13 = arith.constant 0 : index
    %25 = vector.load %arg5[%c0_12, %c0_13] : memref<1x128xf32, #tpu.memory_space<vmem>>, vector<1x128xf32>
    %26 = vector.broadcast %25 : vector<1x128xf32> to vector<16x128xf32>
    %27 = arith.mulf %24, %26 : vector<16x128xf32>
    %c0_14 = arith.constant 0 : index
    %c0_15 = arith.constant 0 : index
    %28 = vector.load %arg6[%c0_14, %c0_15] : memref<1x128xf32, #tpu.memory_space<vmem>>, vector<1x128xf32>
    %29 = vector.broadcast %28 : vector<1x128xf32> to vector<16x128xf32>
    %30 = arith.addf %27, %29 : vector<16x128xf32>
    %31 = arith.truncf %30 : vector<16x128xf32> to vector<16x128xbf16>
    %c0_16 = arith.constant 0 : index
    %c0_17 = arith.constant 0 : index
    %32 = vector.load %arg7[%c0_16, %c0_17] : memref<16x128xbf16, #tpu.memory_space<vmem>>, vector<16x128xbf16>
    tpu.vector_store %arg7[%c0_16, %c0_17], %31 {strides = array<i32>} : memref<16x128xbf16, #tpu.memory_space<vmem>>, vector<16x128xbf16>,
    return
  }
  func.func @transform_0(%arg0: i32) -> (i32, i32) {
    %c0_i32 = arith.constant 0 : i32
    %c0_i32_0 = arith.constant 0 : i32
    return %arg0, %c0_i32 : i32, i32
  }
  func.func @transform_1(%arg0: i32) -> (i32, i32) {
    %c0_i32 = arith.constant 0 : i32
    %c0_i32_0 = arith.constant 0 : i32
    %c0_i32_1 = arith.constant 0 : i32
    return %c0_i32, %c0_i32_0 : i32, i32
  }
  func.func @transform_2(%arg0: i32) -> (i32, i32) {
    %c0_i32 = arith.constant 0 : i32
    %c0_i32_0 = arith.constant 0 : i32
    %c0_i32_1 = arith.constant 0 : i32
    return %c0_i32, %c0_i32_0 : i32, i32
  }
  func.func @transform_3(%arg0: i32) -> (i32, i32) {
    %c0_i32 = arith.constant 0 : i32
    %c0_i32_0 = arith.constant 0 : i32
    return %arg0, %c0_i32 : i32, i32
  }
  func.func @transform_4(%arg0: i32) -> (i32, i32) {
    %c0_i32 = arith.constant 0 : i32
    %c0_i32_0 = arith.constant 0 : i32
    %c0_i32_1 = arith.constant 0 : i32
    return %c0_i32, %c0_i32_0 : i32, i32
  }
  func.func @transform_5(%arg0: i32) -> (i32, i32) {
    %c0_i32 = arith.constant 0 : i32
    %c0_i32_0 = arith.constant 0 : i32
    %c0_i32_1 = arith.constant 0 : i32
    return %c0_i32, %c0_i32_0 : i32, i32
  }
  func.func @transform_6(%arg0: i32) -> (i32, i32) {
    %c0_i32 = arith.constant 0 : i32
    %c0_i32_0 = arith.constant 0 : i32
    return %arg0, %c0_i32 : i32, i32
  }
}

module attributes {stable_mosaic.version = 11 : i64} {
  func.func @_dense_kernel(%arg0: i32, %arg1: memref<16x128xbf16, #tpu.memory_space<vmem>>, %arg2: memref<128x256xbf16, #tpu.memory_space<vmem>>, %arg3: memref<1x256xf32, #tpu.memory_space<vmem>>, %arg4: memref<16x256xbf16, #tpu.memory_space<vmem>>) attributes {dimension_semantics = [#tpu.dimension_semantics<parallel>], iteration_bounds = array<i64: 2>, scalar_prefetch = 0 : i64, scratch_operands = 0 : i64, tpu.core_type = #tpu.core_type<tc>, window_params = [{transform_indices = @transform_0, window_bounds = array<i64: 16, 128>}, {pipeline_mode = #tpu.pipeline_mode<synchronous>, transform_indices = @transform_1, window_bounds = array<i64: 128, 256>}, {pipeline_mode = #tpu.pipeline_mode<synchronous>, transform_indices = @transform_2, window_bounds = array<i64: 1, 256>}, {transform_indices = @transform_3, window_bounds = array<i64: 16, 256>}]} {
    %c0 = arith.constant 0 : index
    %c0_0 = arith.constant 0 : index
    %0 = vector.load %arg1[%c0, %c0_0] : memref<16x128xbf16, #tpu.memory_space<vmem>>, vector<16x128xbf16>
    %c0_1 = arith.constant 0 : index
    %c0_2 = arith.constant 0 : index
    %1 = vector.load %arg2[%c0_1, %c0_2] : memref<128x256xbf16, #tpu.memory_space<vmem>>, vector<128x256xbf16>
    %cst = arith.constant dense<0.000000e+00> : vector<16x256xf32>
    %2 = tpu.matmul %0, %1, %cst {dimension_numbers = #tpu.dot_dimension_numbers<[1], [0], [0], [1], [0, 0, 1, 1], [], []>} : vector<16x128xbf16>, vector<128x256xbf16>, vector<16x256xf32> -> vector<16x256xf32>
    %c0_3 = arith.constant 0 : index
    %c0_4 = arith.constant 0 : index
    %3 = vector.load %arg3[%c0_3, %c0_4] : memref<1x256xf32, #tpu.memory_space<vmem>>, vector<1x256xf32>
    %4 = vector.broadcast %3 : vector<1x256xf32> to vector<16x256xf32>
    %5 = arith.addf %2, %4 : vector<16x256xf32>
    %cst_5 = arith.constant 5.000000e-01 : f32
    %6 = vector.broadcast %cst_5 : f32 to vector<16x256xf32>
    %7 = arith.mulf %6, %5 : vector<16x256xf32>
    %cst_6 = arith.constant 4.471500e-02 : f32
    %8 = vector.broadcast %cst_6 : f32 to vector<16x256xf32>
    %9 = arith.mulf %8, %5 : vector<16x256xf32>
    %10 = arith.mulf %9, %5 : vector<16x256xf32>
    %11 = arith.mulf %10, %5 : vector<16x256xf32>
    %12 = arith.addf %5, %11 : vector<16x256xf32>
    %cst_7 = arith.constant 0.797884583 : f32
    %13 = vector.broadcast %cst_7 : f32 to vector<16x256xf32>
    %14 = arith.mulf %13, %12 : vector<16x256xf32>
    %15 = math.tanh %14 : vector<16x256xf32>
    %cst_8 = arith.constant 1.000000e+00 : f32
    %16 = vector.broadcast %cst_8 : f32 to vector<16x256xf32>
    %17 = arith.addf %16, %15 : vector<16x256xf32>
    %18 = arith.mulf %7, %17 : vector<16x256xf32>
    %19 = arith.truncf %18 : vector<16x256xf32> to vector<16x256xbf16>
    %c0_9 = arith.constant 0 : index
    %c0_10 = arith.constant 0 : index
    %20 = vector.load %arg4[%c0_9, %c0_10] : memref<16x256xbf16, #tpu.memory_space<vmem>>, vector<16x256xbf16>
    tpu.vector_store %arg4[%c0_9, %c0_10], %19 {strides = array<i32>} : memref<16x256xbf16, #tpu.memory_space<vmem>>, vector<16x256xbf16>,
    return
  }
  func.func @transform_0(%arg0: i32) -> (i32, i32) {
    %c0_i32 = arith.constant 0 : i32
    %c0_i32_0 = arith.constant 0 : i32
    return %arg0, %c0_i32 : i32, i32
  }
  func.func @transform_1(%arg0: i32) -> (i32, i32) {
    %c0_i32 = arith.constant 0 : i32
    %c0_i32_0 = arith.constant 0 : i32
    %c0_i32_1 = arith.constant 0 : i32
    return %c0_i32, %c0_i32_0 : i32, i32
  }
  func.func @transform_2(%arg0: i32) -> (i32, i32) {
    %c0_i32 = arith.constant 0 : i32
    %c0_i32_0 = arith.constant 0 : i32
    %c0_i32_1 = arith.constant 0 : i32
    return %c0_i32, %c0_i32_0 : i32, i32
  }
  func.func @transform_3(%arg0: i32) -> (i32, i32) {
    %c0_i32 = arith.constant 0 : i32
    %c0_i32_0 = arith.constant 0 : i32
    return %arg0, %c0_i32 : i32, i32
  }
}

module attributes {stable_mosaic.version = 11 : i64} {
  func.func @_dense_add_ln_kernel(%arg0: i32, %arg1: memref<16x256xbf16, #tpu.memory_space<vmem>>, %arg2: memref<256x128xbf16, #tpu.memory_space<vmem>>, %arg3: memref<1x128xf32, #tpu.memory_space<vmem>>, %arg4: memref<16x128xbf16, #tpu.memory_space<vmem>>, %arg5: memref<1x128xf32, #tpu.memory_space<vmem>>, %arg6: memref<1x128xf32, #tpu.memory_space<vmem>>, %arg7: memref<16x128xbf16, #tpu.memory_space<vmem>>) attributes {dimension_semantics = [#tpu.dimension_semantics<parallel>], iteration_bounds = array<i64: 2>, scalar_prefetch = 0 : i64, scratch_operands = 0 : i64, tpu.core_type = #tpu.core_type<tc>, window_params = [{transform_indices = @transform_0, window_bounds = array<i64: 16, 256>}, {pipeline_mode = #tpu.pipeline_mode<synchronous>, transform_indices = @transform_1, window_bounds = array<i64: 256, 128>}, {pipeline_mode = #tpu.pipeline_mode<synchronous>, transform_indices = @transform_2, window_bounds = array<i64: 1, 128>}, {transform_indices = @transform_3, window_bounds = array<i64: 16, 128>}, {pipeline_mode = #tpu.pipeline_mode<synchronous>, transform_indices = @transform_4, window_bounds = array<i64: 1, 128>}, {pipeline_mode = #tpu.pipeline_mode<synchronous>, transform_indices = @transform_5, window_bounds = array<i64: 1, 128>}, {transform_indices = @transform_6, window_bounds = array<i64: 16, 128>}]} {
    %c0 = arith.constant 0 : index
    %c0_0 = arith.constant 0 : index
    %0 = vector.load %arg1[%c0, %c0_0] : memref<16x256xbf16, #tpu.memory_space<vmem>>, vector<16x256xbf16>
    %c0_1 = arith.constant 0 : index
    %c0_2 = arith.constant 0 : index
    %1 = vector.load %arg2[%c0_1, %c0_2] : memref<256x128xbf16, #tpu.memory_space<vmem>>, vector<256x128xbf16>
    %cst = arith.constant dense<0.000000e+00> : vector<16x128xf32>
    %2 = tpu.matmul %0, %1, %cst {dimension_numbers = #tpu.dot_dimension_numbers<[1], [0], [0], [1], [0, 0, 1, 1], [], []>} : vector<16x256xbf16>, vector<256x128xbf16>, vector<16x128xf32> -> vector<16x128xf32>
    %c0_3 = arith.constant 0 : index
    %c0_4 = arith.constant 0 : index
    %3 = vector.load %arg3[%c0_3, %c0_4] : memref<1x128xf32, #tpu.memory_space<vmem>>, vector<1x128xf32>
    %4 = vector.broadcast %3 : vector<1x128xf32> to vector<16x128xf32>
    %5 = arith.addf %2, %4 : vector<16x128xf32>
    %c0_5 = arith.constant 0 : index
    %c0_6 = arith.constant 0 : index
    %6 = vector.load %arg4[%c0_5, %c0_6] : memref<16x128xbf16, #tpu.memory_space<vmem>>, vector<16x128xbf16>
    %7 = arith.extf %6 : vector<16x128xbf16> to vector<16x128xf32>
    %8 = arith.addf %5, %7 : vector<16x128xf32>
    %cst_7 = arith.constant dense<0.000000e+00> : vector<16xf32>
    %9 = vector.multi_reduction <add>, %8, %cst_7 [1] : vector<16x128xf32> to vector<16xf32>
    %10 = vector.shape_cast %9 : vector<16xf32> to vector<16x1xf32>
    %cst_8 = arith.constant 1.280000e+02 : f32
    %11 = vector.broadcast %cst_8 : f32 to vector<16x1xf32>
    %12 = arith.divf %10, %11 : vector<16x1xf32>
    %13 = vector.broadcast %12 : vector<16x1xf32> to vector<16x128xf32>
    %14 = arith.subf %8, %13 : vector<16x128xf32>
    %15 = arith.mulf %14, %14 : vector<16x128xf32>
    %cst_9 = arith.constant dense<0.000000e+00> : vector<16xf32>
    %16 = vector.multi_reduction <add>, %15, %cst_9 [1] : vector<16x128xf32> to vector<16xf32>
    %17 = vector.shape_cast %16 : vector<16xf32> to vector<16x1xf32>
    %cst_10 = arith.constant 1.280000e+02 : f32
    %18 = vector.broadcast %cst_10 : f32 to vector<16x1xf32>
    %19 = arith.divf %17, %18 : vector<16x1xf32>
    %cst_11 = arith.constant 9.99999996E-13 : f32
    %20 = vector.broadcast %cst_11 : f32 to vector<16x1xf32>
    %21 = arith.addf %19, %20 : vector<16x1xf32>
    %22 = math.rsqrt %21 : vector<16x1xf32>
    %23 = vector.broadcast %22 : vector<16x1xf32> to vector<16x128xf32>
    %24 = arith.mulf %14, %23 : vector<16x128xf32>
    %c0_12 = arith.constant 0 : index
    %c0_13 = arith.constant 0 : index
    %25 = vector.load %arg5[%c0_12, %c0_13] : memref<1x128xf32, #tpu.memory_space<vmem>>, vector<1x128xf32>
    %26 = vector.broadcast %25 : vector<1x128xf32> to vector<16x128xf32>
    %27 = arith.mulf %24, %26 : vector<16x128xf32>
    %c0_14 = arith.constant 0 : index
    %c0_15 = arith.constant 0 : index
    %28 = vector.load %arg6[%c0_14, %c0_15] : memref<1x128xf32, #tpu.memory_space<vmem>>, vector<1x128xf32>
    %29 = vector.broadcast %28 : vector<1x128xf32> to vector<16x128xf32>
    %30 = arith.addf %27, %29 : vector<16x128xf32>
    %31 = arith.truncf %30 : vector<16x128xf32> to vector<16x128xbf16>
    %c0_16 = arith.constant 0 : index
    %c0_17 = arith.constant 0 : index
    %32 = vector.load %arg7[%c0_16, %c0_17] : memref<16x128xbf16, #tpu.memory_space<vmem>>, vector<16x128xbf16>
    tpu.vector_store %arg7[%c0_16, %c0_17], %31 {strides = array<i32>} : memref<16x128xbf16, #tpu.memory_space<vmem>>, vector<16x128xbf16>,
    return
  }
  func.func @transform_0(%arg0: i32) -> (i32, i32) {
    %c0_i32 = arith.constant 0 : i32
    %c0_i32_0 = arith.constant 0 : i32
    return %arg0, %c0_i32 : i32, i32
  }
  func.func @transform_1(%arg0: i32) -> (i32, i32) {
    %c0_i32 = arith.constant 0 : i32
    %c0_i32_0 = arith.constant 0 : i32
    %c0_i32_1 = arith.constant 0 : i32
    return %c0_i32, %c0_i32_0 : i32, i32
  }
  func.func @transform_2(%arg0: i32) -> (i32, i32) {
    %c0_i32 = arith.constant 0 : i32
    %c0_i32_0 = arith.constant 0 : i32
    %c0_i32_1 = arith.constant 0 : i32
    return %c0_i32, %c0_i32_0 : i32, i32
  }
  func.func @transform_3(%arg0: i32) -> (i32, i32) {
    %c0_i32 = arith.constant 0 : i32
    %c0_i32_0 = arith.constant 0 : i32
    return %arg0, %c0_i32 : i32, i32
  }
  func.func @transform_4(%arg0: i32) -> (i32, i32) {
    %c0_i32 = arith.constant 0 : i32
    %c0_i32_0 = arith.constant 0 : i32
    %c0_i32_1 = arith.constant 0 : i32
    return %c0_i32, %c0_i32_0 : i32, i32
  }
  func.func @transform_5(%arg0: i32) -> (i32, i32) {
    %c0_i32 = arith.constant 0 : i32
    %c0_i32_0 = arith.constant 0 : i32
    %c0_i32_1 = arith.constant 0 : i32
    return %c0_i32, %c0_i32_0 : i32, i32
  }
  func.func @transform_6(%arg0: i32) -> (i32, i32) {
    %c0_i32 = arith.constant 0 : i32
    %c0_i32_0 = arith.constant 0 : i32
    return %arg0, %c0_i32 : i32, i32
  }
}

module attributes {stable_mosaic.version = 11 : i64} {
  func.func @_classifier_kernel(%arg0: i32, %arg1: memref<8x128xbf16, #tpu.memory_space<vmem>>, %arg2: memref<1x128xf32, #tpu.memory_space<vmem>>, %arg3: memref<1x1xf32, #tpu.memory_space<vmem>>, %arg4: memref<8x1xf32, #tpu.memory_space<vmem>>, %arg5: memref<8x1xf32, #tpu.memory_space<vmem>>) attributes {dimension_semantics = [#tpu.dimension_semantics<parallel>], iteration_bounds = array<i64: 1>, scalar_prefetch = 0 : i64, scratch_operands = 0 : i64, tpu.core_type = #tpu.core_type<tc>, window_params = [{transform_indices = @transform_0, window_bounds = array<i64: 8, 128>}, {pipeline_mode = #tpu.pipeline_mode<synchronous>, transform_indices = @transform_1, window_bounds = array<i64: 1, 128>}, {pipeline_mode = #tpu.pipeline_mode<synchronous>, transform_indices = @transform_2, window_bounds = array<i64: 1, 1>}, {transform_indices = @transform_3, window_bounds = array<i64: 8, 1>}, {transform_indices = @transform_4, window_bounds = array<i64: 8, 1>}]} {
    %c0 = arith.constant 0 : index
    %c0_0 = arith.constant 0 : index
    %0 = vector.load %arg1[%c0, %c0_0] : memref<8x128xbf16, #tpu.memory_space<vmem>>, vector<8x128xbf16>
    %1 = arith.extf %0 : vector<8x128xbf16> to vector<8x128xf32>
    %c0_1 = arith.constant 0 : index
    %c0_2 = arith.constant 0 : index
    %2 = vector.load %arg2[%c0_1, %c0_2] : memref<1x128xf32, #tpu.memory_space<vmem>>, vector<1x128xf32>
    %3 = vector.broadcast %2 : vector<1x128xf32> to vector<8x128xf32>
    %4 = arith.mulf %1, %3 : vector<8x128xf32>
    %cst = arith.constant dense<0.000000e+00> : vector<8xf32>
    %5 = vector.multi_reduction <add>, %4, %cst [1] : vector<8x128xf32> to vector<8xf32>
    %6 = vector.shape_cast %5 : vector<8xf32> to vector<8x1xf32>
    %c0_3 = arith.constant 0 : index
    %c0_4 = arith.constant 0 : index
    %7 = vector.load %arg3[%c0_3, %c0_4] : memref<1x1xf32, #tpu.memory_space<vmem>>, vector<1x1xf32>
    %8 = vector.broadcast %7 : vector<1x1xf32> to vector<8x1xf32>
    %9 = arith.addf %6, %8 : vector<8x1xf32>
    %10 = arith.negf %9 : vector<8x1xf32>
    %11 = math.exp %10 : vector<8x1xf32>
    %cst_5 = arith.constant 1.000000e+00 : f32
    %12 = vector.broadcast %cst_5 : f32 to vector<8x1xf32>
    %13 = arith.addf %12, %11 : vector<8x1xf32>
    %14 = arith.divf %12, %13 : vector<8x1xf32>
    %c0_6 = arith.constant 0 : index
    %c0_7 = arith.constant 0 : index
    %15 = vector.load %arg4[%c0_6, %c0_7] : memref<8x1xf32, #tpu.memory_space<vmem>>, vector<8x1xf32>
    %16 = arith.mulf %14, %15 : vector<8x1xf32>
    %c0_8 = arith.constant 0 : index
    %c0_9 = arith.constant 0 : index
    %17 = vector.load %arg5[%c0_8, %c0_9] : memref<8x1xf32, #tpu.memory_space<vmem>>, vector<8x1xf32>
    tpu.vector_store %arg5[%c0_8, %c0_9], %16 {strides = array<i32>} : memref<8x1xf32, #tpu.memory_space<vmem>>, vector<8x1xf32>,
    return
  }
  func.func @transform_0(%arg0: i32) -> (i32, i32) {
    %c0_i32 = arith.constant 0 : i32
    %c0_i32_0 = arith.constant 0 : i32
    return %arg0, %c0_i32 : i32, i32
  }
  func.func @transform_1(%arg0: i32) -> (i32, i32) {
    %c0_i32 = arith.constant 0 : i32
    %c0_i32_0 = arith.constant 0 : i32
    %c0_i32_1 = arith.constant 0 : i32
    return %c0_i32, %c0_i32_0 : i32, i32
  }
  func.func @transform_2(%arg0: i32) -> (i32, i32) {
    %c0_i32 = arith.constant 0 : i32
    %c0_i32_0 = arith.constant 0 : i32
    %c0_i32_1 = arith.constant 0 : i32
    return %c0_i32, %c0_i32_0 : i32, i32
  }
  func.func @transform_3(%arg0: i32) -> (i32, i32) {
    %c0_i32 = arith.constant 0 : i32
    %c0_i32_0 = arith.constant 0 : i32
    return %arg0, %c0_i32 : i32, i32
  }
  func.func @transform_4(%arg0: i32) -> (i32, i32) {
    %c0_i32 = arith.constant 0 : i32
    %c0_i32_0 = arith.constant 0 : i32
    return %arg0, %c0_i32 : i32, i32
  }
}

</mosaic_0001>

<llo_original>
// kernel: bertsum_forward.12
$region0: #{bertsum_forward.12}
  #allocation0 [shape = 'u32[]', space=smem, size = 0x4, offset = 0x4, fixed_abs, tag = 'smem constant byte address 0x4 - core index']
  #allocation1 [shape = 'u32[144,128]{1,0:T(1,128)}', space=vmem, size = 0x12000, scoped, tag = 'internal scratch']
  %s0 = inlined_call_operand.vmem [shape: f32[32,128], index: 0, kind: input, shape index: {}]
  %s1 = inlined_call_operand.vmem [shape: f32[32,128], index: 1, kind: input, shape index: {}]
  %s2 = inlined_call_operand.vmem [shape: f32[32,128], index: 2, kind: input, shape index: {}]
  %s3 = inlined_call_operand.vmem [shape: f32[1,128], index: 3, kind: input, shape index: {}]
  %s4 = inlined_call_operand.vmem [shape: f32[1,128], index: 4, kind: input, shape index: {}]
  %s5 = inlined_call_operand.vmem [shape: bf16[32,128], index: 5, kind: output, shape index: {}]
  %s6 = sld [smem:[#allocation0]]
  $region53: #{bertsum_forward.12} parent=0
    _
  %s8 = ssub.s32 1, %s6
  %s9 = scalar_select 0, %s8, %s6
  loop: start=0, step=1, limit=4
  $region2: #{bertsum_forward.12} parent=0 // loop_pre_header
    _
  $region3: #{bertsum_forward.12} parent=0 // loop_header
    %s11 = sphi 0, %s15
    %p12 = scmp.ge.s32.totalorder %s11, 4
    %s21 = sphi 0, %s23
    %s24 = sphi 0, %s21
    %s25 = sphi 0, %s24
    %s41 = sphi 0, %s25
    %s47 = sphi 0, %s49
    %s50 = sphi 0, %s47
    %s51 = sphi 0, %s50
    %s67 = sphi 0, %s51
    %s73 = sphi 0, %s75
    %s76 = sphi 0, %s73
    %s77 = sphi 0, %s76
    %s93 = sphi 0, %s77
    %s97 = sphi 0, %s97
    %s99 = sphi 0, %s97
    %s100 = sphi 0, %s99
    %s114 = sphi 0, %s100
    %s118 = sphi 0, %s118
    %s120 = sphi 0, %s118
    %s121 = sphi 0, %s120
    %s135 = sphi 0, %s121
    %s141 = sphi 0, %s143
    %s144 = sphi 0, %s141
    %s145 = sphi 0, %s144
    %s161 = sphi 0, %s145
  $region4: #{bertsum_forward.12} parent=0 // loop_header_branch
    %14 = sbr.rel (%p12) target = $region8
  $region5: #{bertsum_forward.12} parent=0 // loop_body
    %s16 = ssub.s32 %s11, 1
    %s17 = ssub.s32 %s11, 2
    %s18 = sadd.s32 %s11, 1
    %s19 = ssub.s32 %s11, %s18
    %p20 = scmp.eq.s32.totalorder %s19, 0
    %s22 = sadd.s32 %s21, 1
    %s23 = scalar_select %p20, %s21, %s22
    %p26 = pneg %p20
    %p27 = scmp.eq.s32.totalorder %s11, 1
    %p28 = por %p26, %p27
    %p29 = scmp.ne.s32.totalorder %s21, %s24
    %p30 = scmp.eq.s32.totalorder %s11, 0
    %p31 = por %p29, %p30
    %p32 = scmp.ne.s32.totalorder %s21, %s24
    %p33 = scmp.eq.s32.totalorder %s16, 1
    %p34 = por %p32, %p33
    %p35 = scmp.ne.s32.totalorder %s24, %s25
    %p36 = scmp.eq.s32.totalorder %s16, 0
    %p37 = por %p35, %p36
    %p38 = scmp.ne.s32.totalorder %s24, %s25
    %p39 = scmp.eq.s32.totalorder %s17, 1
    %p40 = por %p38, %p39
    %p42 = scmp.ne.s32.totalorder %s25, %s41
    %p43 = scmp.eq.s32.totalorder %s17, 0
    %p44 = por %p42, %p43
    %s45 = ssub.s32 %s11, %s18
    %p46 = scmp.eq.s32.totalorder %s45, 0
    %s48 = sadd.s32 %s47, 1
    %s49 = scalar_select %p46, %s47, %s48
    %p52 = pneg %p46
    %p53 = scmp.eq.s32.totalorder %s11, 1
    %p54 = por %p52, %p53
    %p55 = scmp.ne.s32.totalorder %s47, %s50
    %p56 = scmp.eq.s32.totalorder %s11, 0
    %p57 = por %p55, %p56
    %p58 = scmp.ne.s32.totalorder %s47, %s50
    %p59 = scmp.eq.s32.totalorder %s16, 1
    %p60 = por %p58, %p59
    %p61 = scmp.ne.s32.totalorder %s50, %s51
    %p62 = scmp.eq.s32.totalorder %s16, 0
    %p63 = por %p61, %p62
    %p64 = scmp.ne.s32.totalorder %s50, %s51
    %p65 = scmp.eq.s32.totalorder %s17, 1
    %p66 = por %p64, %p65
    %p68 = scmp.ne.s32.totalorder %s51, %s67
    %p69 = scmp.eq.s32.totalorder %s17, 0
    %p70 = por %p68, %p69
    %s71 = ssub.s32 %s11, %s18
    %p72 = scmp.eq.s32.totalorder %s71, 0
    %s74 = sadd.s32 %s73, 1
    %s75 = scalar_select %p72, %s73, %s74
    %p78 = pneg %p72
    %p79 = scmp.eq.s32.totalorder %s11, 1
    %p80 = por %p78, %p79
    %p81 = scmp.ne.s32.totalorder %s73, %s76
    %p82 = scmp.eq.s32.totalorder %s11, 0
    %p83 = por %p81, %p82
    %p84 = scmp.ne.s32.totalorder %s73, %s76
    %p85 = scmp.eq.s32.totalorder %s16, 1
    %p86 = por %p84, %p85
    %p87 = scmp.ne.s32.totalorder %s76, %s77
    %p88 = scmp.eq.s32.totalorder %s16, 0
    %p89 = por %p87, %p88
    %p90 = scmp.ne.s32.totalorder %s76, %s77
    %p91 = scmp.eq.s32.totalorder %s17, 1
    %p92 = por %p90, %p91
    %p94 = scmp.ne.s32.totalorder %s77, %s93
    %p95 = scmp.eq.s32.totalorder %s17, 0
    %p96 = por %p94, %p95
    %s98 = sadd.s32 %s97, 1
    %p101 = scmp.eq.s32.totalorder %s11, 1
    %p102 = scmp.ne.s32.totalorder %s97, %s99
    %p103 = scmp.eq.s32.totalorder %s11, 0
    %p104 = por %p102, %p103
    %p105 = scmp.ne.s32.totalorder %s97, %s99
    %p106 = scmp.eq.s32.totalorder %s16, 1
    %p107 = por %p105, %p106
    %p108 = scmp.ne.s32.totalorder %s99, %s100
    %p109 = scmp.eq.s32.totalorder %s16, 0
    %p110 = por %p108, %p109
    %p111 = scmp.ne.s32.totalorder %s99, %s100
    %p112 = scmp.eq.s32.totalorder %s17, 1
    %p113 = por %p111, %p112
    %p115 = scmp.ne.s32.totalorder %s100, %s114
    %p116 = scmp.eq.s32.totalorder %s17, 0
    %p117 = por %p115, %p116
    %s119 = sadd.s32 %s118, 1
    %p122 = scmp.eq.s32.totalorder %s11, 1
    %p123 = scmp.ne.s32.totalorder %s118, %s120
    %p124 = scmp.eq.s32.totalorder %s11, 0
    %p125 = por %p123, %p124
    %p126 = scmp.ne.s32.totalorder %s118, %s120
    %p127 = scmp.eq.s32.totalorder %s16, 1
    %p128 = por %p126, %p127
    %p129 = scmp.ne.s32.totalorder %s120, %s121
    %p130 = scmp.eq.s32.totalorder %s16, 0
    %p131 = por %p129, %p130
    %p132 = scmp.ne.s32.totalorder %s120, %s121
    %p133 = scmp.eq.s32.totalorder %s17, 1
    %p134 = por %p132, %p133
    %p136 = scmp.ne.s32.totalorder %s121, %s135
    %p137 = scmp.eq.s32.totalorder %s17, 0
    %p138 = por %p136, %p137
    %s139 = ssub.s32 %s11, %s18
    %p140 = scmp.eq.s32.totalorder %s139, 0
    %s142 = sadd.s32 %s141, 1
    %s143 = scalar_select %p140, %s141, %s142
    %p146 = pneg %p140
    %p147 = scmp.eq.s32.totalorder %s11, 1
    %p148 = por %p146, %p147
    %p149 = scmp.ne.s32.totalorder %s141, %s144
    %p150 = scmp.eq.s32.totalorder %s11, 0
    %p151 = por %p149, %p150
    %p152 = scmp.ne.s32.totalorder %s141, %s144
    %p153 = scmp.eq.s32.totalorder %s16, 1
    %p154 = por %p152, %p153
    %p155 = scmp.ne.s32.totalorder %s144, %s145
    %p156 = scmp.eq.s32.totalorder %s16, 0
    %p157 = por %p155, %p156
    %p158 = scmp.ne.s32.totalorder %s144, %s145
    %p159 = scmp.eq.s32.totalorder %s17, 1
    %p160 = por %p158, %p159
    %p162 = scmp.ne.s32.totalorder %s145, %s161
    %p163 = scmp.eq.s32.totalorder %s17, 0
    %p164 = por %p162, %p163
    %p165 = scmp.le.s32.totalorder 1, %s11
    %p166 = scmp.lt.s32.totalorder %s11, 3
    %p167 = pnand %p165, %p166
    %p168 = pneg %p167
    // Predicated region
    $region9: #{bertsum_forward.12} parent=5 // pred_check
      _
    $region10: #{bertsum_forward.12} parent=5 // pred_check_branch
      %170 = sbr.rel (%p167) target = $region12
    $region11: #{bertsum_forward.12} parent=5 // pred_region
      %s171 = ssub.s32 %s11, 1
      // Predicated region
      $region13: #{bertsum_forward.12} parent=11 // pred_check
        %p172 = pneg %p110
      $region14: #{bertsum_forward.12} parent=11 // pred_check_branch
        %174 = sbr.rel (%p172) target = $region16
      $region15: #{bertsum_forward.12} parent=11 // pred_region
        _
      $region16: #{bertsum_forward.12} parent=11 // pred_fallthru
        _
      // Predicated region
      $region17: #{bertsum_forward.12} parent=11 // pred_check
        %p175 = pneg %p131
      $region18: #{bertsum_forward.12} parent=11 // pred_check_branch
        %177 = sbr.rel (%p175) target = $region20
      $region19: #{bertsum_forward.12} parent=11 // pred_region
        _
      $region20: #{bertsum_forward.12} parent=11 // pred_fallthru
        _
    $region12: #{bertsum_forward.12} parent=5 // pred_fallthru
      _
    %p178 = scmp.lt.s32.totalorder %s11, 2
    // Predicated region
    $region21: #{bertsum_forward.12} parent=5 // pred_check
      %p179 = pneg %p178
    $region22: #{bertsum_forward.12} parent=5 // pred_check_branch
      %181 = sbr.rel (%p179) target = $region24
    $region23: #{bertsum_forward.12} parent=5 // pred_region
      // Predicated region
      $region25: #{bertsum_forward.12} parent=23 // pred_check
        %p182 = pneg %p31
      $region26: #{bertsum_forward.12} parent=23 // pred_check_branch
        %184 = sbr.rel (%p182) target = $region28
      $region27: #{bertsum_forward.12} parent=23 // pred_region
        %s185 = smul.u32 2, %s11
        %p186 = scmp.lt.s32.totalorder %s185, 3
        %s187 = scalar_select %p186, %s185, 3
        %s188 = smul.addr %s187, 8
        %s189 = scalar_lea.vmem %s0, %s188
        %s190 = smul.u32 2, %s11
      $region28: #{bertsum_forward.12} parent=23 // pred_fallthru
        _
      // Predicated region
      $region29: #{bertsum_forward.12} parent=23 // pred_check
        %p191 = pneg %p57
      $region30: #{bertsum_forward.12} parent=23 // pred_check_branch
        %193 = sbr.rel (%p191) target = $region32
      $region31: #{bertsum_forward.12} parent=23 // pred_region
        %s194 = smul.u32 2, %s11
        %p195 = scmp.lt.s32.totalorder %s194, 3
        %s196 = scalar_select %p195, %s194, 3
        %s197 = smul.addr %s196, 8
        %s198 = scalar_lea.vmem %s1, %s197
        %s199 = smul.u32 2, %s11
      $region32: #{bertsum_forward.12} parent=23 // pred_fallthru
        _
      // Predicated region
      $region33: #{bertsum_forward.12} parent=23 // pred_check
        %p200 = pneg %p83
      $region34: #{bertsum_forward.12} parent=23 // pred_check_branch
        %202 = sbr.rel (%p200) target = $region36
      $region35: #{bertsum_forward.12} parent=23 // pred_region
        %s203 = smul.u32 2, %s11
        %p204 = scmp.lt.s32.totalorder %s203, 3
        %s205 = scalar_select %p204, %s203, 3
        %s206 = smul.addr %s205, 8
        %s207 = scalar_lea.vmem %s2, %s206
        %s208 = smul.u32 2, %s11
      $region36: #{bertsum_forward.12} parent=23 // pred_fallthru
        _
    $region24: #{bertsum_forward.12} parent=5 // pred_fallthru
      _
    %p209 = scmp.le.s32.totalorder 1, %s11
    %p210 = scmp.lt.s32.totalorder %s11, 3
    %p211 = pnand %p209, %p210
    %p212 = pneg %p211
    // Predicated region
    $region37: #{bertsum_forward.12} parent=5 // pred_check
      _
    $region38: #{bertsum_forward.12} parent=5 // pred_check_branch
      %214 = sbr.rel (%p211) target = $region40
    $region39: #{bertsum_forward.12} parent=5 // pred_region
      %s215 = ssub.s32 %s11, 1
      %s216 = smul.u32 2, %s16
      %p217 = scmp.lt.s32.totalorder %s216, 3
      %s218 = scalar_select %p217, %s216, 3
      %s219 = smul.addr %s218, 8
      %s220 = scalar_lea.vmem %s0, %s219
      %p221 = pneg %p37
      %p222 = pneg %p34
      %s223 = smul.u32 2, %s16
      %p224 = scmp.lt.s32.totalorder %s223, 3
      %s225 = scalar_select %p224, %s223, 3
      %s226 = smul.addr %s225, 8
      %s227 = scalar_lea.vmem %s1, %s226
      %p228 = pneg %p63
      %p229 = pneg %p60
      %s230 = smul.u32 2, %s16
      %p231 = scmp.lt.s32.totalorder %s230, 3
      %s232 = scalar_select %p231, %s230, 3
      %s233 = smul.addr %s232, 8
      %s234 = scalar_lea.vmem %s2, %s233
      %p235 = pneg %p89
      %p236 = pneg %p86
      %p237 = pneg %p110
      %p238 = pneg %p107
      %p239 = pneg %p131
      %p240 = pneg %p128
      %p241 = pneg %p157
      %p242 = pneg %p154
      %s243 = smul.u32 2, %s16
      %p244 = scmp.lt.s32.totalorder %s243, 3
      %s245 = scalar_select %p244, %s243, 3
      %s246 = smul.addr %s245, 4
      %s247 = scalar_lea.vmem %s5, %s246
      %s248 = smul.u32 2, %s16
      %p249 = scmp.lt.s32.totalorder %s248, 3
      %s250 = scalar_select %p249, %s248, 3
      %s251 = smul.addr %s250, 8
      %s252 = scalar_lea.vmem %s0, %s251
      %s253 = smul.u32 2, %s16
      %s254 = smul.u32 2, %s16
      %p255 = scmp.lt.s32.totalorder %s254, 3
      %s256 = scalar_select %p255, %s254, 3
      %s257 = smul.addr %s256, 8
      %s258 = scalar_lea.vmem %s1, %s257
      %s259 = smul.u32 2, %s16
      %s260 = smul.u32 2, %s16
      %p261 = scmp.lt.s32.totalorder %s260, 3
      %s262 = scalar_select %p261, %s260, 3
      %s263 = smul.addr %s262, 8
      %s264 = scalar_lea.vmem %s2, %s263
      %s265 = smul.u32 2, %s16
      %s266 = smul.u32 2, %s16
      %p267 = scmp.lt.s32.totalorder %s266, 3
      %s268 = scalar_select %p267, %s266, 3
      %s269 = smul.addr %s268, 4
      %s270 = scalar_lea.vmem %s5, %s269
      %s271 = smul.u32 2, %s16
      %v272 = vld [vmem:[%s252] sm:$0xff]
      %v273 = vld [vmem:[%s252 + $0x8] sm:$0xff]
      %v274 = vld [vmem:[%s258] sm:$0xff]
      %v275 = vld [vmem:[%s258 + $0x8] sm:$0xff]
      %v276 = vadd.f32 %v272, %v274
      %v277 = vadd.f32 %v273, %v275
      %v278 = vld [vmem:[%s264] sm:$0xff]
      %v279 = vld [vmem:[%s264 + $0x8] sm:$0xff]
      %v280 = vadd.f32 %v276, %v278
      %v281 = vadd.f32 %v277, %v279
      %282 = vadd.xlane.f32.xlu0 %v280
      %v283 = vpop.xlane.xlu0 %282
      %284 = vadd.xlane.f32.xlu0 %v281
      %v285 = vpop.xlane.xlu0 %284
      %v286 = vrcp.pop 128.0
      %v287 = vmul.f32 %v283, %v286
      %v288 = vmul.f32 %v285, %v286
      %v289 = vsub.f32 %v280, %v287
      %v290 = vsub.f32 %v281, %v288
      %v291 = vmul.f32 %v289, %v289
      %v292 = vmul.f32 %v290, %v290
      %293 = vadd.xlane.f32.xlu0 %v291
      %v294 = vpop.xlane.xlu0 %293
      %295 = vadd.xlane.f32.xlu0 %v292
      %v296 = vpop.xlane.xlu0 %295
      %v297 = vmul.f32 %v294, %v286
      %v298 = vmul.f32 %v296, %v286
      %v299 = vadd.f32 %v297, 1e-12
      %v300 = vadd.f32 %v298, 1e-12
      %v301 = vrsqrt.pop %v299
      %v302 = vrsqrt.pop %v300
      %v303 = vmul.f32 %v289, %v301
      %v304 = vmul.f32 %v290, %v302
      %v305 = vld [vmem:[%s3] sm:$0x1]
      %v307 = vlaneseq
      %v308 = vshrl.u32 %v307, 7
      %v309 = vsub.s32 0, %v308
      %v310 = vrot.slane %v305, %v309
      %v312 = vmul.f32 %v303, %v310
      %v313 = vmul.f32 %v304, %v310
      %v314 = vld [vmem:[%s4] sm:$0x1]
      %v316 = vlaneseq
      %v317 = vshrl.u32 %v316, 7
      %v318 = vsub.s32 0, %v317
      %v319 = vrot.slane %v314, %v318
      %v321 = vadd.f32 %v312, %v319
      %v322 = vadd.f32 %v313, %v319
      %v323 = vpack.c.bf16 %v322, %v321
      %v325 = vunpack.c.l.b16 %v323
      %v326 = vunpack.c.h.b16 %v323
      %v327 = vpack.c.b16 %v325, %v325
      %v328 = vpack.c.b16 %v326, %v326
      %331 = vst [vmem:[%s270] sm:$0xf] %v327
      %332 = vst [vmem:[%s270 + $0x4] sm:$0xf] %v328
      %s333 = smul.u32 2, %s16
      %p334 = scmp.lt.s32.totalorder %s333, 3
      %s335 = scalar_select %p334, %s333, 3
      %s336 = smul.addr %s335, 4
      %s337 = scalar_lea.vmem %s5, %s336
      // Predicated region
      $region41: #{bertsum_forward.12} parent=39 // pred_check
        %p338 = pneg %p154
      $region42: #{bertsum_forward.12} parent=39 // pred_check_branch
        %340 = sbr.rel (%p338) target = $region44
      $region43: #{bertsum_forward.12} parent=39 // pred_region
        %s341 = smul.u32 2, %s16
      $region44: #{bertsum_forward.12} parent=39 // pred_fallthru
        _
    $region40: #{bertsum_forward.12} parent=5 // pred_fallthru
      _
    %p342 = scmp.le.s32.totalorder 2, %s11
    // Predicated region
    $region45: #{bertsum_forward.12} parent=5 // pred_check
      %p343 = pneg %p342
    $region46: #{bertsum_forward.12} parent=5 // pred_check_branch
      %345 = sbr.rel (%p343) target = $region48
    $region47: #{bertsum_forward.12} parent=5 // pred_region
      %s346 = ssub.s32 %s11, 2
      // Predicated region
      $region49: #{bertsum_forward.12} parent=47 // pred_check
        %p347 = pneg %p160
      $region50: #{bertsum_forward.12} parent=47 // pred_check_branch
        %349 = sbr.rel (%p347) target = $region52
      $region51: #{bertsum_forward.12} parent=47 // pred_region
        %s350 = smul.u32 2, %s17
        %p351 = scmp.lt.s32.totalorder %s350, 3
        %s352 = scalar_select %p351, %s350, 3
        %s353 = smul.addr %s352, 4
        %s354 = scalar_lea.vmem %s5, %s353
      $region52: #{bertsum_forward.12} parent=47 // pred_fallthru
        _
    $region48: #{bertsum_forward.12} parent=5 // pred_fallthru
      _
  $region6: #{bertsum_forward.12} parent=0 // loop_footer
    %s15 = sadd.s32 1, %s11
  $region7: #{bertsum_forward.12} parent=0 // loop_footer_branch
    %10 = sbr.rel target = $region3
  $region8: #{bertsum_forward.12} parent=0 // loop_exit
    _

// kernel: bertsum_forward.14
$region0: #{bertsum_forward.14}
  #allocation0 [shape = 'u32[]', space=smem, size = 0x4, offset = 0x4, fixed_abs, tag = 'smem constant byte address 0x4 - core index']
  #allocation1 [shape = 'u32[144,128]{1,0:T(1,128)}', space=vmem, size = 0x12000, scoped, tag = 'internal scratch']
  %s0 = inlined_call_operand.vmem [shape: bf16[32,384], index: 0, kind: input, shape index: {}, may-alias: {0,1,2}]
  %s1 = inlined_call_operand.vmem [shape: bf16[32,384], index: 1, kind: input, shape index: {}, may-alias: {0,1,2}]
  %s2 = inlined_call_operand.vmem [shape: bf16[32,384], index: 2, kind: input, shape index: {}, may-alias: {0,1,2}]
  %s3 = inlined_call_operand.vmem [shape: f32[2,1,16], index: 3, kind: input, shape index: {}]
  %s4 = inlined_call_operand.vmem [shape: bf16[32,128], index: 4, kind: output, shape index: {}]
  %s5 = sld [smem:[#allocation0]]
  $region172: #{bertsum_forward.14} parent=0
    _
  %s7 = ssub.s32 1, %s5
  %s8 = scalar_select 0, %s7, %s5
  $region1: #{bertsum_forward.14} parent=0
    #allocation2 [shape = 'u8[8192]{0}', space=vmem, size = 0x2000, scoped, tag = 'input window, operand 0']
    #allocation3 [shape = 'u8[8192]{0}', space=vmem, size = 0x2000, scoped, tag = 'input window, operand 1']
    #allocation4 [shape = 'u8[8192]{0}', space=vmem, size = 0x2000, scoped, tag = 'input window, operand 2']
    loop: start=0, step=1, limit=4
    $region2: #{bertsum_forward.14} parent=1 // loop_pre_header
      _
    $region3: #{bertsum_forward.14} parent=1 // loop_header
      %s10 = sphi 0, %s14
      %p11 = scmp.ge.s32.totalorder %s10, 4
      %s17 = sphi 0, %s29
      %s18 = sphi 0, %s25
      %s19 = sphi 0, %s17
      %s20 = sphi 0, %s18
      %s21 = sphi 0, %s19
      %s22 = sphi 0, %s20
      %s34 = sphi 0, %s36
      %s37 = sphi 0, %s34
      %s38 = sphi 0, %s37
      %s54 = sphi 0, %s38
      %s64 = sphi 0, %s66
      %s67 = sphi 0, %s64
      %s68 = sphi 0, %s67
      %s84 = sphi 0, %s68
      %s94 = sphi 0, %s96
      %s97 = sphi 0, %s94
      %s98 = sphi 0, %s97
      %s114 = sphi 0, %s98
      %s120 = sphi 0, %s122
      %s123 = sphi 0, %s120
      %s124 = sphi 0, %s123
      %s140 = sphi 0, %s124
      %s148 = sphi 0, %s150
      %s151 = sphi 0, %s148
      %s152 = sphi 0, %s151
      %s168 = sphi 0, %s152
    $region4: #{bertsum_forward.14} parent=1 // loop_header_branch
      %13 = sbr.rel (%p11) target = $region8
    $region5: #{bertsum_forward.14} parent=1 // loop_body
      %s15 = ssub.s32 %s10, 1
      %s16 = ssub.s32 %s10, 2
      %s23 = sadd.s32 1, %s18
      %p24 = scmp.ge.s32.totalorder %s23, 1
      %s25 = scalar_select %p24, 0, %s23
      %s26 = sadd.s32 1, %s17
      %s27 = scalar_select %p24, %s26, %s17
      %p28 = scmp.ge.s32.totalorder %s27, 2
      %s29 = scalar_select %p28, 0, %s27
      %s30 = ssub.s32 %s17, %s29
      %s31 = ssub.s32 %s18, %s25
      %s32 = sor.u32 %s30, %s31
      %p33 = scmp.eq.s32.totalorder %s32, 0
      %s35 = sadd.s32 %s34, 1
      %s36 = scalar_select %p33, %s34, %s35
      %p39 = pneg %p33
      %p40 = scmp.eq.s32.totalorder %s10, 1
      %p41 = por %p39, %p40
      %p42 = scmp.ne.s32.totalorder %s34, %s37
      %p43 = scmp.eq.s32.totalorder %s10, 0
      %p44 = por %p42, %p43
      %p45 = scmp.ne.s32.totalorder %s34, %s37
      %p46 = scmp.eq.s32.totalorder %s15, 1
      %p47 = por %p45, %p46
      %p48 = scmp.ne.s32.totalorder %s37, %s38
      %p49 = scmp.eq.s32.totalorder %s15, 0
      %p50 = por %p48, %p49
      %p51 = scmp.ne.s32.totalorder %s37, %s38
      %p52 = scmp.eq.s32.totalorder %s16, 1
      %p53 = por %p51, %p52
      %p55 = scmp.ne.s32.totalorder %s38, %s54
      %p56 = scmp.eq.s32.totalorder %s16, 0
      %p57 = por %p55, %p56
      %s58 = sadd.s32 %s18, 1
      %s59 = sadd.s32 %s25, 1
      %s60 = ssub.s32 %s17, %s29
      %s61 = ssub.s32 %s58, %s59
      %s62 = sor.u32 %s60, %s61
      %p63 = scmp.eq.s32.totalorder %s62, 0
      %s65 = sadd.s32 %s64, 1
      %s66 = scalar_select %p63, %s64, %s65
      %p69 = pneg %p63
      %p70 = scmp.eq.s32.totalorder %s10, 1
      %p71 = por %p69, %p70
      %p72 = scmp.ne.s32.totalorder %s64, %s67
      %p73 = scmp.eq.s32.totalorder %s10, 0
      %p74 = por %p72, %p73
      %p75 = scmp.ne.s32.totalorder %s64, %s67
      %p76 = scmp.eq.s32.totalorder %s15, 1
      %p77 = por %p75, %p76
      %p78 = scmp.ne.s32.totalorder %s67, %s68
      %p79 = scmp.eq.s32.totalorder %s15, 0
      %p80 = por %p78, %p79
      %p81 = scmp.ne.s32.totalorder %s67, %s68
      %p82 = scmp.eq.s32.totalorder %s16, 1
      %p83 = por %p81, %p82
      %p85 = scmp.ne.s32.totalorder %s68, %s84
      %p86 = scmp.eq.s32.totalorder %s16, 0
      %p87 = por %p85, %p86
      %s88 = sadd.s32 %s18, 2
      %s89 = sadd.s32 %s25, 2
      %s90 = ssub.s32 %s17, %s29
      %s91 = ssub.s32 %s88, %s89
      %s92 = sor.u32 %s90, %s91
      %p93 = scmp.eq.s32.totalorder %s92, 0
      %s95 = sadd.s32 %s94, 1
      %s96 = scalar_select %p93, %s94, %s95
      %p99 = pneg %p93
      %p100 = scmp.eq.s32.totalorder %s10, 1
      %p101 = por %p99, %p100
      %p102 = scmp.ne.s32.totalorder %s94, %s97
      %p103 = scmp.eq.s32.totalorder %s10, 0
      %p104 = por %p102, %p103
      %p105 = scmp.ne.s32.totalorder %s94, %s97
      %p106 = scmp.eq.s32.totalorder %s15, 1
      %p107 = por %p105, %p106
      %p108 = scmp.ne.s32.totalorder %s97, %s98
      %p109 = scmp.eq.s32.totalorder %s15, 0
      %p110 = por %p108, %p109
      %p111 = scmp.ne.s32.totalorder %s97, %s98
      %p112 = scmp.eq.s32.totalorder %s16, 1
      %p113 = por %p111, %p112
      %p115 = scmp.ne.s32.totalorder %s98, %s114
      %p116 = scmp.eq.s32.totalorder %s16, 0
      %p117 = por %p115, %p116
      %s118 = ssub.s32 %s17, %s29
      %p119 = scmp.eq.s32.totalorder %s118, 0
      %s121 = sadd.s32 %s120, 1
      %s122 = scalar_select %p119, %s120, %s121
      %p125 = pneg %p119
      %p126 = scmp.eq.s32.totalorder %s10, 1
      %p127 = por %p125, %p126
      %p128 = scmp.ne.s32.totalorder %s120, %s123
      %p129 = scmp.eq.s32.totalorder %s10, 0
      %p130 = por %p128, %p129
      %p131 = scmp.ne.s32.totalorder %s120, %s123
      %p132 = scmp.eq.s32.totalorder %s15, 1
      %p133 = por %p131, %p132
      %p134 = scmp.ne.s32.totalorder %s123, %s124
      %p135 = scmp.eq.s32.totalorder %s15, 0
      %p136 = por %p134, %p135
      %p137 = scmp.ne.s32.totalorder %s123, %s124
      %p138 = scmp.eq.s32.totalorder %s16, 1
      %p139 = por %p137, %p138
      %p141 = scmp.ne.s32.totalorder %s124, %s140
      %p142 = scmp.eq.s32.totalorder %s16, 0
      %p143 = por %p141, %p142
      %s144 = ssub.s32 %s17, %s29
      %s145 = ssub.s32 %s18, %s25
      %s146 = sor.u32 %s144, %s145
      %p147 = scmp.eq.s32.totalorder %s146, 0
      %s149 = sadd.s32 %s148, 1
      %s150 = scalar_select %p147, %s148, %s149
      %p153 = pneg %p147
      %p154 = scmp.eq.s32.totalorder %s10, 1
      %p155 = por %p153, %p154
      %p156 = scmp.ne.s32.totalorder %s148, %s151
      %p157 = scmp.eq.s32.totalorder %s10, 0
      %p158 = por %p156, %p157
      %p159 = scmp.ne.s32.totalorder %s148, %s151
      %p160 = scmp.eq.s32.totalorder %s15, 1
      %p161 = por %p159, %p160
      %p162 = scmp.ne.s32.totalorder %s151, %s152
      %p163 = scmp.eq.s32.totalorder %s15, 0
      %p164 = por %p162, %p163
      %p165 = scmp.ne.s32.totalorder %s151, %s152
      %p166 = scmp.eq.s32.totalorder %s16, 1
      %p167 = por %p165, %p166
      %p169 = scmp.ne.s32.totalorder %s152, %s168
      %p170 = scmp.eq.s32.totalorder %s16, 0
      %p171 = por %p169, %p170
      %p172 = scmp.le.s32.totalorder 1, %s10
      %p173 = scmp.lt.s32.totalorder %s10, 3
      %p174 = pnand %p172, %p173
      %p175 = pneg %p174
      // Predicated region
      $region9: #{bertsum_forward.14} parent=5 // pred_check
        _
      $region10: #{bertsum_forward.14} parent=5 // pred_check_branch
        %177 = sbr.rel (%p174) target = $region12
      $region11: #{bertsum_forward.14} parent=5 // pred_region
        %s178 = ssub.s32 %s10, 1
      $region12: #{bertsum_forward.14} parent=5 // pred_fallthru
        _
      %p179 = scmp.lt.s32.totalorder %s10, 2
      // Predicated region
      $region13: #{bertsum_forward.14} parent=5 // pred_check
        %p180 = pneg %p179
      $region14: #{bertsum_forward.14} parent=5 // pred_check_branch
        %182 = sbr.rel (%p180) target = $region16
      $region15: #{bertsum_forward.14} parent=5 // pred_region
        // Predicated region
        $region17: #{bertsum_forward.14} parent=15 // pred_check
          %p183 = pneg %p44
        $region18: #{bertsum_forward.14} parent=15 // pred_check_branch
          %185 = sbr.rel (%p183) target = $region20
        $region19: #{bertsum_forward.14} parent=15 // pred_region
          %s186 = sand.u32 %s34, 1
          %s187 = sand.u32 %s34, 1
          %s188 = smul.addr %s187, 8
          %s189 = scalar_lea.vmem [#allocation2], %s188
          %s190 = smul.u32 2, %s17
          %s191 = smul.addr %s190, 3
          %s192 = sadd.s32 %s18, %s191
          %s193 = smul.addr %s192, 4
          %s194 = scalar_lea.vmem %s0, %s193
          // Predicated region
          $region21: #{bertsum_forward.14} parent=19 // pred_check
            _
          $region22: #{bertsum_forward.14} parent=19 // pred_check_branch
            %196 = sbr.rel (0) target = $region24
          $region23: #{bertsum_forward.14} parent=19 // pred_region
            // Predicated region
            $region25: #{bertsum_forward.14} parent=23 // pred_check
              _
            $region26: #{bertsum_forward.14} parent=23 // pred_check_branch
              %198 = sbr.rel target = $region28
            $region27: #{bertsum_forward.14} parent=23 // pred_region
              // Predicated region
              $region40: #{bertsum_forward.14} parent=27 // pred_check
                _
              $region41: #{bertsum_forward.14} parent=27 // pred_check_branch
                %215 = sbr.rel (0) target = $region43
              $region42: #{bertsum_forward.14} parent=27 // pred_region
                loop: start=0, step=1, limit=1
                $region44: #{bertsum_forward.14} parent=42 // loop_pre_header
                  _
                $region45: #{bertsum_forward.14} parent=42 // loop_header
                  %s217 = sphi 0, %s221
                  %p218 = scmp.ge.s32.totalorder %s217, 1
                  %s222 = sphi %s194, %s194
                  %s223 = sphi %s189, %s189
                $region46: #{bertsum_forward.14} parent=42 // loop_header_branch
                  %220 = sbr.rel (%p218) target = $region50
                $region47: #{bertsum_forward.14} parent=42 // loop_body
                  _
                $region48: #{bertsum_forward.14} parent=42 // loop_footer
                  %s221 = sadd.s32 1, %s217
                $region49: #{bertsum_forward.14} parent=42 // loop_footer_branch
                  %216 = sbr.rel target = $region45
                $region50: #{bertsum_forward.14} parent=42 // loop_exit
                  _
                loop: start=0, step=1, limit=1
                $region51: #{bertsum_forward.14} parent=42 // loop_pre_header
                  _
                $region52: #{bertsum_forward.14} parent=42 // loop_header
                  %s226 = sphi 0, %s230
                  %p227 = scmp.ge.s32.totalorder %s226, 1
                  %s231 = sphi %s194, %s194
                  %s232 = sphi %s189, %s189
                $region53: #{bertsum_forward.14} parent=42 // loop_header_branch
                  %229 = sbr.rel (%p227) target = $region57
                $region54: #{bertsum_forward.14} parent=42 // loop_body
                  %v233 = vld [vmem:[%s231] sm:$0xf]
                  %234 = vst [vmem:[%s232] sm:$0xf] %v233
                  %v235 = vld [vmem:[%s231 + $0xc] sm:$0xf]
                  %236 = vst [vmem:[%s232 + $0x4] sm:$0xf] %v235
                $region55: #{bertsum_forward.14} parent=42 // loop_footer
                  %s230 = sadd.s32 1, %s226
                $region56: #{bertsum_forward.14} parent=42 // loop_footer_branch
                  %225 = sbr.rel target = $region52
                $region57: #{bertsum_forward.14} parent=42 // loop_exit
                  _
              $region43: #{bertsum_forward.14} parent=27 // pred_fallthru
                _
            $region28: #{bertsum_forward.14} parent=23 // pred_fallthru
              _
            // Predicated region
            $region29: #{bertsum_forward.14} parent=23 // pred_check
              _
            $region30: #{bertsum_forward.14} parent=23 // pred_check_branch
              %200 = sbr.rel (0) target = $region32
            $region31: #{bertsum_forward.14} parent=23 // pred_region
              loop: start=0, step=1, limit=1
              $region33: #{bertsum_forward.14} parent=31 // loop_pre_header
                _
              $region34: #{bertsum_forward.14} parent=31 // loop_header
                %s203 = sphi 0, %s207
                %p204 = scmp.ge.s32.totalorder %s203, 1
                %s208 = sphi %s194, %s194
                %s209 = sphi %s189, %s189
              $region35: #{bertsum_forward.14} parent=31 // loop_header_branch
                %206 = sbr.rel (%p204) target = $region39
              $region36: #{bertsum_forward.14} parent=31 // loop_body
                %v210 = vld [vmem:[%s208] sm:$0xf]
                %211 = vst [vmem:[%s209] sm:$0xf] %v210
                %v212 = vld [vmem:[%s208 + $0xc] sm:$0xf]
                %213 = vst [vmem:[%s209 + $0x4] sm:$0xf] %v212
              $region37: #{bertsum_forward.14} parent=31 // loop_footer
                %s207 = sadd.s32 1, %s203
              $region38: #{bertsum_forward.14} parent=31 // loop_footer_branch
                %202 = sbr.rel target = $region34
              $region39: #{bertsum_forward.14} parent=31 // loop_exit
                _
            $region32: #{bertsum_forward.14} parent=23 // pred_fallthru
              _
          $region24: #{bertsum_forward.14} parent=19 // pred_fallthru
            _
          %237 = vnop
        $region20: #{bertsum_forward.14} parent=15 // pred_fallthru
          _
        // Predicated region
        $region58: #{bertsum_forward.14} parent=15 // pred_check
          %p238 = pneg %p74
        $region59: #{bertsum_forward.14} parent=15 // pred_check_branch
          %240 = sbr.rel (%p238) target = $region61
        $region60: #{bertsum_forward.14} parent=15 // pred_region
          %s241 = sand.u32 %s64, 1
          %s242 = sand.u32 %s64, 1
          %s243 = smul.addr %s242, 8
          %s244 = scalar_lea.vmem [#allocation3], %s243
          %s245 = sadd.s32 %s18, 1
          %s246 = smul.u32 2, %s17
          %s247 = smul.addr %s246, 3
          %s248 = sadd.s32 %s245, %s247
          %s249 = smul.addr %s248, 4
          %s250 = scalar_lea.vmem %s1, %s249
          // Predicated region
          $region62: #{bertsum_forward.14} parent=60 // pred_check
            _
          $region63: #{bertsum_forward.14} parent=60 // pred_check_branch
            %252 = sbr.rel (0) target = $region65
          $region64: #{bertsum_forward.14} parent=60 // pred_region
            // Predicated region
            $region66: #{bertsum_forward.14} parent=64 // pred_check
              _
            $region67: #{bertsum_forward.14} parent=64 // pred_check_branch
              %254 = sbr.rel target = $region69
            $region68: #{bertsum_forward.14} parent=64 // pred_region
              // Predicated region
              $region81: #{bertsum_forward.14} parent=68 // pred_check
                _
              $region82: #{bertsum_forward.14} parent=68 // pred_check_branch
                %271 = sbr.rel (0) target = $region84
              $region83: #{bertsum_forward.14} parent=68 // pred_region
                loop: start=0, step=1, limit=1
                $region85: #{bertsum_forward.14} parent=83 // loop_pre_header
                  _
                $region86: #{bertsum_forward.14} parent=83 // loop_header
                  %s273 = sphi 0, %s277
                  %p274 = scmp.ge.s32.totalorder %s273, 1
                  %s278 = sphi %s250, %s250
                  %s279 = sphi %s244, %s244
                $region87: #{bertsum_forward.14} parent=83 // loop_header_branch
                  %276 = sbr.rel (%p274) target = $region91
                $region88: #{bertsum_forward.14} parent=83 // loop_body
                  _
                $region89: #{bertsum_forward.14} parent=83 // loop_footer
                  %s277 = sadd.s32 1, %s273
                $region90: #{bertsum_forward.14} parent=83 // loop_footer_branch
                  %272 = sbr.rel target = $region86
                $region91: #{bertsum_forward.14} parent=83 // loop_exit
                  _
                loop: start=0, step=1, limit=1
                $region92: #{bertsum_forward.14} parent=83 // loop_pre_header
                  _
                $region93: #{bertsum_forward.14} parent=83 // loop_header
                  %s282 = sphi 0, %s286
                  %p283 = scmp.ge.s32.totalorder %s282, 1
                  %s287 = sphi %s250, %s250
                  %s288 = sphi %s244, %s244
                $region94: #{bertsum_forward.14} parent=83 // loop_header_branch
                  %285 = sbr.rel (%p283) target = $region98
                $region95: #{bertsum_forward.14} parent=83 // loop_body
                  %v289 = vld [vmem:[%s287] sm:$0xf]
                  %290 = vst [vmem:[%s288] sm:$0xf] %v289
                  %v291 = vld [vmem:[%s287 + $0xc] sm:$0xf]
                  %292 = vst [vmem:[%s288 + $0x4] sm:$0xf] %v291
                $region96: #{bertsum_forward.14} parent=83 // loop_footer
                  %s286 = sadd.s32 1, %s282
                $region97: #{bertsum_forward.14} parent=83 // loop_footer_branch
                  %281 = sbr.rel target = $region93
                $region98: #{bertsum_forward.14} parent=83 // loop_exit
                  _
              $region84: #{bertsum_forward.14} parent=68 // pred_fallthru
                _
            $region69: #{bertsum_forward.14} parent=64 // pred_fallthru
              _
            // Predicated region
            $region70: #{bertsum_forward.14} parent=64 // pred_check
              _
            $region71: #{bertsum_forward.14} parent=64 // pred_check_branch
              %256 = sbr.rel (0) target = $region73
            $region72: #{bertsum_forward.14} parent=64 // pred_region
              loop: start=0, step=1, limit=1
              $region74: #{bertsum_forward.14} parent=72 // loop_pre_header
                _
              $region75: #{bertsum_forward.14} parent=72 // loop_header
                %s259 = sphi 0, %s263
                %p260 = scmp.ge.s32.totalorder %s259, 1
                %s264 = sphi %s250, %s250
                %s265 = sphi %s244, %s244
              $region76: #{bertsum_forward.14} parent=72 // loop_header_branch
                %262 = sbr.rel (%p260) target = $region80
              $region77: #{bertsum_forward.14} parent=72 // loop_body
                %v266 = vld [vmem:[%s264] sm:$0xf]
                %267 = vst [vmem:[%s265] sm:$0xf] %v266
                %v268 = vld [vmem:[%s264 + $0xc] sm:$0xf]
                %269 = vst [vmem:[%s265 + $0x4] sm:$0xf] %v268
              $region78: #{bertsum_forward.14} parent=72 // loop_footer
                %s263 = sadd.s32 1, %s259
              $region79: #{bertsum_forward.14} parent=72 // loop_footer_branch
                %258 = sbr.rel target = $region75
              $region80: #{bertsum_forward.14} parent=72 // loop_exit
                _
            $region73: #{bertsum_forward.14} parent=64 // pred_fallthru
              _
          $region65: #{bertsum_forward.14} parent=60 // pred_fallthru
            _
          %293 = vnop
        $region61: #{bertsum_forward.14} parent=15 // pred_fallthru
          _
        // Predicated region
        $region99: #{bertsum_forward.14} parent=15 // pred_check
          %p294 = pneg %p104
        $region100: #{bertsum_forward.14} parent=15 // pred_check_branch
          %296 = sbr.rel (%p294) target = $region102
        $region101: #{bertsum_forward.14} parent=15 // pred_region
          %s297 = sand.u32 %s94, 1
          %s298 = sand.u32 %s94, 1
          %s299 = smul.addr %s298, 8
          %s300 = scalar_lea.vmem [#allocation4], %s299
          %s301 = sadd.s32 %s18, 2
          %s302 = smul.u32 2, %s17
          %s303 = smul.addr %s302, 3
          %s304 = sadd.s32 %s301, %s303
          %s305 = smul.addr %s304, 4
          %s306 = scalar_lea.vmem %s2, %s305
          // Predicated region
          $region103: #{bertsum_forward.14} parent=101 // pred_check
            _
          $region104: #{bertsum_forward.14} parent=101 // pred_check_branch
            %308 = sbr.rel (0) target = $region106
          $region105: #{bertsum_forward.14} parent=101 // pred_region
            // Predicated region
            $region107: #{bertsum_forward.14} parent=105 // pred_check
              _
            $region108: #{bertsum_forward.14} parent=105 // pred_check_branch
              %310 = sbr.rel target = $region110
            $region109: #{bertsum_forward.14} parent=105 // pred_region
              // Predicated region
              $region122: #{bertsum_forward.14} parent=109 // pred_check
                _
              $region123: #{bertsum_forward.14} parent=109 // pred_check_branch
                %327 = sbr.rel (0) target = $region125
              $region124: #{bertsum_forward.14} parent=109 // pred_region
                loop: start=0, step=1, limit=1
                $region126: #{bertsum_forward.14} parent=124 // loop_pre_header
                  _
                $region127: #{bertsum_forward.14} parent=124 // loop_header
                  %s329 = sphi 0, %s333
                  %p330 = scmp.ge.s32.totalorder %s329, 1
                  %s334 = sphi %s306, %s306
                  %s335 = sphi %s300, %s300
                $region128: #{bertsum_forward.14} parent=124 // loop_header_branch
                  %332 = sbr.rel (%p330) target = $region132
                $region129: #{bertsum_forward.14} parent=124 // loop_body
                  _
                $region130: #{bertsum_forward.14} parent=124 // loop_footer
                  %s333 = sadd.s32 1, %s329
                $region131: #{bertsum_forward.14} parent=124 // loop_footer_branch
                  %328 = sbr.rel target = $region127
                $region132: #{bertsum_forward.14} parent=124 // loop_exit
                  _
                loop: start=0, step=1, limit=1
                $region133: #{bertsum_forward.14} parent=124 // loop_pre_header
                  _
                $region134: #{bertsum_forward.14} parent=124 // loop_header
                  %s338 = sphi 0, %s342
                  %p339 = scmp.ge.s32.totalorder %s338, 1
                  %s343 = sphi %s306, %s306
                  %s344 = sphi %s300, %s300
                $region135: #{bertsum_forward.14} parent=124 // loop_header_branch
                  %341 = sbr.rel (%p339) target = $region139
                $region136: #{bertsum_forward.14} parent=124 // loop_body
                  %v345 = vld [vmem:[%s343] sm:$0xf]
                  %346 = vst [vmem:[%s344] sm:$0xf] %v345
                  %v347 = vld [vmem:[%s343 + $0xc] sm:$0xf]
                  %348 = vst [vmem:[%s344 + $0x4] sm:$0xf] %v347
                $region137: #{bertsum_forward.14} parent=124 // loop_footer
                  %s342 = sadd.s32 1, %s338
                $region138: #{bertsum_forward.14} parent=124 // loop_footer_branch
                  %337 = sbr.rel target = $region134
                $region139: #{bertsum_forward.14} parent=124 // loop_exit
                  _
              $region125: #{bertsum_forward.14} parent=109 // pred_fallthru
                _
            $region110: #{bertsum_forward.14} parent=105 // pred_fallthru
              _
            // Predicated region
            $region111: #{bertsum_forward.14} parent=105 // pred_check
              _
            $region112: #{bertsum_forward.14} parent=105 // pred_check_branch
              %312 = sbr.rel (0) target = $region114
            $region113: #{bertsum_forward.14} parent=105 // pred_region
              loop: start=0, step=1, limit=1
              $region115: #{bertsum_forward.14} parent=113 // loop_pre_header
                _
              $region116: #{bertsum_forward.14} parent=113 // loop_header
                %s315 = sphi 0, %s319
                %p316 = scmp.ge.s32.totalorder %s315, 1
                %s320 = sphi %s306, %s306
                %s321 = sphi %s300, %s300
              $region117: #{bertsum_forward.14} parent=113 // loop_header_branch
                %318 = sbr.rel (%p316) target = $region121
              $region118: #{bertsum_forward.14} parent=113 // loop_body
                %v322 = vld [vmem:[%s320] sm:$0xf]
                %323 = vst [vmem:[%s321] sm:$0xf] %v322
                %v324 = vld [vmem:[%s320 + $0xc] sm:$0xf]
                %325 = vst [vmem:[%s321 + $0x4] sm:$0xf] %v324
              $region119: #{bertsum_forward.14} parent=113 // loop_footer
                %s319 = sadd.s32 1, %s315
              $region120: #{bertsum_forward.14} parent=113 // loop_footer_branch
                %314 = sbr.rel target = $region116
              $region121: #{bertsum_forward.14} parent=113 // loop_exit
                _
            $region114: #{bertsum_forward.14} parent=105 // pred_fallthru
              _
          $region106: #{bertsum_forward.14} parent=101 // pred_fallthru
            _
          %349 = vnop
        $region102: #{bertsum_forward.14} parent=15 // pred_fallthru
          _
        // Predicated region
        $region140: #{bertsum_forward.14} parent=15 // pred_check
          %p350 = pneg %p130
        $region141: #{bertsum_forward.14} parent=15 // pred_check_branch
          %352 = sbr.rel (%p350) target = $region143
        $region142: #{bertsum_forward.14} parent=15 // pred_region
          %p353 = scmp.lt.s32.totalorder %s17, 1
          %s354 = scalar_select %p353, %s17, 1
          %s355 = scalar_lea.vmem %s3, %s354
        $region143: #{bertsum_forward.14} parent=15 // pred_fallthru
          _
      $region16: #{bertsum_forward.14} parent=5 // pred_fallthru
        _
      %p356 = scmp.le.s32.totalorder 1, %s10
      %p357 = scmp.lt.s32.totalorder %s10, 3
      %p358 = pnand %p356, %p357
      %p359 = pneg %p358
      // Predicated region
      $region144: #{bertsum_forward.14} parent=5 // pred_check
        _
      $region145: #{bertsum_forward.14} parent=5 // pred_check_branch
        %361 = sbr.rel (%p358) target = $region147
      $region146: #{bertsum_forward.14} parent=5 // pred_region
        %s362 = ssub.s32 %s10, 1
        %s363 = sand.u32 %s37, 1
        %s364 = sand.u32 %s37, 1
        %s365 = smul.addr %s364, 8
        %s366 = scalar_lea.vmem [#allocation2], %s365
        // Predicated region
        $region148: #{bertsum_forward.14} parent=146 // pred_check
          %p367 = pneg %p50
        $region149: #{bertsum_forward.14} parent=146 // pred_check_branch
          %369 = sbr.rel (%p367) target = $region151
        $region150: #{bertsum_forward.14} parent=146 // pred_region
          _
        $region151: #{bertsum_forward.14} parent=146 // pred_fallthru
          _
        %s370 = sand.u32 %s67, 1
        %s371 = sand.u32 %s67, 1
        %s372 = smul.addr %s371, 8
        %s373 = scalar_lea.vmem [#allocation3], %s372
        // Predicated region
        $region152: #{bertsum_forward.14} parent=146 // pred_check
          %p374 = pneg %p80
        $region153: #{bertsum_forward.14} parent=146 // pred_check_branch
          %376 = sbr.rel (%p374) target = $region155
        $region154: #{bertsum_forward.14} parent=146 // pred_region
          _
        $region155: #{bertsum_forward.14} parent=146 // pred_fallthru
          _
        %s377 = sand.u32 %s97, 1
        %s378 = sand.u32 %s97, 1
        %s379 = smul.addr %s378, 8
        %s380 = scalar_lea.vmem [#allocation4], %s379
        // Predicated region
        $region156: #{bertsum_forward.14} parent=146 // pred_check
          %p381 = pneg %p110
        $region157: #{bertsum_forward.14} parent=146 // pred_check_branch
          %383 = sbr.rel (%p381) target = $region159
        $region158: #{bertsum_forward.14} parent=146 // pred_region
          _
        $region159: #{bertsum_forward.14} parent=146 // pred_fallthru
          _
        %s384 = sand.u32 %s37, 1
        %s385 = sand.u32 %s37, 1
        %s386 = smul.addr %s385, 8
        %s387 = scalar_lea.vmem [#allocation2], %s386
        %p388 = pneg %p50
        %p389 = pneg %p47
        %s390 = sand.u32 %s67, 1
        %s391 = sand.u32 %s67, 1
        %s392 = smul.addr %s391, 8
        %s393 = scalar_lea.vmem [#allocation3], %s392
        %p394 = pneg %p80
        %p395 = pneg %p77
        %s396 = sand.u32 %s97, 1
        %s397 = sand.u32 %s97, 1
        %s398 = smul.addr %s397, 8
        %s399 = scalar_lea.vmem [#allocation4], %s398
        %p400 = pneg %p110
        %p401 = pneg %p107
        %p402 = scmp.lt.s32.totalorder %s19, 1
        %s403 = scalar_select %p402, %s19, 1
        %s404 = scalar_lea.vmem %s3, %s403
        %p405 = pneg %p136
        %p406 = pneg %p133
        %p407 = pneg %p164
        %p408 = pneg %p161
        %s409 = smul.u32 2, %s19
        %p410 = scmp.lt.s32.totalorder %s409, 3
        %s411 = scalar_select %p410, %s409, 3
        %p412 = scmp.lt.s32.totalorder %s20, 0
        %s413 = scalar_select %p412, %s20, 0
        %s414 = sadd.s32 %s413, %s411
        %s415 = smul.addr %s414, 4
        %s416 = scalar_lea.vmem %s4, %s415
        %s417 = smul.u32 2, %s19
        %s418 = sadd.s32 %s20, 1
        %s419 = smul.u32 2, %s19
        %s420 = sadd.s32 %s20, 2
        %s421 = smul.u32 2, %s19
        %p422 = scmp.lt.s32.totalorder %s19, 1
        %s423 = scalar_select %p422, %s19, 1
        %s424 = scalar_lea.vmem %s3, %s423
        %s425 = smul.u32 2, %s19
        %p426 = scmp.lt.s32.totalorder %s425, 3
        %s427 = scalar_select %p426, %s425, 3
        %p428 = scmp.lt.s32.totalorder %s20, 0
        %s429 = scalar_select %p428, %s20, 0
        %s430 = sadd.s32 %s429, %s427
        %s431 = smul.addr %s430, 4
        %s432 = scalar_lea.vmem %s4, %s431
        %s433 = smul.u32 2, %s19
        %v435 = vld [vmem:[%s424] sm:$0x1]
        %v436 = vld [vmem:[%s366] sm:$0xf]
        %v437 = vld [vmem:[%s366 + $0x4] sm:$0xf]
        %v438 = vld [vmem:[%s373] sm:$0xf]
        %v439 = vld [vmem:[%s373 + $0x4] sm:$0xf]
        %v440 = vld [vmem:[%s380] sm:$0xf]
        %v441 = vld [vmem:[%s380 + $0x4] sm:$0xf]
        %v444 = vunpack.c.l.b16 %v436
        %v445 = vunpack.c.l.b16 %v437
        %v446 = vpack.c.b16 %v445, %v444
        %v449 = vunpack.c.l.b16 %v438
        %v450 = vunpack.c.l.b16 %v439
        %v451 = vpack.c.b16 %v450, %v449
        %vm452 = vcmask 523264
        %v454 = vsel %vm452, %v446, 0
        %v457 = vsel %vm452, %v451, 0
        %459 = vmatprep.subr.bf16.mxu0 0
        %460 = vmatpush1.bf16.xpose.msra.mxu0 %v457
        %461 = vmatprep.subr.bf16.mxu0 0
        %462 = vmatpush1.bf16.xpose.msra.mxu0 0
        %463 = vmatprep.subr.bf16.mxu0 0
        %464 = vmatpush1.bf16.xpose.msra.mxu0 0
        %465 = vmatprep.subr.bf16.mxu0 0
        %466 = vmatpush1.bf16.xpose.msra.mxu0 0
        %467 = vmatprep.subr.bf16.mxu0 0
        %468 = vmatpush1.bf16.xpose.msra.mxu0 0
        %469 = vmatprep.subr.bf16.mxu0 0
        %470 = vmatpush1.bf16.xpose.msra.mxu0 0
        %471 = vmatprep.subr.bf16.mxu0 0
        %472 = vmatpush1.bf16.xpose.msra.mxu0 0
        %473 = vmatprep.subr.bf16.mxu0 0
        %474 = vmatpush1.bf16.xpose.msra.mxu0 0
        %475 = vmatprep.subr.bf16.mxu0 0
        %476 = vmatpush1.bf16.xpose.msra.mxu0 0
        %477 = vmatprep.subr.bf16.mxu0 0
        %478 = vmatpush1.bf16.xpose.msra.mxu0 0
        %479 = vmatprep.subr.bf16.mxu0 0
        %480 = vmatpush1.bf16.xpose.msra.mxu0 0
        %481 = vmatprep.subr.bf16.mxu0 0
        %482 = vmatpush1.bf16.xpose.msra.mxu0 0
        %483 = vmatprep.subr.bf16.mxu0 0
        %484 = vmatpush1.bf16.xpose.msra.mxu0 0
        %485 = vmatprep.subr.bf16.mxu0 0
        %486 = vmatpush1.bf16.xpose.msra.mxu0 0
        %487 = vmatprep.subr.bf16.mxu0 0
        %488 = vmatpush1.bf16.xpose.msra.mxu0 0
        %489 = vmatprep.subr.bf16.mxu0 0
        %490 = vmatpush1.bf16.xpose.msra.mxu0 0
        %491 = vmatprep.mubr.bf16.mxu0 0
        %492 = vmatmul.mubr.bf16.gmra.mrb[0].mxu0 %v454
        %v493 = vpop.f32.mrb[0].mxu0
        %v494 = vadd.f32 0.0, %v493
        %v495 = vpop.f32.mrb[0].mxu0
        %v496 = vpop.f32.mrb[0].mxu0
        %v497 = vadd.f32 0.0, %v496
        %v498 = vpop.f32.mrb[0].mxu0
        %499 = vdwg.mxu0
        %v500 = vmul.f32 %v494, 0.125
        %v501 = vmul.f32 %v497, 0.125
        %v503 = vlaneseq
        %v504 = vshrl.u32 %v503, 7
        %v505 = vsub.s32 0, %v504
        %v506 = vrot.slane %v435, %v505
        %v508 = vadd.f32 %v500, %v506
        %v509 = vadd.f32 %v501, %v506
        %vm510 = vcmask 130048
        %v511 = vsel %vm510, %v508, -inf
        %512 = vmax.xlane.f32.xlu0 %v511
        %v513 = vpop.xlane.xlu0 %512
        %v514 = vsel %vm510, %v509, -inf
        %515 = vmax.xlane.f32.xlu0 %v514
        %v516 = vpop.xlane.xlu0 %515
        %v517 = vsub.f32 %v508, %v513
        %v518 = vsub.f32 %v509, %v516
        %v519 = vmul.f32 %v517, 1.442695
        %v520 = vpow.pop %v519
        %v521 = vmul.f32 %v518, 1.442695
        %v522 = vpow.pop %v521
        %v523 = vsel %vm510, %v520, 0.0
        %524 = vadd.xlane.f32.xlu0 %v523
        %v525 = vpop.xlane.xlu0 %524
        %v526 = vsel %vm510, %v522, 0.0
        %527 = vadd.xlane.f32.xlu0 %v526
        %v528 = vpop.xlane.xlu0 %527
        %v529 = vrcp.pop %v525
        %v530 = vrcp.pop %v528
        %v531 = vmul.f32 %v520, %v529
        %v532 = vmul.f32 %v522, %v530
        %v533 = vpack.c.bf16 %v532, %v531
        %v536 = vunpack.c.l.b16 %v440
        %v537 = vunpack.c.l.b16 %v441
        %v538 = vpack.c.b16 %v537, %v536
        %v541 = vsel %vm510, %v533, 0
        %543 = vmatprep.subr.bf16.mxu0 0
        %544 = vmatpush1.bf16.msra.mxu0 %v538
        %545 = vmatprep.subr.bf16.mxu0 0
        %546 = vmatpush1.bf16.msra.mxu0 0
        %547 = vmatprep.subr.bf16.mxu0 0
        %548 = vmatpush1.bf16.msra.mxu0 0
        %549 = vmatprep.subr.bf16.mxu0 0
        %550 = vmatpush1.bf16.msra.mxu0 0
        %551 = vmatprep.subr.bf16.mxu0 0
        %552 = vmatpush1.bf16.msra.mxu0 0
        %553 = vmatprep.subr.bf16.mxu0 0
        %554 = vmatpush1.bf16.msra.mxu0 0
        %555 = vmatprep.subr.bf16.mxu0 0
        %556 = vmatpush1.bf16.msra.mxu0 0
        %557 = vmatprep.subr.bf16.mxu0 0
        %558 = vmatpush1.bf16.msra.mxu0 0
        %559 = vmatprep.subr.bf16.mxu0 0
        %560 = vmatpush1.bf16.msra.mxu0 0
        %561 = vmatprep.subr.bf16.mxu0 0
        %562 = vmatpush1.bf16.msra.mxu0 0
        %563 = vmatprep.subr.bf16.mxu0 0
        %564 = vmatpush1.bf16.msra.mxu0 0
        %565 = vmatprep.subr.bf16.mxu0 0
        %566 = vmatpush1.bf16.msra.mxu0 0
        %567 = vmatprep.subr.bf16.mxu0 0
        %568 = vmatpush1.bf16.msra.mxu0 0
        %569 = vmatprep.subr.bf16.mxu0 0
        %570 = vmatpush1.bf16.msra.mxu0 0
        %571 = vmatprep.subr.bf16.mxu0 0
        %572 = vmatpush1.bf16.msra.mxu0 0
        %573 = vmatprep.subr.bf16.mxu0 0
        %574 = vmatpush1.bf16.msra.mxu0 0
        %575 = vmatprep.mubr.bf16.mxu0 0
        %576 = vmatmul.mubr.bf16.gmra.mrb[0].mxu0 %v541
        %v577 = vpop.f32.mrb[0].mxu0
        %v578 = vadd.f32 0.0, %v577
        %v579 = vpop.f32.mrb[0].mxu0
        %v580 = vpop.f32.mrb[0].mxu0
        %v581 = vadd.f32 0.0, %v580
        %v582 = vpop.f32.mrb[0].mxu0
        %583 = vdwg.mxu0
        %584 = vrot.lane.b32.xlu0 %v446, 64
        %v585 = vpop.permute.xlu0 %584
        %586 = vrot.lane.b32.xlu0 %v451, 64
        %v587 = vpop.permute.xlu0 %586
        %v589 = vsel %vm452, %v585, 0
        %v592 = vsel %vm452, %v587, 0
        %594 = vmatprep.subr.bf16.mxu0 0
        %595 = vmatpush1.bf16.xpose.msra.mxu0 %v592
        %596 = vmatprep.subr.bf16.mxu0 0
        %597 = vmatpush1.bf16.xpose.msra.mxu0 0
        %598 = vmatprep.subr.bf16.mxu0 0
        %599 = vmatpush1.bf16.xpose.msra.mxu0 0
        %600 = vmatprep.subr.bf16.mxu0 0
        %601 = vmatpush1.bf16.xpose.msra.mxu0 0
        %602 = vmatprep.subr.bf16.mxu0 0
        %603 = vmatpush1.bf16.xpose.msra.mxu0 0
        %604 = vmatprep.subr.bf16.mxu0 0
        %605 = vmatpush1.bf16.xpose.msra.mxu0 0
        %606 = vmatprep.subr.bf16.mxu0 0
        %607 = vmatpush1.bf16.xpose.msra.mxu0 0
        %608 = vmatprep.subr.bf16.mxu0 0
        %609 = vmatpush1.bf16.xpose.msra.mxu0 0
        %610 = vmatprep.subr.bf16.mxu0 0
        %611 = vmatpush1.bf16.xpose.msra.mxu0 0
        %612 = vmatprep.subr.bf16.mxu0 0
        %613 = vmatpush1.bf16.xpose.msra.mxu0 0
        %614 = vmatprep.subr.bf16.mxu0 0
        %615 = vmatpush1.bf16.xpose.msra.mxu0 0
        %616 = vmatprep.subr.bf16.mxu0 0
        %617 = vmatpush1.bf16.xpose.msra.mxu0 0
        %618 = vmatprep.subr.bf16.mxu0 0
        %619 = vmatpush1.bf16.xpose.msra.mxu0 0
        %620 = vmatprep.subr.bf16.mxu0 0
        %621 = vmatpush1.bf16.xpose.msra.mxu0 0
        %622 = vmatprep.subr.bf16.mxu0 0
        %623 = vmatpush1.bf16.xpose.msra.mxu0 0
        %624 = vmatprep.subr.bf16.mxu0 0
        %625 = vmatpush1.bf16.xpose.msra.mxu0 0
        %626 = vmatprep.mubr.bf16.mxu0 0
        %627 = vmatmul.mubr.bf16.gmra.mrb[0].mxu0 %v589
        %v628 = vpop.f32.mrb[0].mxu0
        %v629 = vadd.f32 0.0, %v628
        %v630 = vpop.f32.mrb[0].mxu0
        %v631 = vpop.f32.mrb[0].mxu0
        %v632 = vadd.f32 0.0, %v631
        %v633 = vpop.f32.mrb[0].mxu0
        %634 = vdwg.mxu0
        %v635 = vmul.f32 %v629, 0.125
        %v636 = vmul.f32 %v632, 0.125
        %v637 = vadd.f32 %v635, %v506
        %v638 = vadd.f32 %v636, %v506
        %v639 = vsel %vm510, %v637, -inf
        %640 = vmax.xlane.f32.xlu0 %v639
        %v641 = vpop.xlane.xlu0 %640
        %v642 = vsel %vm510, %v638, -inf
        %643 = vmax.xlane.f32.xlu0 %v642
        %v644 = vpop.xlane.xlu0 %643
        %v645 = vsub.f32 %v637, %v641
        %v646 = vsub.f32 %v638, %v644
        %v647 = vmul.f32 %v645, 1.442695
        %v648 = vpow.pop %v647
        %v649 = vmul.f32 %v646, 1.442695
        %v650 = vpow.pop %v649
        %v651 = vsel %vm510, %v648, 0.0
        %652 = vadd.xlane.f32.xlu0 %v651
        %v653 = vpop.xlane.xlu0 %652
        %v654 = vsel %vm510, %v650, 0.0
        %655 = vadd.xlane.f32.xlu0 %v654
        %v656 = vpop.xlane.xlu0 %655
        %v657 = vrcp.pop %v653
        %v658 = vrcp.pop %v656
        %v659 = vmul.f32 %v648, %v657
        %v660 = vmul.f32 %v650, %v658
        %v661 = vpack.c.bf16 %v660, %v659
        %662 = vrot.lane.b32.xlu0 %v538, 64
        %v663 = vpop.permute.xlu0 %662
        %v666 = vsel %vm510, %v661, 0
        %668 = vmatprep.subr.bf16.mxu0 0
        %669 = vmatpush1.bf16.msra.mxu0 %v663
        %670 = vmatprep.subr.bf16.mxu0 0
        %671 = vmatpush1.bf16.msra.mxu0 0
        %672 = vmatprep.subr.bf16.mxu0 0
        %673 = vmatpush1.bf16.msra.mxu0 0
        %674 = vmatprep.subr.bf16.mxu0 0
        %675 = vmatpush1.bf16.msra.mxu0 0
        %676 = vmatprep.subr.bf16.mxu0 0
        %677 = vmatpush1.bf16.msra.mxu0 0
        %678 = vmatprep.subr.bf16.mxu0 0
        %679 = vmatpush1.bf16.msra.mxu0 0
        %680 = vmatprep.subr.bf16.mxu0 0
        %681 = vmatpush1.bf16.msra.mxu0 0
        %682 = vmatprep.subr.bf16.mxu0 0
        %683 = vmatpush1.bf16.msra.mxu0 0
        %684 = vmatprep.subr.bf16.mxu0 0
        %685 = vmatpush1.bf16.msra.mxu0 0
        %686 = vmatprep.subr.bf16.mxu0 0
        %687 = vmatpush1.bf16.msra.mxu0 0
        %688 = vmatprep.subr.bf16.mxu0 0
        %689 = vmatpush1.bf16.msra.mxu0 0
        %690 = vmatprep.subr.bf16.mxu0 0
        %691 = vmatpush1.bf16.msra.mxu0 0
        %692 = vmatprep.subr.bf16.mxu0 0
        %693 = vmatpush1.bf16.msra.mxu0 0
        %694 = vmatprep.subr.bf16.mxu0 0
        %695 = vmatpush1.bf16.msra.mxu0 0
        %696 = vmatprep.subr.bf16.mxu0 0
        %697 = vmatpush1.bf16.msra.mxu0 0
        %698 = vmatprep.subr.bf16.mxu0 0
        %699 = vmatpush1.bf16.msra.mxu0 0
        %700 = vmatprep.mubr.bf16.mxu0 0
        %701 = vmatmul.mubr.bf16.gmra.mrb[0].mxu0 %v666
        %v702 = vpop.f32.mrb[0].mxu0
        %v703 = vadd.f32 0.0, %v702
        %v704 = vpop.f32.mrb[0].mxu0
        %v705 = vpop.f32.mrb[0].mxu0
        %v706 = vadd.f32 0.0, %v705
        %v707 = vpop.f32.mrb[0].mxu0
        %708 = vdwg.mxu0
        %711 = vrot.lane.b32.xlu0 %v703, 64
        %v712 = vpop.permute.xlu0 %711
        %713 = vrot.lane.b32.xlu0 %v706, 64
        %v714 = vpop.permute.xlu0 %713
        %v717 = vsel %vm452, %v578, %v712
        %v718 = vsel %vm452, %v581, %v714
        %v719 = vpack.c.bf16 %v718, %v717
        %v721 = vunpack.c.l.b16 %v719
        %v722 = vunpack.c.h.b16 %v719
        %v723 = vpack.c.b16 %v721, %v721
        %v724 = vpack.c.b16 %v722, %v722
        %727 = vst [vmem:[%s432] sm:$0xf] %v723
        %728 = vst [vmem:[%s432 + $0x4] sm:$0xf] %v724
        %s729 = smul.u32 2, %s19
        %p730 = scmp.lt.s32.totalorder %s729, 3
        %s731 = scalar_select %p730, %s729, 3
        %p732 = scmp.lt.s32.totalorder %s20, 0
        %s733 = scalar_select %p732, %s20, 0
        %s734 = sadd.s32 %s733, %s731
        %s735 = smul.addr %s734, 4
        %s736 = scalar_lea.vmem %s4, %s735
        // Predicated region
        $region160: #{bertsum_forward.14} parent=146 // pred_check
          %p737 = pneg %p161
        $region161: #{bertsum_forward.14} parent=146 // pred_check_branch
          %739 = sbr.rel (%p737) target = $region163
        $region162: #{bertsum_forward.14} parent=146 // pred_region
          %s740 = smul.u32 2, %s19
        $region163: #{bertsum_forward.14} parent=146 // pred_fallthru
          _
      $region147: #{bertsum_forward.14} parent=5 // pred_fallthru
        _
      %p741 = scmp.le.s32.totalorder 2, %s10
      // Predicated region
      $region164: #{bertsum_forward.14} parent=5 // pred_check
        %p742 = pneg %p741
      $region165: #{bertsum_forward.14} parent=5 // pred_check_branch
        %744 = sbr.rel (%p742) target = $region167
      $region166: #{bertsum_forward.14} parent=5 // pred_region
        %s745 = ssub.s32 %s10, 2
        // Predicated region
        $region168: #{bertsum_forward.14} parent=166 // pred_check
          %p746 = pneg %p167
        $region169: #{bertsum_forward.14} parent=166 // pred_check_branch
          %748 = sbr.rel (%p746) target = $region171
        $region170: #{bertsum_forward.14} parent=166 // pred_region
          %s749 = smul.u32 2, %s21
          %p750 = scmp.lt.s32.totalorder %s749, 3
          %s751 = scalar_select %p750, %s749, 3
          %p752 = scmp.lt.s32.totalorder %s22, 0
          %s753 = scalar_select %p752, %s22, 0
          %s754 = sadd.s32 %s753, %s751
          %s755 = smul.addr %s754, 4
          %s756 = scalar_lea.vmem %s4, %s755
        $region171: #{bertsum_forward.14} parent=166 // pred_fallthru
          _
      $region167: #{bertsum_forward.14} parent=5 // pred_fallthru
        _
    $region6: #{bertsum_forward.14} parent=1 // loop_footer
      %s14 = sadd.s32 1, %s10
    $region7: #{bertsum_forward.14} parent=1 // loop_footer_branch
      %9 = sbr.rel target = $region3
    $region8: #{bertsum_forward.14} parent=1 // loop_exit
      _

// kernel: bertsum_forward.13
$region0: #{bertsum_forward.13}
  #allocation0 [shape = 'u32[]', space=smem, size = 0x4, offset = 0x4, fixed_abs, tag = 'smem constant byte address 0x4 - core index']
  #allocation1 [shape = 'u32[144,128]{1,0:T(1,128)}', space=vmem, size = 0x12000, scoped, tag = 'internal scratch']
  %s0 = inlined_call_operand.vmem [shape: bf16[32,128], index: 0, kind: input, shape index: {}]
  %s1 = inlined_call_operand.vmem [shape: bf16[128,384], index: 1, kind: input, shape index: {}]
  %s2 = inlined_call_operand.vmem [shape: f32[1,384], index: 2, kind: input, shape index: {}]
  %s3 = inlined_call_operand.vmem [shape: bf16[32,384], index: 3, kind: output, shape index: {}]
  %s4 = sld [smem:[#allocation0]]
  $region45: #{bertsum_forward.13} parent=0
    _
  %s6 = ssub.s32 1, %s4
  %s7 = scalar_select 0, %s6, %s4
  loop: start=0, step=1, limit=4
  $region2: #{bertsum_forward.13} parent=0 // loop_pre_header
    _
  $region3: #{bertsum_forward.13} parent=0 // loop_header
    %s9 = sphi 0, %s13
    %p10 = scmp.ge.s32.totalorder %s9, 4
    %s19 = sphi 0, %s21
    %s22 = sphi 0, %s19
    %s23 = sphi 0, %s22
    %s39 = sphi 0, %s23
    %s43 = sphi 0, %s43
    %s45 = sphi 0, %s43
    %s46 = sphi 0, %s45
    %s60 = sphi 0, %s46
    %s64 = sphi 0, %s64
    %s66 = sphi 0, %s64
    %s67 = sphi 0, %s66
    %s81 = sphi 0, %s67
    %s87 = sphi 0, %s89
    %s90 = sphi 0, %s87
    %s91 = sphi 0, %s90
    %s107 = sphi 0, %s91
  $region4: #{bertsum_forward.13} parent=0 // loop_header_branch
    %12 = sbr.rel (%p10) target = $region8
  $region5: #{bertsum_forward.13} parent=0 // loop_body
    %s14 = ssub.s32 %s9, 1
    %s15 = ssub.s32 %s9, 2
    %s16 = sadd.s32 %s9, 1
    %s17 = ssub.s32 %s9, %s16
    %p18 = scmp.eq.s32.totalorder %s17, 0
    %s20 = sadd.s32 %s19, 1
    %s21 = scalar_select %p18, %s19, %s20
    %p24 = pneg %p18
    %p25 = scmp.eq.s32.totalorder %s9, 1
    %p26 = por %p24, %p25
    %p27 = scmp.ne.s32.totalorder %s19, %s22
    %p28 = scmp.eq.s32.totalorder %s9, 0
    %p29 = por %p27, %p28
    %p30 = scmp.ne.s32.totalorder %s19, %s22
    %p31 = scmp.eq.s32.totalorder %s14, 1
    %p32 = por %p30, %p31
    %p33 = scmp.ne.s32.totalorder %s22, %s23
    %p34 = scmp.eq.s32.totalorder %s14, 0
    %p35 = por %p33, %p34
    %p36 = scmp.ne.s32.totalorder %s22, %s23
    %p37 = scmp.eq.s32.totalorder %s15, 1
    %p38 = por %p36, %p37
    %p40 = scmp.ne.s32.totalorder %s23, %s39
    %p41 = scmp.eq.s32.totalorder %s15, 0
    %p42 = por %p40, %p41
    %s44 = sadd.s32 %s43, 1
    %p47 = scmp.eq.s32.totalorder %s9, 1
    %p48 = scmp.ne.s32.totalorder %s43, %s45
    %p49 = scmp.eq.s32.totalorder %s9, 0
    %p50 = por %p48, %p49
    %p51 = scmp.ne.s32.totalorder %s43, %s45
    %p52 = scmp.eq.s32.totalorder %s14, 1
    %p53 = por %p51, %p52
    %p54 = scmp.ne.s32.totalorder %s45, %s46
    %p55 = scmp.eq.s32.totalorder %s14, 0
    %p56 = por %p54, %p55
    %p57 = scmp.ne.s32.totalorder %s45, %s46
    %p58 = scmp.eq.s32.totalorder %s15, 1
    %p59 = por %p57, %p58
    %p61 = scmp.ne.s32.totalorder %s46, %s60
    %p62 = scmp.eq.s32.totalorder %s15, 0
    %p63 = por %p61, %p62
    %s65 = sadd.s32 %s64, 1
    %p68 = scmp.eq.s32.totalorder %s9, 1
    %p69 = scmp.ne.s32.totalorder %s64, %s66
    %p70 = scmp.eq.s32.totalorder %s9, 0
    %p71 = por %p69, %p70
    %p72 = scmp.ne.s32.totalorder %s64, %s66
    %p73 = scmp.eq.s32.totalorder %s14, 1
    %p74 = por %p72, %p73
    %p75 = scmp.ne.s32.totalorder %s66, %s67
    %p76 = scmp.eq.s32.totalorder %s14, 0
    %p77 = por %p75, %p76
    %p78 = scmp.ne.s32.totalorder %s66, %s67
    %p79 = scmp.eq.s32.totalorder %s15, 1
    %p80 = por %p78, %p79
    %p82 = scmp.ne.s32.totalorder %s67, %s81
    %p83 = scmp.eq.s32.totalorder %s15, 0
    %p84 = por %p82, %p83
    %s85 = ssub.s32 %s9, %s16
    %p86 = scmp.eq.s32.totalorder %s85, 0
    %s88 = sadd.s32 %s87, 1
    %s89 = scalar_select %p86, %s87, %s88
    %p92 = pneg %p86
    %p93 = scmp.eq.s32.totalorder %s9, 1
    %p94 = por %p92, %p93
    %p95 = scmp.ne.s32.totalorder %s87, %s90
    %p96 = scmp.eq.s32.totalorder %s9, 0
    %p97 = por %p95, %p96
    %p98 = scmp.ne.s32.totalorder %s87, %s90
    %p99 = scmp.eq.s32.totalorder %s14, 1
    %p100 = por %p98, %p99
    %p101 = scmp.ne.s32.totalorder %s90, %s91
    %p102 = scmp.eq.s32.totalorder %s14, 0
    %p103 = por %p101, %p102
    %p104 = scmp.ne.s32.totalorder %s90, %s91
    %p105 = scmp.eq.s32.totalorder %s15, 1
    %p106 = por %p104, %p105
    %p108 = scmp.ne.s32.totalorder %s91, %s107
    %p109 = scmp.eq.s32.totalorder %s15, 0
    %p110 = por %p108, %p109
    %p111 = scmp.le.s32.totalorder 1, %s9
    %p112 = scmp.lt.s32.totalorder %s9, 3
    %p113 = pnand %p111, %p112
    %p114 = pneg %p113
    // Predicated region
    $region9: #{bertsum_forward.13} parent=5 // pred_check
      _
    $region10: #{bertsum_forward.13} parent=5 // pred_check_branch
      %116 = sbr.rel (%p113) target = $region12
    $region11: #{bertsum_forward.13} parent=5 // pred_region
      %s117 = ssub.s32 %s9, 1
      // Predicated region
      $region13: #{bertsum_forward.13} parent=11 // pred_check
        %p118 = pneg %p56
      $region14: #{bertsum_forward.13} parent=11 // pred_check_branch
        %120 = sbr.rel (%p118) target = $region16
      $region15: #{bertsum_forward.13} parent=11 // pred_region
        _
      $region16: #{bertsum_forward.13} parent=11 // pred_fallthru
        _
      // Predicated region
      $region17: #{bertsum_forward.13} parent=11 // pred_check
        %p121 = pneg %p77
      $region18: #{bertsum_forward.13} parent=11 // pred_check_branch
        %123 = sbr.rel (%p121) target = $region20
      $region19: #{bertsum_forward.13} parent=11 // pred_region
        _
      $region20: #{bertsum_forward.13} parent=11 // pred_fallthru
        _
    $region12: #{bertsum_forward.13} parent=5 // pred_fallthru
      _
    %p124 = scmp.lt.s32.totalorder %s9, 2
    // Predicated region
    $region21: #{bertsum_forward.13} parent=5 // pred_check
      %p125 = pneg %p124
    $region22: #{bertsum_forward.13} parent=5 // pred_check_branch
      %127 = sbr.rel (%p125) target = $region24
    $region23: #{bertsum_forward.13} parent=5 // pred_region
      // Predicated region
      $region25: #{bertsum_forward.13} parent=23 // pred_check
        %p128 = pneg %p29
      $region26: #{bertsum_forward.13} parent=23 // pred_check_branch
        %130 = sbr.rel (%p128) target = $region28
      $region27: #{bertsum_forward.13} parent=23 // pred_region
        %s131 = smul.u32 2, %s9
        %p132 = scmp.lt.s32.totalorder %s131, 3
        %s133 = scalar_select %p132, %s131, 3
        %s134 = smul.addr %s133, 4
        %s135 = scalar_lea.vmem %s0, %s134
        %s136 = smul.u32 2, %s9
      $region28: #{bertsum_forward.13} parent=23 // pred_fallthru
        _
    $region24: #{bertsum_forward.13} parent=5 // pred_fallthru
      _
    %p137 = scmp.le.s32.totalorder 1, %s9
    %p138 = scmp.lt.s32.totalorder %s9, 3
    %p139 = pnand %p137, %p138
    %p140 = pneg %p139
    // Predicated region
    $region29: #{bertsum_forward.13} parent=5 // pred_check
      _
    $region30: #{bertsum_forward.13} parent=5 // pred_check_branch
      %142 = sbr.rel (%p139) target = $region32
    $region31: #{bertsum_forward.13} parent=5 // pred_region
      %s143 = ssub.s32 %s9, 1
      %s144 = smul.u32 2, %s14
      %p145 = scmp.lt.s32.totalorder %s144, 3
      %s146 = scalar_select %p145, %s144, 3
      %s147 = smul.addr %s146, 4
      %s148 = scalar_lea.vmem %s0, %s147
      %p149 = pneg %p35
      %p150 = pneg %p32
      %p151 = pneg %p56
      %p152 = pneg %p53
      %p153 = pneg %p77
      %p154 = pneg %p74
      %p155 = pneg %p103
      %p156 = pneg %p100
      %s157 = smul.u32 2, %s14
      %p158 = scmp.lt.s32.totalorder %s157, 3
      %s159 = scalar_select %p158, %s157, 3
      %s160 = smul.addr %s159, 3
      %s161 = smul.addr %s160, 4
      %s162 = scalar_lea.vmem %s3, %s161
      %s163 = smul.u32 2, %s14
      %p164 = scmp.lt.s32.totalorder %s163, 3
      %s165 = scalar_select %p164, %s163, 3
      %s166 = smul.addr %s165, 4
      %s167 = scalar_lea.vmem %s0, %s166
      %s168 = smul.u32 2, %s14
      %s169 = smul.u32 2, %s14
      %p170 = scmp.lt.s32.totalorder %s169, 3
      %s171 = scalar_select %p170, %s169, 3
      %s172 = smul.addr %s171, 3
      %s173 = smul.addr %s172, 4
      %s174 = scalar_lea.vmem %s3, %s173
      %s175 = smul.u32 2, %s14
      %v177 = vld [vmem:[%s167] sm:$0xf]
      %v178 = vld [vmem:[%s167 + $0x4] sm:$0xf]
      %v179 = vld [vmem:[%s1] sm:$0xff]
      %v180 = vld [vmem:[%s1 + $0x8] sm:$0xf]
      %v181 = vld [vmem:[%s1 + $0xc] sm:$0xff]
      %v182 = vld [vmem:[%s1 + $0x14] sm:$0xf]
      %v183 = vld [vmem:[%s1 + $0x18] sm:$0xff]
      %v184 = vld [vmem:[%s1 + $0x20] sm:$0xf]
      %v185 = vld [vmem:[%s1 + $0x24] sm:$0xff]
      %v186 = vld [vmem:[%s1 + $0x2c] sm:$0xf]
      %v187 = vld [vmem:[%s1 + $0x30] sm:$0xff]
      %v188 = vld [vmem:[%s1 + $0x38] sm:$0xf]
      %v189 = vld [vmem:[%s1 + $0x3c] sm:$0xff]
      %v190 = vld [vmem:[%s1 + $0x44] sm:$0xf]
      %v191 = vld [vmem:[%s1 + $0x48] sm:$0xff]
      %v192 = vld [vmem:[%s1 + $0x50] sm:$0xf]
      %v193 = vld [vmem:[%s1 + $0x54] sm:$0xff]
      %v194 = vld [vmem:[%s1 + $0x5c] sm:$0xf]
      %v195 = vld [vmem:[%s1 + $0x60] sm:$0xff]
      %v196 = vld [vmem:[%s1 + $0x68] sm:$0xf]
      %v197 = vld [vmem:[%s1 + $0x6c] sm:$0xff]
      %v198 = vld [vmem:[%s1 + $0x74] sm:$0xf]
      %v199 = vld [vmem:[%s1 + $0x78] sm:$0xff]
      %v200 = vld [vmem:[%s1 + $0x80] sm:$0xf]
      %v201 = vld [vmem:[%s1 + $0x84] sm:$0xff]
      %v202 = vld [vmem:[%s1 + $0x8c] sm:$0xf]
      %v203 = vld [vmem:[%s1 + $0x90] sm:$0xff]
      %v204 = vld [vmem:[%s1 + $0x98] sm:$0xf]
      %v205 = vld [vmem:[%s1 + $0x9c] sm:$0xff]
      %v206 = vld [vmem:[%s1 + $0xa4] sm:$0xf]
      %v207 = vld [vmem:[%s1 + $0xa8] sm:$0xff]
      %v208 = vld [vmem:[%s1 + $0xb0] sm:$0xf]
      %v209 = vld [vmem:[%s1 + $0xb4] sm:$0xff]
      %v210 = vld [vmem:[%s1 + $0xbc] sm:$0xf]
      %v211 = vld [vmem:[%s2] sm:$0x7]
      %v213 = vlaneseq
      %v214 = vshrl.u32 %v213, 7
      %v215 = vsub.s32 0, %v214
      %v216 = vrot.slane %v211, %v215
      %v217 = vlaneseq
      %v218 = vshrl.u32 %v217, 7
      %v219 = vsub.s32 1, %v218
      %v220 = vrot.slane %v211, %v219
      %v221 = vlaneseq
      %v222 = vshrl.u32 %v221, 7
      %v223 = vsub.s32 2, %v222
      %v224 = vrot.slane %v211, %v223
      %v230 = vunpack.c.l.b16 %v177
      %v231 = vunpack.c.l.b16 %v178
      %v232 = vpack.c.b16 %v231, %v230
      %v266 = vunpack.c.l.b16 %v179
      %v267 = vunpack.c.h.b16 %v179
      %v268 = vunpack.c.l.b16 %v180
      %v269 = vunpack.c.l.b16 %v181
      %v270 = vunpack.c.h.b16 %v181
      %v271 = vunpack.c.l.b16 %v182
      %v272 = vunpack.c.l.b16 %v183
      %v273 = vunpack.c.h.b16 %v183
      %v274 = vunpack.c.l.b16 %v184
      %v275 = vunpack.c.l.b16 %v185
      %v276 = vunpack.c.h.b16 %v185
      %v277 = vunpack.c.l.b16 %v186
      %v278 = vunpack.c.l.b16 %v187
      %v279 = vunpack.c.h.b16 %v187
      %v280 = vunpack.c.l.b16 %v188
      %v281 = vunpack.c.l.b16 %v189
      %v282 = vunpack.c.h.b16 %v189
      %v283 = vunpack.c.l.b16 %v190
      %v284 = vunpack.c.l.b16 %v191
      %v285 = vunpack.c.h.b16 %v191
      %v286 = vunpack.c.l.b16 %v192
      %v287 = vunpack.c.l.b16 %v193
      %v288 = vunpack.c.h.b16 %v193
      %v289 = vunpack.c.l.b16 %v194
      %v290 = vunpack.c.l.b16 %v195
      %v291 = vunpack.c.h.b16 %v195
      %v292 = vunpack.c.l.b16 %v196
      %v293 = vunpack.c.l.b16 %v197
      %v294 = vunpack.c.h.b16 %v197
      %v295 = vunpack.c.l.b16 %v198
      %v296 = vunpack.c.l.b16 %v199
      %v297 = vunpack.c.h.b16 %v199
      %v298 = vunpack.c.l.b16 %v200
      %v299 = vunpack.c.l.b16 %v201
      %v300 = vunpack.c.h.b16 %v201
      %v301 = vunpack.c.l.b16 %v202
      %v302 = vunpack.c.l.b16 %v203
      %v303 = vunpack.c.h.b16 %v203
      %v304 = vunpack.c.l.b16 %v204
      %v305 = vunpack.c.l.b16 %v205
      %v306 = vunpack.c.h.b16 %v205
      %v307 = vunpack.c.l.b16 %v206
      %v308 = vunpack.c.l.b16 %v207
      %v309 = vunpack.c.h.b16 %v207
      %v310 = vunpack.c.l.b16 %v208
      %v311 = vunpack.c.l.b16 %v209
      %v312 = vunpack.c.h.b16 %v209
      %v313 = vunpack.c.l.b16 %v210
      %v314 = vpack.c.b16 %v269, %v266
      %v315 = vpack.c.b16 %v270, %v267
      %v316 = vpack.c.b16 %v271, %v268
      %v317 = vpack.c.b16 %v275, %v272
      %v318 = vpack.c.b16 %v276, %v273
      %v319 = vpack.c.b16 %v277, %v274
      %v320 = vpack.c.b16 %v281, %v278
      %v321 = vpack.c.b16 %v282, %v279
      %v322 = vpack.c.b16 %v283, %v280
      %v323 = vpack.c.b16 %v287, %v284
      %v324 = vpack.c.b16 %v288, %v285
      %v325 = vpack.c.b16 %v289, %v286
      %v326 = vpack.c.b16 %v293, %v290
      %v327 = vpack.c.b16 %v294, %v291
      %v328 = vpack.c.b16 %v295, %v292
      %v329 = vpack.c.b16 %v299, %v296
      %v330 = vpack.c.b16 %v300, %v297
      %v331 = vpack.c.b16 %v301, %v298
      %v332 = vpack.c.b16 %v305, %v302
      %v333 = vpack.c.b16 %v306, %v303
      %v334 = vpack.c.b16 %v307, %v304
      %v335 = vpack.c.b16 %v311, %v308
      %v336 = vpack.c.b16 %v312, %v309
      %v337 = vpack.c.b16 %v313, %v310
      %362 = vmatprep.subr.bf16.mxu0 %v315
      %363 = vmatpush1.bf16.msra.mxu0 %v314
      %364 = vmatprep.subr.bf16.mxu0 %v318
      %365 = vmatpush1.bf16.msra.mxu0 %v317
      %366 = vmatprep.subr.bf16.mxu0 %v321
      %367 = vmatpush1.bf16.msra.mxu0 %v320
      %368 = vmatprep.subr.bf16.mxu0 %v324
      %369 = vmatpush1.bf16.msra.mxu0 %v323
      %370 = vmatprep.subr.bf16.mxu0 %v327
      %371 = vmatpush1.bf16.msra.mxu0 %v326
      %372 = vmatprep.subr.bf16.mxu0 %v330
      %373 = vmatpush1.bf16.msra.mxu0 %v329
      %374 = vmatprep.subr.bf16.mxu0 %v333
      %375 = vmatpush1.bf16.msra.mxu0 %v332
      %376 = vmatprep.subr.bf16.mxu0 %v336
      %377 = vmatpush1.bf16.msra.mxu0 %v335
      %378 = vmatprep.subr.bf16.mxu0 0
      %379 = vmatpush1.bf16.msra.mxu0 0
      %380 = vmatprep.subr.bf16.mxu0 0
      %381 = vmatpush1.bf16.msra.mxu0 0
      %382 = vmatprep.subr.bf16.mxu0 0
      %383 = vmatpush1.bf16.msra.mxu0 0
      %384 = vmatprep.subr.bf16.mxu0 0
      %385 = vmatpush1.bf16.msra.mxu0 0
      %386 = vmatprep.subr.bf16.mxu0 0
      %387 = vmatpush1.bf16.msra.mxu0 0
      %388 = vmatprep.subr.bf16.mxu0 0
      %389 = vmatpush1.bf16.msra.mxu0 0
      %390 = vmatprep.subr.bf16.mxu0 0
      %391 = vmatpush1.bf16.msra.mxu0 0
      %392 = vmatprep.subr.bf16.mxu0 0
      %393 = vmatpush1.bf16.msra.mxu0 0
      %394 = vmatprep.mubr.bf16.mxu0 0
      %395 = vmatmul.mubr.bf16.gmra.mrb[0].mxu0 %v232
      %v396 = vpop.f32.mrb[0].mxu0
      %v397 = vadd.f32 %v216, %v396
      %v398 = vpop.f32.mrb[0].mxu0
      %v399 = vadd.f32 %v220, %v398
      %v400 = vpop.f32.mrb[0].mxu0
      %v401 = vadd.f32 %v216, %v400
      %v402 = vpop.f32.mrb[0].mxu0
      %v403 = vadd.f32 %v220, %v402
      %404 = vdwg.mxu0
      %405 = vmatprep.subr.bf16.mxu0 0
      %406 = vmatpush1.bf16.msra.mxu0 %v316
      %407 = vmatprep.subr.bf16.mxu0 0
      %408 = vmatpush1.bf16.msra.mxu0 %v319
      %409 = vmatprep.subr.bf16.mxu0 0
      %410 = vmatpush1.bf16.msra.mxu0 %v322
      %411 = vmatprep.subr.bf16.mxu0 0
      %412 = vmatpush1.bf16.msra.mxu0 %v325
      %413 = vmatprep.subr.bf16.mxu0 0
      %414 = vmatpush1.bf16.msra.mxu0 %v328
      %415 = vmatprep.subr.bf16.mxu0 0
      %416 = vmatpush1.bf16.msra.mxu0 %v331
      %417 = vmatprep.subr.bf16.mxu0 0
      %418 = vmatpush1.bf16.msra.mxu0 %v334
      %419 = vmatprep.subr.bf16.mxu0 0
      %420 = vmatpush1.bf16.msra.mxu0 %v337
      %421 = vmatprep.subr.bf16.mxu0 0
      %422 = vmatpush1.bf16.msra.mxu0 0
      %423 = vmatprep.subr.bf16.mxu0 0
      %424 = vmatpush1.bf16.msra.mxu0 0
      %425 = vmatprep.subr.bf16.mxu0 0
      %426 = vmatpush1.bf16.msra.mxu0 0
      %427 = vmatprep.subr.bf16.mxu0 0
      %428 = vmatpush1.bf16.msra.mxu0 0
      %429 = vmatprep.subr.bf16.mxu0 0
      %430 = vmatpush1.bf16.msra.mxu0 0
      %431 = vmatprep.subr.bf16.mxu0 0
      %432 = vmatpush1.bf16.msra.mxu0 0
      %433 = vmatprep.subr.bf16.mxu0 0
      %434 = vmatpush1.bf16.msra.mxu0 0
      %435 = vmatprep.subr.bf16.mxu0 0
      %436 = vmatpush1.bf16.msra.mxu0 0
      %437 = vmatprep.mubr.bf16.mxu0 0
      %438 = vmatmul.mubr.bf16.gmra.mrb[0].mxu0 %v232
      %v439 = vpop.f32.mrb[0].mxu0
      %v440 = vadd.f32 %v224, %v439
      %v441 = vpop.f32.mrb[0].mxu0
      %v442 = vpop.f32.mrb[0].mxu0
      %v443 = vadd.f32 %v224, %v442
      %v444 = vpop.f32.mrb[0].mxu0
      %445 = vdwg.mxu0
      %v446 = vpack.c.bf16 %v401, %v397
      %v447 = vpack.c.bf16 %v403, %v399
      %v448 = vpack.c.bf16 %v443, %v440
      %v452 = vunpack.c.l.b16 %v446
      %v453 = vunpack.c.l.b16 %v447
      %v454 = vunpack.c.l.b16 %v448
      %v455 = vunpack.c.h.b16 %v446
      %v456 = vunpack.c.h.b16 %v447
      %v457 = vunpack.c.h.b16 %v448
      %v458 = vpack.c.b16 %v453, %v452
      %v459 = vpack.c.b16 %v454, %v454
      %v460 = vpack.c.b16 %v456, %v455
      %v461 = vpack.c.b16 %v457, %v457
      %466 = vst [vmem:[%s174] sm:$0xff] %v458
      %467 = vst [vmem:[%s174 + $0x8] sm:$0xf] %v459
      %468 = vst [vmem:[%s174 + $0xc] sm:$0xff] %v460
      %469 = vst [vmem:[%s174 + $0x14] sm:$0xf] %v461
      %s470 = smul.u32 2, %s14
      %p471 = scmp.lt.s32.totalorder %s470, 3
      %s472 = scalar_select %p471, %s470, 3
      %s473 = smul.addr %s472, 3
      %s474 = smul.addr %s473, 4
      %s475 = scalar_lea.vmem %s3, %s474
      // Predicated region
      $region33: #{bertsum_forward.13} parent=31 // pred_check
        %p476 = pneg %p100
      $region34: #{bertsum_forward.13} parent=31 // pred_check_branch
        %478 = sbr.rel (%p476) target = $region36
      $region35: #{bertsum_forward.13} parent=31 // pred_region
        %s479 = smul.u32 2, %s14
      $region36: #{bertsum_forward.13} parent=31 // pred_fallthru
        _
    $region32: #{bertsum_forward.13} parent=5 // pred_fallthru
      _
    %p480 = scmp.le.s32.totalorder 2, %s9
    // Predicated region
    $region37: #{bertsum_forward.13} parent=5 // pred_check
      %p481 = pneg %p480
    $region38: #{bertsum_forward.13} parent=5 // pred_check_branch
      %483 = sbr.rel (%p481) target = $region40
    $region39: #{bertsum_forward.13} parent=5 // pred_region
      %s484 = ssub.s32 %s9, 2
      // Predicated region
      $region41: #{bertsum_forward.13} parent=39 // pred_check
        %p485 = pneg %p106
      $region42: #{bertsum_forward.13} parent=39 // pred_check_branch
        %487 = sbr.rel (%p485) target = $region44
      $region43: #{bertsum_forward.13} parent=39 // pred_region
        %s488 = smul.u32 2, %s15
        %p489 = scmp.lt.s32.totalorder %s488, 3
        %s490 = scalar_select %p489, %s488, 3
        %s491 = smul.addr %s490, 3
        %s492 = smul.addr %s491, 4
        %s493 = scalar_lea.vmem %s3, %s492
      $region44: #{bertsum_forward.13} parent=39 // pred_fallthru
        _
    $region40: #{bertsum_forward.13} parent=5 // pred_fallthru
      _
  $region6: #{bertsum_forward.13} parent=0 // loop_footer
    %s13 = sadd.s32 1, %s9
  $region7: #{bertsum_forward.13} parent=0 // loop_footer_branch
    %8 = sbr.rel target = $region3
  $region8: #{bertsum_forward.13} parent=0 // loop_exit
    _

// kernel: bertsum_forward.15
$region0: #{bertsum_forward.15}
  #allocation0 [shape = 'u32[]', space=smem, size = 0x4, offset = 0x4, fixed_abs, tag = 'smem constant byte address 0x4 - core index']
  #allocation1 [shape = 'u32[144,128]{1,0:T(1,128)}', space=vmem, size = 0x12000, scoped, tag = 'internal scratch']
  %s0 = inlined_call_operand.vmem [shape: bf16[32,128], index: 0, kind: input, shape index: {}]
  %s1 = inlined_call_operand.vmem [shape: bf16[128,128], index: 1, kind: input, shape index: {}]
  %s2 = inlined_call_operand.vmem [shape: f32[1,128], index: 2, kind: input, shape index: {}]
  %s3 = inlined_call_operand.vmem [shape: bf16[32,128], index: 3, kind: input, shape index: {}]
  %s4 = inlined_call_operand.vmem [shape: f32[1,128], index: 4, kind: input, shape index: {}]
  %s5 = inlined_call_operand.vmem [shape: f32[1,128], index: 5, kind: input, shape index: {}]
  %s6 = inlined_call_operand.vmem [shape: bf16[32,128], index: 6, kind: output, shape index: {}]
  %s7 = sld [smem:[#allocation0]]
  $region57: #{bertsum_forward.15} parent=0
    _
  %s9 = ssub.s32 1, %s7
  %s10 = scalar_select 0, %s9, %s7
  loop: start=0, step=1, limit=4
  $region2: #{bertsum_forward.15} parent=0 // loop_pre_header
    _
  $region3: #{bertsum_forward.15} parent=0 // loop_header
    %s12 = sphi 0, %s16
    %p13 = scmp.ge.s32.totalorder %s12, 4
    %s22 = sphi 0, %s24
    %s25 = sphi 0, %s22
    %s26 = sphi 0, %s25
    %s42 = sphi 0, %s26
    %s46 = sphi 0, %s46
    %s48 = sphi 0, %s46
    %s49 = sphi 0, %s48
    %s63 = sphi 0, %s49
    %s67 = sphi 0, %s67
    %s69 = sphi 0, %s67
    %s70 = sphi 0, %s69
    %s84 = sphi 0, %s70
    %s90 = sphi 0, %s92
    %s93 = sphi 0, %s90
    %s94 = sphi 0, %s93
    %s110 = sphi 0, %s94
    %s114 = sphi 0, %s114
    %s116 = sphi 0, %s114
    %s117 = sphi 0, %s116
    %s131 = sphi 0, %s117
    %s135 = sphi 0, %s135
    %s137 = sphi 0, %s135
    %s138 = sphi 0, %s137
    %s152 = sphi 0, %s138
    %s158 = sphi 0, %s160
    %s161 = sphi 0, %s158
    %s162 = sphi 0, %s161
    %s178 = sphi 0, %s162
  $region4: #{bertsum_forward.15} parent=0 // loop_header_branch
    %15 = sbr.rel (%p13) target = $region8
  $region5: #{bertsum_forward.15} parent=0 // loop_body
    %s17 = ssub.s32 %s12, 1
    %s18 = ssub.s32 %s12, 2
    %s19 = sadd.s32 %s12, 1
    %s20 = ssub.s32 %s12, %s19
    %p21 = scmp.eq.s32.totalorder %s20, 0
    %s23 = sadd.s32 %s22, 1
    %s24 = scalar_select %p21, %s22, %s23
    %p27 = pneg %p21
    %p28 = scmp.eq.s32.totalorder %s12, 1
    %p29 = por %p27, %p28
    %p30 = scmp.ne.s32.totalorder %s22, %s25
    %p31 = scmp.eq.s32.totalorder %s12, 0
    %p32 = por %p30, %p31
    %p33 = scmp.ne.s32.totalorder %s22, %s25
    %p34 = scmp.eq.s32.totalorder %s17, 1
    %p35 = por %p33, %p34
    %p36 = scmp.ne.s32.totalorder %s25, %s26
    %p37 = scmp.eq.s32.totalorder %s17, 0
    %p38 = por %p36, %p37
    %p39 = scmp.ne.s32.totalorder %s25, %s26
    %p40 = scmp.eq.s32.totalorder %s18, 1
    %p41 = por %p39, %p40
    %p43 = scmp.ne.s32.totalorder %s26, %s42
    %p44 = scmp.eq.s32.totalorder %s18, 0
    %p45 = por %p43, %p44
    %s47 = sadd.s32 %s46, 1
    %p50 = scmp.eq.s32.totalorder %s12, 1
    %p51 = scmp.ne.s32.totalorder %s46, %s48
    %p52 = scmp.eq.s32.totalorder %s12, 0
    %p53 = por %p51, %p52
    %p54 = scmp.ne.s32.totalorder %s46, %s48
    %p55 = scmp.eq.s32.totalorder %s17, 1
    %p56 = por %p54, %p55
    %p57 = scmp.ne.s32.totalorder %s48, %s49
    %p58 = scmp.eq.s32.totalorder %s17, 0
    %p59 = por %p57, %p58
    %p60 = scmp.ne.s32.totalorder %s48, %s49
    %p61 = scmp.eq.s32.totalorder %s18, 1
    %p62 = por %p60, %p61
    %p64 = scmp.ne.s32.totalorder %s49, %s63
    %p65 = scmp.eq.s32.totalorder %s18, 0
    %p66 = por %p64, %p65
    %s68 = sadd.s32 %s67, 1
    %p71 = scmp.eq.s32.totalorder %s12, 1
    %p72 = scmp.ne.s32.totalorder %s67, %s69
    %p73 = scmp.eq.s32.totalorder %s12, 0
    %p74 = por %p72, %p73
    %p75 = scmp.ne.s32.totalorder %s67, %s69
    %p76 = scmp.eq.s32.totalorder %s17, 1
    %p77 = por %p75, %p76
    %p78 = scmp.ne.s32.totalorder %s69, %s70
    %p79 = scmp.eq.s32.totalorder %s17, 0
    %p80 = por %p78, %p79
    %p81 = scmp.ne.s32.totalorder %s69, %s70
    %p82 = scmp.eq.s32.totalorder %s18, 1
    %p83 = por %p81, %p82
    %p85 = scmp.ne.s32.totalorder %s70, %s84
    %p86 = scmp.eq.s32.totalorder %s18, 0
    %p87 = por %p85, %p86
    %s88 = ssub.s32 %s12, %s19
    %p89 = scmp.eq.s32.totalorder %s88, 0
    %s91 = sadd.s32 %s90, 1
    %s92 = scalar_select %p89, %s90, %s91
    %p95 = pneg %p89
    %p96 = scmp.eq.s32.totalorder %s12, 1
    %p97 = por %p95, %p96
    %p98 = scmp.ne.s32.totalorder %s90, %s93
    %p99 = scmp.eq.s32.totalorder %s12, 0
    %p100 = por %p98, %p99
    %p101 = scmp.ne.s32.totalorder %s90, %s93
    %p102 = scmp.eq.s32.totalorder %s17, 1
    %p103 = por %p101, %p102
    %p104 = scmp.ne.s32.totalorder %s93, %s94
    %p105 = scmp.eq.s32.totalorder %s17, 0
    %p106 = por %p104, %p105
    %p107 = scmp.ne.s32.totalorder %s93, %s94
    %p108 = scmp.eq.s32.totalorder %s18, 1
    %p109 = por %p107, %p108
    %p111 = scmp.ne.s32.totalorder %s94, %s110
    %p112 = scmp.eq.s32.totalorder %s18, 0
    %p113 = por %p111, %p112
    %s115 = sadd.s32 %s114, 1
    %p118 = scmp.eq.s32.totalorder %s12, 1
    %p119 = scmp.ne.s32.totalorder %s114, %s116
    %p120 = scmp.eq.s32.totalorder %s12, 0
    %p121 = por %p119, %p120
    %p122 = scmp.ne.s32.totalorder %s114, %s116
    %p123 = scmp.eq.s32.totalorder %s17, 1
    %p124 = por %p122, %p123
    %p125 = scmp.ne.s32.totalorder %s116, %s117
    %p126 = scmp.eq.s32.totalorder %s17, 0
    %p127 = por %p125, %p126
    %p128 = scmp.ne.s32.totalorder %s116, %s117
    %p129 = scmp.eq.s32.totalorder %s18, 1
    %p130 = por %p128, %p129
    %p132 = scmp.ne.s32.totalorder %s117, %s131
    %p133 = scmp.eq.s32.totalorder %s18, 0
    %p134 = por %p132, %p133
    %s136 = sadd.s32 %s135, 1
    %p139 = scmp.eq.s32.totalorder %s12, 1
    %p140 = scmp.ne.s32.totalorder %s135, %s137
    %p141 = scmp.eq.s32.totalorder %s12, 0
    %p142 = por %p140, %p141
    %p143 = scmp.ne.s32.totalorder %s135, %s137
    %p144 = scmp.eq.s32.totalorder %s17, 1
    %p145 = por %p143, %p144
    %p146 = scmp.ne.s32.totalorder %s137, %s138
    %p147 = scmp.eq.s32.totalorder %s17, 0
    %p148 = por %p146, %p147
    %p149 = scmp.ne.s32.totalorder %s137, %s138
    %p150 = scmp.eq.s32.totalorder %s18, 1
    %p151 = por %p149, %p150
    %p153 = scmp.ne.s32.totalorder %s138, %s152
    %p154 = scmp.eq.s32.totalorder %s18, 0
    %p155 = por %p153, %p154
    %s156 = ssub.s32 %s12, %s19
    %p157 = scmp.eq.s32.totalorder %s156, 0
    %s159 = sadd.s32 %s158, 1
    %s160 = scalar_select %p157, %s158, %s159
    %p163 = pneg %p157
    %p164 = scmp.eq.s32.totalorder %s12, 1
    %p165 = por %p163, %p164
    %p166 = scmp.ne.s32.totalorder %s158, %s161
    %p167 = scmp.eq.s32.totalorder %s12, 0
    %p168 = por %p166, %p167
    %p169 = scmp.ne.s32.totalorder %s158, %s161
    %p170 = scmp.eq.s32.totalorder %s17, 1
    %p171 = por %p169, %p170
    %p172 = scmp.ne.s32.totalorder %s161, %s162
    %p173 = scmp.eq.s32.totalorder %s17, 0
    %p174 = por %p172, %p173
    %p175 = scmp.ne.s32.totalorder %s161, %s162
    %p176 = scmp.eq.s32.totalorder %s18, 1
    %p177 = por %p175, %p176
    %p179 = scmp.ne.s32.totalorder %s162, %s178
    %p180 = scmp.eq.s32.totalorder %s18, 0
    %p181 = por %p179, %p180
    %p182 = scmp.le.s32.totalorder 1, %s12
    %p183 = scmp.lt.s32.totalorder %s12, 3
    %p184 = pnand %p182, %p183
    %p185 = pneg %p184
    // Predicated region
    $region9: #{bertsum_forward.15} parent=5 // pred_check
      _
    $region10: #{bertsum_forward.15} parent=5 // pred_check_branch
      %187 = sbr.rel (%p184) target = $region12
    $region11: #{bertsum_forward.15} parent=5 // pred_region
      %s188 = ssub.s32 %s12, 1
      // Predicated region
      $region13: #{bertsum_forward.15} parent=11 // pred_check
        %p189 = pneg %p59
      $region14: #{bertsum_forward.15} parent=11 // pred_check_branch
        %191 = sbr.rel (%p189) target = $region16
      $region15: #{bertsum_forward.15} parent=11 // pred_region
        _
      $region16: #{bertsum_forward.15} parent=11 // pred_fallthru
        _
      // Predicated region
      $region17: #{bertsum_forward.15} parent=11 // pred_check
        %p192 = pneg %p80
      $region18: #{bertsum_forward.15} parent=11 // pred_check_branch
        %194 = sbr.rel (%p192) target = $region20
      $region19: #{bertsum_forward.15} parent=11 // pred_region
        _
      $region20: #{bertsum_forward.15} parent=11 // pred_fallthru
        _
      // Predicated region
      $region21: #{bertsum_forward.15} parent=11 // pred_check
        %p195 = pneg %p127
      $region22: #{bertsum_forward.15} parent=11 // pred_check_branch
        %197 = sbr.rel (%p195) target = $region24
      $region23: #{bertsum_forward.15} parent=11 // pred_region
        _
      $region24: #{bertsum_forward.15} parent=11 // pred_fallthru
        _
      // Predicated region
      $region25: #{bertsum_forward.15} parent=11 // pred_check
        %p198 = pneg %p148
      $region26: #{bertsum_forward.15} parent=11 // pred_check_branch
        %200 = sbr.rel (%p198) target = $region28
      $region27: #{bertsum_forward.15} parent=11 // pred_region
        _
      $region28: #{bertsum_forward.15} parent=11 // pred_fallthru
        _
    $region12: #{bertsum_forward.15} parent=5 // pred_fallthru
      _
    %p201 = scmp.lt.s32.totalorder %s12, 2
    // Predicated region
    $region29: #{bertsum_forward.15} parent=5 // pred_check
      %p202 = pneg %p201
    $region30: #{bertsum_forward.15} parent=5 // pred_check_branch
      %204 = sbr.rel (%p202) target = $region32
    $region31: #{bertsum_forward.15} parent=5 // pred_region
      // Predicated region
      $region33: #{bertsum_forward.15} parent=31 // pred_check
        %p205 = pneg %p32
      $region34: #{bertsum_forward.15} parent=31 // pred_check_branch
        %207 = sbr.rel (%p205) target = $region36
      $region35: #{bertsum_forward.15} parent=31 // pred_region
        %s208 = smul.u32 2, %s12
        %p209 = scmp.lt.s32.totalorder %s208, 3
        %s210 = scalar_select %p209, %s208, 3
        %s211 = smul.addr %s210, 4
        %s212 = scalar_lea.vmem %s0, %s211
        %s213 = smul.u32 2, %s12
      $region36: #{bertsum_forward.15} parent=31 // pred_fallthru
        _
      // Predicated region
      $region37: #{bertsum_forward.15} parent=31 // pred_check
        %p214 = pneg %p100
      $region38: #{bertsum_forward.15} parent=31 // pred_check_branch
        %216 = sbr.rel (%p214) target = $region40
      $region39: #{bertsum_forward.15} parent=31 // pred_region
        %s217 = smul.u32 2, %s12
        %p218 = scmp.lt.s32.totalorder %s217, 3
        %s219 = scalar_select %p218, %s217, 3
        %s220 = smul.addr %s219, 4
        %s221 = scalar_lea.vmem %s3, %s220
        %s222 = smul.u32 2, %s12
      $region40: #{bertsum_forward.15} parent=31 // pred_fallthru
        _
    $region32: #{bertsum_forward.15} parent=5 // pred_fallthru
      _
    %p223 = scmp.le.s32.totalorder 1, %s12
    %p224 = scmp.lt.s32.totalorder %s12, 3
    %p225 = pnand %p223, %p224
    %p226 = pneg %p225
    // Predicated region
    $region41: #{bertsum_forward.15} parent=5 // pred_check
      _
    $region42: #{bertsum_forward.15} parent=5 // pred_check_branch
      %228 = sbr.rel (%p225) target = $region44
    $region43: #{bertsum_forward.15} parent=5 // pred_region
      %s229 = ssub.s32 %s12, 1
      %s230 = smul.u32 2, %s17
      %p231 = scmp.lt.s32.totalorder %s230, 3
      %s232 = scalar_select %p231, %s230, 3
      %s233 = smul.addr %s232, 4
      %s234 = scalar_lea.vmem %s0, %s233
      %p235 = pneg %p38
      %p236 = pneg %p35
      %p237 = pneg %p59
      %p238 = pneg %p56
      %p239 = pneg %p80
      %p240 = pneg %p77
      %s241 = smul.u32 2, %s17
      %p242 = scmp.lt.s32.totalorder %s241, 3
      %s243 = scalar_select %p242, %s241, 3
      %s244 = smul.addr %s243, 4
      %s245 = scalar_lea.vmem %s3, %s244
      %p246 = pneg %p106
      %p247 = pneg %p103
      %p248 = pneg %p127
      %p249 = pneg %p124
      %p250 = pneg %p148
      %p251 = pneg %p145
      %p252 = pneg %p174
      %p253 = pneg %p171
      %s254 = smul.u32 2, %s17
      %p255 = scmp.lt.s32.totalorder %s254, 3
      %s256 = scalar_select %p255, %s254, 3
      %s257 = smul.addr %s256, 4
      %s258 = scalar_lea.vmem %s6, %s257
      %s259 = smul.u32 2, %s17
      %p260 = scmp.lt.s32.totalorder %s259, 3
      %s261 = scalar_select %p260, %s259, 3
      %s262 = smul.addr %s261, 4
      %s263 = scalar_lea.vmem %s0, %s262
      %s264 = smul.u32 2, %s17
      %s265 = smul.u32 2, %s17
      %p266 = scmp.lt.s32.totalorder %s265, 3
      %s267 = scalar_select %p266, %s265, 3
      %s268 = smul.addr %s267, 4
      %s269 = scalar_lea.vmem %s3, %s268
      %s270 = smul.u32 2, %s17
      %s271 = smul.u32 2, %s17
      %p272 = scmp.lt.s32.totalorder %s271, 3
      %s273 = scalar_select %p272, %s271, 3
      %s274 = smul.addr %s273, 4
      %s275 = scalar_lea.vmem %s6, %s274
      %s276 = smul.u32 2, %s17
      %v278 = vld [vmem:[%s263] sm:$0xf]
      %v279 = vld [vmem:[%s263 + $0x4] sm:$0xf]
      %v280 = vld [vmem:[%s1] sm:$0xf]
      %v281 = vld [vmem:[%s1 + $0x4] sm:$0xf]
      %v282 = vld [vmem:[%s1 + $0x8] sm:$0xf]
      %v283 = vld [vmem:[%s1 + $0xc] sm:$0xf]
      %v284 = vld [vmem:[%s1 + $0x10] sm:$0xf]
      %v285 = vld [vmem:[%s1 + $0x14] sm:$0xf]
      %v286 = vld [vmem:[%s1 + $0x18] sm:$0xf]
      %v287 = vld [vmem:[%s1 + $0x1c] sm:$0xf]
      %v288 = vld [vmem:[%s1 + $0x20] sm:$0xf]
      %v289 = vld [vmem:[%s1 + $0x24] sm:$0xf]
      %v290 = vld [vmem:[%s1 + $0x28] sm:$0xf]
      %v291 = vld [vmem:[%s1 + $0x2c] sm:$0xf]
      %v292 = vld [vmem:[%s1 + $0x30] sm:$0xf]
      %v293 = vld [vmem:[%s1 + $0x34] sm:$0xf]
      %v294 = vld [vmem:[%s1 + $0x38] sm:$0xf]
      %v295 = vld [vmem:[%s1 + $0x3c] sm:$0xf]
      %v296 = vld [vmem:[%s2] sm:$0x1]
      %v298 = vlaneseq
      %v299 = vshrl.u32 %v298, 7
      %v300 = vsub.s32 0, %v299
      %v301 = vrot.slane %v296, %v300
      %v305 = vunpack.c.l.b16 %v278
      %v306 = vunpack.c.l.b16 %v279
      %v307 = vpack.c.b16 %v306, %v305
      %v325 = vunpack.c.l.b16 %v280
      %v326 = vunpack.c.l.b16 %v281
      %v327 = vunpack.c.l.b16 %v282
      %v328 = vunpack.c.l.b16 %v283
      %v329 = vunpack.c.l.b16 %v284
      %v330 = vunpack.c.l.b16 %v285
      %v331 = vunpack.c.l.b16 %v286
      %v332 = vunpack.c.l.b16 %v287
      %v333 = vunpack.c.l.b16 %v288
      %v334 = vunpack.c.l.b16 %v289
      %v335 = vunpack.c.l.b16 %v290
      %v336 = vunpack.c.l.b16 %v291
      %v337 = vunpack.c.l.b16 %v292
      %v338 = vunpack.c.l.b16 %v293
      %v339 = vunpack.c.l.b16 %v294
      %v340 = vunpack.c.l.b16 %v295
      %v341 = vpack.c.b16 %v326, %v325
      %v342 = vpack.c.b16 %v328, %v327
      %v343 = vpack.c.b16 %v330, %v329
      %v344 = vpack.c.b16 %v332, %v331
      %v345 = vpack.c.b16 %v334, %v333
      %v346 = vpack.c.b16 %v336, %v335
      %v347 = vpack.c.b16 %v338, %v337
      %v348 = vpack.c.b16 %v340, %v339
      %357 = vmatprep.subr.bf16.mxu0 0
      %358 = vmatpush1.bf16.msra.mxu0 %v341
      %359 = vmatprep.subr.bf16.mxu0 0
      %360 = vmatpush1.bf16.msra.mxu0 %v342
      %361 = vmatprep.subr.bf16.mxu0 0
      %362 = vmatpush1.bf16.msra.mxu0 %v343
      %363 = vmatprep.subr.bf16.mxu0 0
      %364 = vmatpush1.bf16.msra.mxu0 %v344
      %365 = vmatprep.subr.bf16.mxu0 0
      %366 = vmatpush1.bf16.msra.mxu0 %v345
      %367 = vmatprep.subr.bf16.mxu0 0
      %368 = vmatpush1.bf16.msra.mxu0 %v346
      %369 = vmatprep.subr.bf16.mxu0 0
      %370 = vmatpush1.bf16.msra.mxu0 %v347
      %371 = vmatprep.subr.bf16.mxu0 0
      %372 = vmatpush1.bf16.msra.mxu0 %v348
      %373 = vmatprep.subr.bf16.mxu0 0
      %374 = vmatpush1.bf16.msra.mxu0 0
      %375 = vmatprep.subr.bf16.mxu0 0
      %376 = vmatpush1.bf16.msra.mxu0 0
      %377 = vmatprep.subr.bf16.mxu0 0
      %378 = vmatpush1.bf16.msra.mxu0 0
      %379 = vmatprep.subr.bf16.mxu0 0
      %380 = vmatpush1.bf16.msra.mxu0 0
      %381 = vmatprep.subr.bf16.mxu0 0
      %382 = vmatpush1.bf16.msra.mxu0 0
      %383 = vmatprep.subr.bf16.mxu0 0
      %384 = vmatpush1.bf16.msra.mxu0 0
      %385 = vmatprep.subr.bf16.mxu0 0
      %386 = vmatpush1.bf16.msra.mxu0 0
      %387 = vmatprep.subr.bf16.mxu0 0
      %388 = vmatpush1.bf16.msra.mxu0 0
      %389 = vmatprep.mubr.bf16.mxu0 0
      %390 = vmatmul.mubr.bf16.gmra.mrb[0].mxu0 %v307
      %v391 = vpop.f32.mrb[0].mxu0
      %v392 = vadd.f32 %v301, %v391
      %v393 = vpop.f32.mrb[0].mxu0
      %v394 = vpop.f32.mrb[0].mxu0
      %v395 = vadd.f32 %v301, %v394
      %v396 = vpop.f32.mrb[0].mxu0
      %397 = vdwg.mxu0
      %v398 = vld [vmem:[%s269] sm:$0xf]
      %v399 = vld [vmem:[%s269 + $0x4] sm:$0xf]
      %v400 = vunpack.c.l.bf16 %v398
      %v401 = vunpack.c.l.bf16 %v399
      %v402 = vadd.f32 %v392, %v400
      %v403 = vadd.f32 %v395, %v401
      %404 = vadd.xlane.f32.xlu0 %v402
      %v405 = vpop.xlane.xlu0 %404
      %406 = vadd.xlane.f32.xlu0 %v403
      %v407 = vpop.xlane.xlu0 %406
      %v408 = vrcp.pop 128.0
      %v409 = vmul.f32 %v405, %v408
      %v410 = vmul.f32 %v407, %v408
      %v411 = vsub.f32 %v402, %v409
      %v412 = vsub.f32 %v403, %v410
      %v413 = vmul.f32 %v411, %v411
      %v414 = vmul.f32 %v412, %v412
      %415 = vadd.xlane.f32.xlu0 %v413
      %v416 = vpop.xlane.xlu0 %415
      %417 = vadd.xlane.f32.xlu0 %v414
      %v418 = vpop.xlane.xlu0 %417
      %v419 = vmul.f32 %v416, %v408
      %v420 = vmul.f32 %v418, %v408
      %v421 = vadd.f32 %v419, 1e-12
      %v422 = vadd.f32 %v420, 1e-12
      %v423 = vrsqrt.pop %v421
      %v424 = vrsqrt.pop %v422
      %v425 = vmul.f32 %v411, %v423
      %v426 = vmul.f32 %v412, %v424
      %v427 = vld [vmem:[%s4] sm:$0x1]
      %v429 = vlaneseq
      %v430 = vshrl.u32 %v429, 7
      %v431 = vsub.s32 0, %v430
      %v432 = vrot.slane %v427, %v431
      %v434 = vmul.f32 %v425, %v432
      %v435 = vmul.f32 %v426, %v432
      %v436 = vld [vmem:[%s5] sm:$0x1]
      %v438 = vlaneseq
      %v439 = vshrl.u32 %v438, 7
      %v440 = vsub.s32 0, %v439
      %v441 = vrot.slane %v436, %v440
      %v443 = vadd.f32 %v434, %v441
      %v444 = vadd.f32 %v435, %v441
      %v445 = vpack.c.bf16 %v444, %v443
      %v447 = vunpack.c.l.b16 %v445
      %v448 = vunpack.c.h.b16 %v445
      %v449 = vpack.c.b16 %v447, %v447
      %v450 = vpack.c.b16 %v448, %v448
      %453 = vst [vmem:[%s275] sm:$0xf] %v449
      %454 = vst [vmem:[%s275 + $0x4] sm:$0xf] %v450
      %s455 = smul.u32 2, %s17
      %p456 = scmp.lt.s32.totalorder %s455, 3
      %s457 = scalar_select %p456, %s455, 3
      %s458 = smul.addr %s457, 4
      %s459 = scalar_lea.vmem %s6, %s458
      // Predicated region
      $region45: #{bertsum_forward.15} parent=43 // pred_check
        %p460 = pneg %p171
      $region46: #{bertsum_forward.15} parent=43 // pred_check_branch
        %462 = sbr.rel (%p460) target = $region48
      $region47: #{bertsum_forward.15} parent=43 // pred_region
        %s463 = smul.u32 2, %s17
      $region48: #{bertsum_forward.15} parent=43 // pred_fallthru
        _
    $region44: #{bertsum_forward.15} parent=5 // pred_fallthru
      _
    %p464 = scmp.le.s32.totalorder 2, %s12
    // Predicated region
    $region49: #{bertsum_forward.15} parent=5 // pred_check
      %p465 = pneg %p464
    $region50: #{bertsum_forward.15} parent=5 // pred_check_branch
      %467 = sbr.rel (%p465) target = $region52
    $region51: #{bertsum_forward.15} parent=5 // pred_region
      %s468 = ssub.s32 %s12, 2
      // Predicated region
      $region53: #{bertsum_forward.15} parent=51 // pred_check
        %p469 = pneg %p177
      $region54: #{bertsum_forward.15} parent=51 // pred_check_branch
        %471 = sbr.rel (%p469) target = $region56
      $region55: #{bertsum_forward.15} parent=51 // pred_region
        %s472 = smul.u32 2, %s18
        %p473 = scmp.lt.s32.totalorder %s472, 3
        %s474 = scalar_select %p473, %s472, 3
        %s475 = smul.addr %s474, 4
        %s476 = scalar_lea.vmem %s6, %s475
      $region56: #{bertsum_forward.15} parent=51 // pred_fallthru
        _
    $region52: #{bertsum_forward.15} parent=5 // pred_fallthru
      _
  $region6: #{bertsum_forward.15} parent=0 // loop_footer
    %s16 = sadd.s32 1, %s12
  $region7: #{bertsum_forward.15} parent=0 // loop_footer_branch
    %11 = sbr.rel target = $region3
  $region8: #{bertsum_forward.15} parent=0 // loop_exit
    _

// kernel: bertsum_forward.16
$region0: #{bertsum_forward.16}
  #allocation0 [shape = 'u32[]', space=smem, size = 0x4, offset = 0x4, fixed_abs, tag = 'smem constant byte address 0x4 - core index']
  #allocation1 [shape = 'u32[144,128]{1,0:T(1,128)}', space=vmem, size = 0x12000, scoped, tag = 'internal scratch']
  %s0 = inlined_call_operand.vmem [shape: bf16[32,128], index: 0, kind: input, shape index: {}]
  %s1 = inlined_call_operand.vmem [shape: bf16[128,256], index: 1, kind: input, shape index: {}]
  %s2 = inlined_call_operand.vmem [shape: f32[1,256], index: 2, kind: input, shape index: {}]
  %s3 = inlined_call_operand.vmem [shape: bf16[32,256], index: 3, kind: output, shape index: {}]
  %s4 = sld [smem:[#allocation0]]
  $region45: #{bertsum_forward.16} parent=0
    _
  %s6 = ssub.s32 1, %s4
  %s7 = scalar_select 0, %s6, %s4
  loop: start=0, step=1, limit=4
  $region2: #{bertsum_forward.16} parent=0 // loop_pre_header
    _
  $region3: #{bertsum_forward.16} parent=0 // loop_header
    %s9 = sphi 0, %s13
    %p10 = scmp.ge.s32.totalorder %s9, 4
    %s19 = sphi 0, %s21
    %s22 = sphi 0, %s19
    %s23 = sphi 0, %s22
    %s39 = sphi 0, %s23
    %s43 = sphi 0, %s43
    %s45 = sphi 0, %s43
    %s46 = sphi 0, %s45
    %s60 = sphi 0, %s46
    %s64 = sphi 0, %s64
    %s66 = sphi 0, %s64
    %s67 = sphi 0, %s66
    %s81 = sphi 0, %s67
    %s87 = sphi 0, %s89
    %s90 = sphi 0, %s87
    %s91 = sphi 0, %s90
    %s107 = sphi 0, %s91
  $region4: #{bertsum_forward.16} parent=0 // loop_header_branch
    %12 = sbr.rel (%p10) target = $region8
  $region5: #{bertsum_forward.16} parent=0 // loop_body
    %s14 = ssub.s32 %s9, 1
    %s15 = ssub.s32 %s9, 2
    %s16 = sadd.s32 %s9, 1
    %s17 = ssub.s32 %s9, %s16
    %p18 = scmp.eq.s32.totalorder %s17, 0
    %s20 = sadd.s32 %s19, 1
    %s21 = scalar_select %p18, %s19, %s20
    %p24 = pneg %p18
    %p25 = scmp.eq.s32.totalorder %s9, 1
    %p26 = por %p24, %p25
    %p27 = scmp.ne.s32.totalorder %s19, %s22
    %p28 = scmp.eq.s32.totalorder %s9, 0
    %p29 = por %p27, %p28
    %p30 = scmp.ne.s32.totalorder %s19, %s22
    %p31 = scmp.eq.s32.totalorder %s14, 1
    %p32 = por %p30, %p31
    %p33 = scmp.ne.s32.totalorder %s22, %s23
    %p34 = scmp.eq.s32.totalorder %s14, 0
    %p35 = por %p33, %p34
    %p36 = scmp.ne.s32.totalorder %s22, %s23
    %p37 = scmp.eq.s32.totalorder %s15, 1
    %p38 = por %p36, %p37
    %p40 = scmp.ne.s32.totalorder %s23, %s39
    %p41 = scmp.eq.s32.totalorder %s15, 0
    %p42 = por %p40, %p41
    %s44 = sadd.s32 %s43, 1
    %p47 = scmp.eq.s32.totalorder %s9, 1
    %p48 = scmp.ne.s32.totalorder %s43, %s45
    %p49 = scmp.eq.s32.totalorder %s9, 0
    %p50 = por %p48, %p49
    %p51 = scmp.ne.s32.totalorder %s43, %s45
    %p52 = scmp.eq.s32.totalorder %s14, 1
    %p53 = por %p51, %p52
    %p54 = scmp.ne.s32.totalorder %s45, %s46
    %p55 = scmp.eq.s32.totalorder %s14, 0
    %p56 = por %p54, %p55
    %p57 = scmp.ne.s32.totalorder %s45, %s46
    %p58 = scmp.eq.s32.totalorder %s15, 1
    %p59 = por %p57, %p58
    %p61 = scmp.ne.s32.totalorder %s46, %s60
    %p62 = scmp.eq.s32.totalorder %s15, 0
    %p63 = por %p61, %p62
    %s65 = sadd.s32 %s64, 1
    %p68 = scmp.eq.s32.totalorder %s9, 1
    %p69 = scmp.ne.s32.totalorder %s64, %s66
    %p70 = scmp.eq.s32.totalorder %s9, 0
    %p71 = por %p69, %p70
    %p72 = scmp.ne.s32.totalorder %s64, %s66
    %p73 = scmp.eq.s32.totalorder %s14, 1
    %p74 = por %p72, %p73
    %p75 = scmp.ne.s32.totalorder %s66, %s67
    %p76 = scmp.eq.s32.totalorder %s14, 0
    %p77 = por %p75, %p76
    %p78 = scmp.ne.s32.totalorder %s66, %s67
    %p79 = scmp.eq.s32.totalorder %s15, 1
    %p80 = por %p78, %p79
    %p82 = scmp.ne.s32.totalorder %s67, %s81
    %p83 = scmp.eq.s32.totalorder %s15, 0
    %p84 = por %p82, %p83
    %s85 = ssub.s32 %s9, %s16
    %p86 = scmp.eq.s32.totalorder %s85, 0
    %s88 = sadd.s32 %s87, 1
    %s89 = scalar_select %p86, %s87, %s88
    %p92 = pneg %p86
    %p93 = scmp.eq.s32.totalorder %s9, 1
    %p94 = por %p92, %p93
    %p95 = scmp.ne.s32.totalorder %s87, %s90
    %p96 = scmp.eq.s32.totalorder %s9, 0
    %p97 = por %p95, %p96
    %p98 = scmp.ne.s32.totalorder %s87, %s90
    %p99 = scmp.eq.s32.totalorder %s14, 1
    %p100 = por %p98, %p99
    %p101 = scmp.ne.s32.totalorder %s90, %s91
    %p102 = scmp.eq.s32.totalorder %s14, 0
    %p103 = por %p101, %p102
    %p104 = scmp.ne.s32.totalorder %s90, %s91
    %p105 = scmp.eq.s32.totalorder %s15, 1
    %p106 = por %p104, %p105
    %p108 = scmp.ne.s32.totalorder %s91, %s107
    %p109 = scmp.eq.s32.totalorder %s15, 0
    %p110 = por %p108, %p109
    %p111 = scmp.le.s32.totalorder 1, %s9
    %p112 = scmp.lt.s32.totalorder %s9, 3
    %p113 = pnand %p111, %p112
    %p114 = pneg %p113
    // Predicated region
    $region9: #{bertsum_forward.16} parent=5 // pred_check
      _
    $region10: #{bertsum_forward.16} parent=5 // pred_check_branch
      %116 = sbr.rel (%p113) target = $region12
    $region11: #{bertsum_forward.16} parent=5 // pred_region
      %s117 = ssub.s32 %s9, 1
      // Predicated region
      $region13: #{bertsum_forward.16} parent=11 // pred_check
        %p118 = pneg %p56
      $region14: #{bertsum_forward.16} parent=11 // pred_check_branch
        %120 = sbr.rel (%p118) target = $region16
      $region15: #{bertsum_forward.16} parent=11 // pred_region
        _
      $region16: #{bertsum_forward.16} parent=11 // pred_fallthru
        _
      // Predicated region
      $region17: #{bertsum_forward.16} parent=11 // pred_check
        %p121 = pneg %p77
      $region18: #{bertsum_forward.16} parent=11 // pred_check_branch
        %123 = sbr.rel (%p121) target = $region20
      $region19: #{bertsum_forward.16} parent=11 // pred_region
        _
      $region20: #{bertsum_forward.16} parent=11 // pred_fallthru
        _
    $region12: #{bertsum_forward.16} parent=5 // pred_fallthru
      _
    %p124 = scmp.lt.s32.totalorder %s9, 2
    // Predicated region
    $region21: #{bertsum_forward.16} parent=5 // pred_check
      %p125 = pneg %p124
    $region22: #{bertsum_forward.16} parent=5 // pred_check_branch
      %127 = sbr.rel (%p125) target = $region24
    $region23: #{bertsum_forward.16} parent=5 // pred_region
      // Predicated region
      $region25: #{bertsum_forward.16} parent=23 // pred_check
        %p128 = pneg %p29
      $region26: #{bertsum_forward.16} parent=23 // pred_check_branch
        %130 = sbr.rel (%p128) target = $region28
      $region27: #{bertsum_forward.16} parent=23 // pred_region
        %s131 = smul.u32 2, %s9
        %p132 = scmp.lt.s32.totalorder %s131, 3
        %s133 = scalar_select %p132, %s131, 3
        %s134 = smul.addr %s133, 4
        %s135 = scalar_lea.vmem %s0, %s134
        %s136 = smul.u32 2, %s9
      $region28: #{bertsum_forward.16} parent=23 // pred_fallthru
        _
    $region24: #{bertsum_forward.16} parent=5 // pred_fallthru
      _
    %p137 = scmp.le.s32.totalorder 1, %s9
    %p138 = scmp.lt.s32.totalorder %s9, 3
    %p139 = pnand %p137, %p138
    %p140 = pneg %p139
    // Predicated region
    $region29: #{bertsum_forward.16} parent=5 // pred_check
      _
    $region30: #{bertsum_forward.16} parent=5 // pred_check_branch
      %142 = sbr.rel (%p139) target = $region32
    $region31: #{bertsum_forward.16} parent=5 // pred_region
      %s143 = ssub.s32 %s9, 1
      %s144 = smul.u32 2, %s14
      %p145 = scmp.lt.s32.totalorder %s144, 3
      %s146 = scalar_select %p145, %s144, 3
      %s147 = smul.addr %s146, 4
      %s148 = scalar_lea.vmem %s0, %s147
      %p149 = pneg %p35
      %p150 = pneg %p32
      %p151 = pneg %p56
      %p152 = pneg %p53
      %p153 = pneg %p77
      %p154 = pneg %p74
      %p155 = pneg %p103
      %p156 = pneg %p100
      %s157 = smul.u32 2, %s14
      %p158 = scmp.lt.s32.totalorder %s157, 3
      %s159 = scalar_select %p158, %s157, 3
      %s160 = smul.addr %s159, 2
      %s161 = smul.addr %s160, 4
      %s162 = scalar_lea.vmem %s3, %s161
      %s163 = smul.u32 2, %s14
      %p164 = scmp.lt.s32.totalorder %s163, 3
      %s165 = scalar_select %p164, %s163, 3
      %s166 = smul.addr %s165, 4
      %s167 = scalar_lea.vmem %s0, %s166
      %s168 = smul.u32 2, %s14
      %s169 = smul.u32 2, %s14
      %p170 = scmp.lt.s32.totalorder %s169, 3
      %s171 = scalar_select %p170, %s169, 3
      %s172 = smul.addr %s171, 2
      %s173 = smul.addr %s172, 4
      %s174 = scalar_lea.vmem %s3, %s173
      %s175 = smul.u32 2, %s14
      %v177 = vld [vmem:[%s167] sm:$0xf]
      %v178 = vld [vmem:[%s167 + $0x4] sm:$0xf]
      %v179 = vld [vmem:[%s1] sm:$0xff]
      %v180 = vld [vmem:[%s1 + $0x8] sm:$0xff]
      %v181 = vld [vmem:[%s1 + $0x10] sm:$0xff]
      %v182 = vld [vmem:[%s1 + $0x18] sm:$0xff]
      %v183 = vld [vmem:[%s1 + $0x20] sm:$0xff]
      %v184 = vld [vmem:[%s1 + $0x28] sm:$0xff]
      %v185 = vld [vmem:[%s1 + $0x30] sm:$0xff]
      %v186 = vld [vmem:[%s1 + $0x38] sm:$0xff]
      %v187 = vld [vmem:[%s1 + $0x40] sm:$0xff]
      %v188 = vld [vmem:[%s1 + $0x48] sm:$0xff]
      %v189 = vld [vmem:[%s1 + $0x50] sm:$0xff]
      %v190 = vld [vmem:[%s1 + $0x58] sm:$0xff]
      %v191 = vld [vmem:[%s1 + $0x60] sm:$0xff]
      %v192 = vld [vmem:[%s1 + $0x68] sm:$0xff]
      %v193 = vld [vmem:[%s1 + $0x70] sm:$0xff]
      %v194 = vld [vmem:[%s1 + $0x78] sm:$0xff]
      %v195 = vld [vmem:[%s2] sm:$0x3]
      %v197 = vlaneseq
      %v198 = vshrl.u32 %v197, 7
      %v199 = vsub.s32 0, %v198
      %v200 = vrot.slane %v195, %v199
      %v201 = vlaneseq
      %v202 = vshrl.u32 %v201, 7
      %v203 = vsub.s32 1, %v202
      %v204 = vrot.slane %v195, %v203
      %v209 = vunpack.c.l.b16 %v177
      %v210 = vunpack.c.l.b16 %v178
      %v211 = vpack.c.b16 %v210, %v209
      %v229 = vunpack.c.l.b16 %v179
      %v230 = vunpack.c.h.b16 %v179
      %v231 = vunpack.c.l.b16 %v180
      %v232 = vunpack.c.h.b16 %v180
      %v233 = vunpack.c.l.b16 %v181
      %v234 = vunpack.c.h.b16 %v181
      %v235 = vunpack.c.l.b16 %v182
      %v236 = vunpack.c.h.b16 %v182
      %v237 = vunpack.c.l.b16 %v183
      %v238 = vunpack.c.h.b16 %v183
      %v239 = vunpack.c.l.b16 %v184
      %v240 = vunpack.c.h.b16 %v184
      %v241 = vunpack.c.l.b16 %v185
      %v242 = vunpack.c.h.b16 %v185
      %v243 = vunpack.c.l.b16 %v186
      %v244 = vunpack.c.h.b16 %v186
      %v245 = vunpack.c.l.b16 %v187
      %v246 = vunpack.c.h.b16 %v187
      %v247 = vunpack.c.l.b16 %v188
      %v248 = vunpack.c.h.b16 %v188
      %v249 = vunpack.c.l.b16 %v189
      %v250 = vunpack.c.h.b16 %v189
      %v251 = vunpack.c.l.b16 %v190
      %v252 = vunpack.c.h.b16 %v190
      %v253 = vunpack.c.l.b16 %v191
      %v254 = vunpack.c.h.b16 %v191
      %v255 = vunpack.c.l.b16 %v192
      %v256 = vunpack.c.h.b16 %v192
      %v257 = vunpack.c.l.b16 %v193
      %v258 = vunpack.c.h.b16 %v193
      %v259 = vunpack.c.l.b16 %v194
      %v260 = vunpack.c.h.b16 %v194
      %v261 = vpack.c.b16 %v231, %v229
      %v262 = vpack.c.b16 %v232, %v230
      %v263 = vpack.c.b16 %v235, %v233
      %v264 = vpack.c.b16 %v236, %v234
      %v265 = vpack.c.b16 %v239, %v237
      %v266 = vpack.c.b16 %v240, %v238
      %v267 = vpack.c.b16 %v243, %v241
      %v268 = vpack.c.b16 %v244, %v242
      %v269 = vpack.c.b16 %v247, %v245
      %v270 = vpack.c.b16 %v248, %v246
      %v271 = vpack.c.b16 %v251, %v249
      %v272 = vpack.c.b16 %v252, %v250
      %v273 = vpack.c.b16 %v255, %v253
      %v274 = vpack.c.b16 %v256, %v254
      %v275 = vpack.c.b16 %v259, %v257
      %v276 = vpack.c.b16 %v260, %v258
      %293 = vmatprep.subr.bf16.mxu0 %v262
      %294 = vmatpush1.bf16.msra.mxu0 %v261
      %295 = vmatprep.subr.bf16.mxu0 %v264
      %296 = vmatpush1.bf16.msra.mxu0 %v263
      %297 = vmatprep.subr.bf16.mxu0 %v266
      %298 = vmatpush1.bf16.msra.mxu0 %v265
      %299 = vmatprep.subr.bf16.mxu0 %v268
      %300 = vmatpush1.bf16.msra.mxu0 %v267
      %301 = vmatprep.subr.bf16.mxu0 %v270
      %302 = vmatpush1.bf16.msra.mxu0 %v269
      %303 = vmatprep.subr.bf16.mxu0 %v272
      %304 = vmatpush1.bf16.msra.mxu0 %v271
      %305 = vmatprep.subr.bf16.mxu0 %v274
      %306 = vmatpush1.bf16.msra.mxu0 %v273
      %307 = vmatprep.subr.bf16.mxu0 %v276
      %308 = vmatpush1.bf16.msra.mxu0 %v275
      %309 = vmatprep.subr.bf16.mxu0 0
      %310 = vmatpush1.bf16.msra.mxu0 0
      %311 = vmatprep.subr.bf16.mxu0 0
      %312 = vmatpush1.bf16.msra.mxu0 0
      %313 = vmatprep.subr.bf16.mxu0 0
      %314 = vmatpush1.bf16.msra.mxu0 0
      %315 = vmatprep.subr.bf16.mxu0 0
      %316 = vmatpush1.bf16.msra.mxu0 0
      %317 = vmatprep.subr.bf16.mxu0 0
      %318 = vmatpush1.bf16.msra.mxu0 0
      %319 = vmatprep.subr.bf16.mxu0 0
      %320 = vmatpush1.bf16.msra.mxu0 0
      %321 = vmatprep.subr.bf16.mxu0 0
      %322 = vmatpush1.bf16.msra.mxu0 0
      %323 = vmatprep.subr.bf16.mxu0 0
      %324 = vmatpush1.bf16.msra.mxu0 0
      %325 = vmatprep.mubr.bf16.mxu0 0
      %326 = vmatmul.mubr.bf16.gmra.mrb[0].mxu0 %v211
      %v327 = vpop.f32.mrb[0].mxu0
      %v328 = vadd.f32 %v200, %v327
      %v329 = vpop.f32.mrb[0].mxu0
      %v330 = vadd.f32 %v204, %v329
      %v331 = vpop.f32.mrb[0].mxu0
      %v332 = vadd.f32 %v200, %v331
      %v333 = vpop.f32.mrb[0].mxu0
      %v334 = vadd.f32 %v204, %v333
      %335 = vdwg.mxu0
      %v336 = vmul.f32 %v328, 0.5
      %v337 = vmul.f32 %v330, 0.5
      %v338 = vmul.f32 %v332, 0.5
      %v339 = vmul.f32 %v334, 0.5
      %v340 = vmul.f32 %v328, 0.044715
      %v341 = vmul.f32 %v330, 0.044715
      %v342 = vmul.f32 %v332, 0.044715
      %v343 = vmul.f32 %v334, 0.044715
      %v344 = vmul.f32 %v340, %v328
      %v345 = vmul.f32 %v341, %v330
      %v346 = vmul.f32 %v342, %v332
      %v347 = vmul.f32 %v343, %v334
      %v348 = vmul.f32 %v344, %v328
      %v349 = vmul.f32 %v345, %v330
      %v350 = vmul.f32 %v346, %v332
      %v351 = vmul.f32 %v347, %v334
      %v352 = vadd.f32 %v328, %v348
      %v353 = vadd.f32 %v330, %v349
      %v354 = vadd.f32 %v332, %v350
      %v355 = vadd.f32 %v334, %v351
      %v356 = vmul.f32 %v352, 0.7978846
      %v357 = vmul.f32 %v353, 0.7978846
      %v358 = vmul.f32 %v354, 0.7978846
      %v359 = vmul.f32 %v355, 0.7978846
      %v360 = vtanh.pop %v356
      %v361 = vtanh.pop %v357
      %v362 = vtanh.pop %v358
      %v363 = vtanh.pop %v359
      %v364 = vadd.f32 %v360, 1.0
      %v365 = vadd.f32 %v361, 1.0
      %v366 = vadd.f32 %v362, 1.0
      %v367 = vadd.f32 %v363, 1.0
      %v368 = vmul.f32 %v336, %v364
      %v369 = vmul.f32 %v337, %v365
      %v370 = vmul.f32 %v338, %v366
      %v371 = vmul.f32 %v339, %v367
      %v372 = vpack.c.bf16 %v370, %v368
      %v373 = vpack.c.bf16 %v371, %v369
      %v376 = vunpack.c.l.b16 %v372
      %v377 = vunpack.c.l.b16 %v373
      %v378 = vunpack.c.h.b16 %v372
      %v379 = vunpack.c.h.b16 %v373
      %v380 = vpack.c.b16 %v377, %v376
      %v381 = vpack.c.b16 %v379, %v378
      %384 = vst [vmem:[%s174] sm:$0xff] %v380
      %385 = vst [vmem:[%s174 + $0x8] sm:$0xff] %v381
      %s386 = smul.u32 2, %s14
      %p387 = scmp.lt.s32.totalorder %s386, 3
      %s388 = scalar_select %p387, %s386, 3
      %s389 = smul.addr %s388, 2
      %s390 = smul.addr %s389, 4
      %s391 = scalar_lea.vmem %s3, %s390
      // Predicated region
      $region33: #{bertsum_forward.16} parent=31 // pred_check
        %p392 = pneg %p100
      $region34: #{bertsum_forward.16} parent=31 // pred_check_branch
        %394 = sbr.rel (%p392) target = $region36
      $region35: #{bertsum_forward.16} parent=31 // pred_region
        %s395 = smul.u32 2, %s14
      $region36: #{bertsum_forward.16} parent=31 // pred_fallthru
        _
    $region32: #{bertsum_forward.16} parent=5 // pred_fallthru
      _
    %p396 = scmp.le.s32.totalorder 2, %s9
    // Predicated region
    $region37: #{bertsum_forward.16} parent=5 // pred_check
      %p397 = pneg %p396
    $region38: #{bertsum_forward.16} parent=5 // pred_check_branch
      %399 = sbr.rel (%p397) target = $region40
    $region39: #{bertsum_forward.16} parent=5 // pred_region
      %s400 = ssub.s32 %s9, 2
      // Predicated region
      $region41: #{bertsum_forward.16} parent=39 // pred_check
        %p401 = pneg %p106
      $region42: #{bertsum_forward.16} parent=39 // pred_check_branch
        %403 = sbr.rel (%p401) target = $region44
      $region43: #{bertsum_forward.16} parent=39 // pred_region
        %s404 = smul.u32 2, %s15
        %p405 = scmp.lt.s32.totalorder %s404, 3
        %s406 = scalar_select %p405, %s404, 3
        %s407 = smul.addr %s406, 2
        %s408 = smul.addr %s407, 4
        %s409 = scalar_lea.vmem %s3, %s408
      $region44: #{bertsum_forward.16} parent=39 // pred_fallthru
        _
    $region40: #{bertsum_forward.16} parent=5 // pred_fallthru
      _
  $region6: #{bertsum_forward.16} parent=0 // loop_footer
    %s13 = sadd.s32 1, %s9
  $region7: #{bertsum_forward.16} parent=0 // loop_footer_branch
    %8 = sbr.rel target = $region3
  $region8: #{bertsum_forward.16} parent=0 // loop_exit
    _

// kernel: bertsum_forward.17
$region0: #{bertsum_forward.17}
  #allocation0 [shape = 'u32[]', space=smem, size = 0x4, offset = 0x4, fixed_abs, tag = 'smem constant byte address 0x4 - core index']
  #allocation1 [shape = 'u32[144,128]{1,0:T(1,128)}', space=vmem, size = 0x12000, scoped, tag = 'internal scratch']
  %s0 = inlined_call_operand.vmem [shape: bf16[32,256], index: 0, kind: input, shape index: {}]
  %s1 = inlined_call_operand.vmem [shape: bf16[256,128], index: 1, kind: input, shape index: {}]
  %s2 = inlined_call_operand.vmem [shape: f32[1,128], index: 2, kind: input, shape index: {}]
  %s3 = inlined_call_operand.vmem [shape: bf16[32,128], index: 3, kind: input, shape index: {}]
  %s4 = inlined_call_operand.vmem [shape: f32[1,128], index: 4, kind: input, shape index: {}]
  %s5 = inlined_call_operand.vmem [shape: f32[1,128], index: 5, kind: input, shape index: {}]
  %s6 = inlined_call_operand.vmem [shape: bf16[32,128], index: 6, kind: output, shape index: {}]
  %s7 = sld [smem:[#allocation0]]
  $region57: #{bertsum_forward.17} parent=0
    _
  %s9 = ssub.s32 1, %s7
  %s10 = scalar_select 0, %s9, %s7
  loop: start=0, step=1, limit=4
  $region2: #{bertsum_forward.17} parent=0 // loop_pre_header
    _
  $region3: #{bertsum_forward.17} parent=0 // loop_header
    %s12 = sphi 0, %s16
    %p13 = scmp.ge.s32.totalorder %s12, 4
    %s22 = sphi 0, %s24
    %s25 = sphi 0, %s22
    %s26 = sphi 0, %s25
    %s42 = sphi 0, %s26
    %s46 = sphi 0, %s46
    %s48 = sphi 0, %s46
    %s49 = sphi 0, %s48
    %s63 = sphi 0, %s49
    %s67 = sphi 0, %s67
    %s69 = sphi 0, %s67
    %s70 = sphi 0, %s69
    %s84 = sphi 0, %s70
    %s90 = sphi 0, %s92
    %s93 = sphi 0, %s90
    %s94 = sphi 0, %s93
    %s110 = sphi 0, %s94
    %s114 = sphi 0, %s114
    %s116 = sphi 0, %s114
    %s117 = sphi 0, %s116
    %s131 = sphi 0, %s117
    %s135 = sphi 0, %s135
    %s137 = sphi 0, %s135
    %s138 = sphi 0, %s137
    %s152 = sphi 0, %s138
    %s158 = sphi 0, %s160
    %s161 = sphi 0, %s158
    %s162 = sphi 0, %s161
    %s178 = sphi 0, %s162
  $region4: #{bertsum_forward.17} parent=0 // loop_header_branch
    %15 = sbr.rel (%p13) target = $region8
  $region5: #{bertsum_forward.17} parent=0 // loop_body
    %s17 = ssub.s32 %s12, 1
    %s18 = ssub.s32 %s12, 2
    %s19 = sadd.s32 %s12, 1
    %s20 = ssub.s32 %s12, %s19
    %p21 = scmp.eq.s32.totalorder %s20, 0
    %s23 = sadd.s32 %s22, 1
    %s24 = scalar_select %p21, %s22, %s23
    %p27 = pneg %p21
    %p28 = scmp.eq.s32.totalorder %s12, 1
    %p29 = por %p27, %p28
    %p30 = scmp.ne.s32.totalorder %s22, %s25
    %p31 = scmp.eq.s32.totalorder %s12, 0
    %p32 = por %p30, %p31
    %p33 = scmp.ne.s32.totalorder %s22, %s25
    %p34 = scmp.eq.s32.totalorder %s17, 1
    %p35 = por %p33, %p34
    %p36 = scmp.ne.s32.totalorder %s25, %s26
    %p37 = scmp.eq.s32.totalorder %s17, 0
    %p38 = por %p36, %p37
    %p39 = scmp.ne.s32.totalorder %s25, %s26
    %p40 = scmp.eq.s32.totalorder %s18, 1
    %p41 = por %p39, %p40
    %p43 = scmp.ne.s32.totalorder %s26, %s42
    %p44 = scmp.eq.s32.totalorder %s18, 0
    %p45 = por %p43, %p44
    %s47 = sadd.s32 %s46, 1
    %p50 = scmp.eq.s32.totalorder %s12, 1
    %p51 = scmp.ne.s32.totalorder %s46, %s48
    %p52 = scmp.eq.s32.totalorder %s12, 0
    %p53 = por %p51, %p52
    %p54 = scmp.ne.s32.totalorder %s46, %s48
    %p55 = scmp.eq.s32.totalorder %s17, 1
    %p56 = por %p54, %p55
    %p57 = scmp.ne.s32.totalorder %s48, %s49
    %p58 = scmp.eq.s32.totalorder %s17, 0
    %p59 = por %p57, %p58
    %p60 = scmp.ne.s32.totalorder %s48, %s49
    %p61 = scmp.eq.s32.totalorder %s18, 1
    %p62 = por %p60, %p61
    %p64 = scmp.ne.s32.totalorder %s49, %s63
    %p65 = scmp.eq.s32.totalorder %s18, 0
    %p66 = por %p64, %p65
    %s68 = sadd.s32 %s67, 1
    %p71 = scmp.eq.s32.totalorder %s12, 1
    %p72 = scmp.ne.s32.totalorder %s67, %s69
    %p73 = scmp.eq.s32.totalorder %s12, 0
    %p74 = por %p72, %p73
    %p75 = scmp.ne.s32.totalorder %s67, %s69
    %p76 = scmp.eq.s32.totalorder %s17, 1
    %p77 = por %p75, %p76
    %p78 = scmp.ne.s32.totalorder %s69, %s70
    %p79 = scmp.eq.s32.totalorder %s17, 0
    %p80 = por %p78, %p79
    %p81 = scmp.ne.s32.totalorder %s69, %s70
    %p82 = scmp.eq.s32.totalorder %s18, 1
    %p83 = por %p81, %p82
    %p85 = scmp.ne.s32.totalorder %s70, %s84
    %p86 = scmp.eq.s32.totalorder %s18, 0
    %p87 = por %p85, %p86
    %s88 = ssub.s32 %s12, %s19
    %p89 = scmp.eq.s32.totalorder %s88, 0
    %s91 = sadd.s32 %s90, 1
    %s92 = scalar_select %p89, %s90, %s91
    %p95 = pneg %p89
    %p96 = scmp.eq.s32.totalorder %s12, 1
    %p97 = por %p95, %p96
    %p98 = scmp.ne.s32.totalorder %s90, %s93
    %p99 = scmp.eq.s32.totalorder %s12, 0
    %p100 = por %p98, %p99
    %p101 = scmp.ne.s32.totalorder %s90, %s93
    %p102 = scmp.eq.s32.totalorder %s17, 1
    %p103 = por %p101, %p102
    %p104 = scmp.ne.s32.totalorder %s93, %s94
    %p105 = scmp.eq.s32.totalorder %s17, 0
    %p106 = por %p104, %p105
    %p107 = scmp.ne.s32.totalorder %s93, %s94
    %p108 = scmp.eq.s32.totalorder %s18, 1
    %p109 = por %p107, %p108
    %p111 = scmp.ne.s32.totalorder %s94, %s110
    %p112 = scmp.eq.s32.totalorder %s18, 0
    %p113 = por %p111, %p112
    %s115 = sadd.s32 %s114, 1
    %p118 = scmp.eq.s32.totalorder %s12, 1
    %p119 = scmp.ne.s32.totalorder %s114, %s116
    %p120 = scmp.eq.s32.totalorder %s12, 0
    %p121 = por %p119, %p120
    %p122 = scmp.ne.s32.totalorder %s114, %s116
    %p123 = scmp.eq.s32.totalorder %s17, 1
    %p124 = por %p122, %p123
    %p125 = scmp.ne.s32.totalorder %s116, %s117
    %p126 = scmp.eq.s32.totalorder %s17, 0
    %p127 = por %p125, %p126
    %p128 = scmp.ne.s32.totalorder %s116, %s117
    %p129 = scmp.eq.s32.totalorder %s18, 1
    %p130 = por %p128, %p129
    %p132 = scmp.ne.s32.totalorder %s117, %s131
    %p133 = scmp.eq.s32.totalorder %s18, 0
    %p134 = por %p132, %p133
    %s136 = sadd.s32 %s135, 1
    %p139 = scmp.eq.s32.totalorder %s12, 1
    %p140 = scmp.ne.s32.totalorder %s135, %s137
    %p141 = scmp.eq.s32.totalorder %s12, 0
    %p142 = por %p140, %p141
    %p143 = scmp.ne.s32.totalorder %s135, %s137
    %p144 = scmp.eq.s32.totalorder %s17, 1
    %p145 = por %p143, %p144
    %p146 = scmp.ne.s32.totalorder %s137, %s138
    %p147 = scmp.eq.s32.totalorder %s17, 0
    %p148 = por %p146, %p147
    %p149 = scmp.ne.s32.totalorder %s137, %s138
    %p150 = scmp.eq.s32.totalorder %s18, 1
    %p151 = por %p149, %p150
    %p153 = scmp.ne.s32.totalorder %s138, %s152
    %p154 = scmp.eq.s32.totalorder %s18, 0
    %p155 = por %p153, %p154
    %s156 = ssub.s32 %s12, %s19
    %p157 = scmp.eq.s32.totalorder %s156, 0
    %s159 = sadd.s32 %s158, 1
    %s160 = scalar_select %p157, %s158, %s159
    %p163 = pneg %p157
    %p164 = scmp.eq.s32.totalorder %s12, 1
    %p165 = por %p163, %p164
    %p166 = scmp.ne.s32.totalorder %s158, %s161
    %p167 = scmp.eq.s32.totalorder %s12, 0
    %p168 = por %p166, %p167
    %p169 = scmp.ne.s32.totalorder %s158, %s161
    %p170 = scmp.eq.s32.totalorder %s17, 1
    %p171 = por %p169, %p170
    %p172 = scmp.ne.s32.totalorder %s161, %s162
    %p173 = scmp.eq.s32.totalorder %s17, 0
    %p174 = por %p172, %p173
    %p175 = scmp.ne.s32.totalorder %s161, %s162
    %p176 = scmp.eq.s32.totalorder %s18, 1
    %p177 = por %p175, %p176
    %p179 = scmp.ne.s32.totalorder %s162, %s178
    %p180 = scmp.eq.s32.totalorder %s18, 0
    %p181 = por %p179, %p180
    %p182 = scmp.le.s32.totalorder 1, %s12
    %p183 = scmp.lt.s32.totalorder %s12, 3
    %p184 = pnand %p182, %p183
    %p185 = pneg %p184
    // Predicated region
    $region9: #{bertsum_forward.17} parent=5 // pred_check
      _
    $region10: #{bertsum_forward.17} parent=5 // pred_check_branch
      %187 = sbr.rel (%p184) target = $region12
    $region11: #{bertsum_forward.17} parent=5 // pred_region
      %s188 = ssub.s32 %s12, 1
      // Predicated region
      $region13: #{bertsum_forward.17} parent=11 // pred_check
        %p189 = pneg %p59
      $region14: #{bertsum_forward.17} parent=11 // pred_check_branch
        %191 = sbr.rel (%p189) target = $region16
      $region15: #{bertsum_forward.17} parent=11 // pred_region
        _
      $region16: #{bertsum_forward.17} parent=11 // pred_fallthru
        _
      // Predicated region
      $region17: #{bertsum_forward.17} parent=11 // pred_check
        %p192 = pneg %p80
      $region18: #{bertsum_forward.17} parent=11 // pred_check_branch
        %194 = sbr.rel (%p192) target = $region20
      $region19: #{bertsum_forward.17} parent=11 // pred_region
        _
      $region20: #{bertsum_forward.17} parent=11 // pred_fallthru
        _
      // Predicated region
      $region21: #{bertsum_forward.17} parent=11 // pred_check
        %p195 = pneg %p127
      $region22: #{bertsum_forward.17} parent=11 // pred_check_branch
        %197 = sbr.rel (%p195) target = $region24
      $region23: #{bertsum_forward.17} parent=11 // pred_region
        _
      $region24: #{bertsum_forward.17} parent=11 // pred_fallthru
        _
      // Predicated region
      $region25: #{bertsum_forward.17} parent=11 // pred_check
        %p198 = pneg %p148
      $region26: #{bertsum_forward.17} parent=11 // pred_check_branch
        %200 = sbr.rel (%p198) target = $region28
      $region27: #{bertsum_forward.17} parent=11 // pred_region
        _
      $region28: #{bertsum_forward.17} parent=11 // pred_fallthru
        _
    $region12: #{bertsum_forward.17} parent=5 // pred_fallthru
      _
    %p201 = scmp.lt.s32.totalorder %s12, 2
    // Predicated region
    $region29: #{bertsum_forward.17} parent=5 // pred_check
      %p202 = pneg %p201
    $region30: #{bertsum_forward.17} parent=5 // pred_check_branch
      %204 = sbr.rel (%p202) target = $region32
    $region31: #{bertsum_forward.17} parent=5 // pred_region
      // Predicated region
      $region33: #{bertsum_forward.17} parent=31 // pred_check
        %p205 = pneg %p32
      $region34: #{bertsum_forward.17} parent=31 // pred_check_branch
        %207 = sbr.rel (%p205) target = $region36
      $region35: #{bertsum_forward.17} parent=31 // pred_region
        %s208 = smul.u32 2, %s12
        %p209 = scmp.lt.s32.totalorder %s208, 3
        %s210 = scalar_select %p209, %s208, 3
        %s211 = smul.addr %s210, 2
        %s212 = smul.addr %s211, 4
        %s213 = scalar_lea.vmem %s0, %s212
        %s214 = smul.u32 2, %s12
      $region36: #{bertsum_forward.17} parent=31 // pred_fallthru
        _
      // Predicated region
      $region37: #{bertsum_forward.17} parent=31 // pred_check
        %p215 = pneg %p100
      $region38: #{bertsum_forward.17} parent=31 // pred_check_branch
        %217 = sbr.rel (%p215) target = $region40
      $region39: #{bertsum_forward.17} parent=31 // pred_region
        %s218 = smul.u32 2, %s12
        %p219 = scmp.lt.s32.totalorder %s218, 3
        %s220 = scalar_select %p219, %s218, 3
        %s221 = smul.addr %s220, 4
        %s222 = scalar_lea.vmem %s3, %s221
        %s223 = smul.u32 2, %s12
      $region40: #{bertsum_forward.17} parent=31 // pred_fallthru
        _
    $region32: #{bertsum_forward.17} parent=5 // pred_fallthru
      _
    %p224 = scmp.le.s32.totalorder 1, %s12
    %p225 = scmp.lt.s32.totalorder %s12, 3
    %p226 = pnand %p224, %p225
    %p227 = pneg %p226
    // Predicated region
    $region41: #{bertsum_forward.17} parent=5 // pred_check
      _
    $region42: #{bertsum_forward.17} parent=5 // pred_check_branch
      %229 = sbr.rel (%p226) target = $region44
    $region43: #{bertsum_forward.17} parent=5 // pred_region
      %s230 = ssub.s32 %s12, 1
      %s231 = smul.u32 2, %s17
      %p232 = scmp.lt.s32.totalorder %s231, 3
      %s233 = scalar_select %p232, %s231, 3
      %s234 = smul.addr %s233, 2
      %s235 = smul.addr %s234, 4
      %s236 = scalar_lea.vmem %s0, %s235
      %p237 = pneg %p38
      %p238 = pneg %p35
      %p239 = pneg %p59
      %p240 = pneg %p56
      %p241 = pneg %p80
      %p242 = pneg %p77
      %s243 = smul.u32 2, %s17
      %p244 = scmp.lt.s32.totalorder %s243, 3
      %s245 = scalar_select %p244, %s243, 3
      %s246 = smul.addr %s245, 4
      %s247 = scalar_lea.vmem %s3, %s246
      %p248 = pneg %p106
      %p249 = pneg %p103
      %p250 = pneg %p127
      %p251 = pneg %p124
      %p252 = pneg %p148
      %p253 = pneg %p145
      %p254 = pneg %p174
      %p255 = pneg %p171
      %s256 = smul.u32 2, %s17
      %p257 = scmp.lt.s32.totalorder %s256, 3
      %s258 = scalar_select %p257, %s256, 3
      %s259 = smul.addr %s258, 4
      %s260 = scalar_lea.vmem %s6, %s259
      %s261 = smul.u32 2, %s17
      %p262 = scmp.lt.s32.totalorder %s261, 3
      %s263 = scalar_select %p262, %s261, 3
      %s264 = smul.addr %s263, 2
      %s265 = smul.addr %s264, 4
      %s266 = scalar_lea.vmem %s0, %s265
      %s267 = smul.u32 2, %s17
      %s268 = smul.u32 2, %s17
      %p269 = scmp.lt.s32.totalorder %s268, 3
      %s270 = scalar_select %p269, %s268, 3
      %s271 = smul.addr %s270, 4
      %s272 = scalar_lea.vmem %s3, %s271
      %s273 = smul.u32 2, %s17
      %s274 = smul.u32 2, %s17
      %p275 = scmp.lt.s32.totalorder %s274, 3
      %s276 = scalar_select %p275, %s274, 3
      %s277 = smul.addr %s276, 4
      %s278 = scalar_lea.vmem %s6, %s277
      %s279 = smul.u32 2, %s17
      %v281 = vld [vmem:[%s266] sm:$0xff]
      %v282 = vld [vmem:[%s266 + $0x8] sm:$0xff]
      %v283 = vld [vmem:[%s1] sm:$0xf]
      %v284 = vld [vmem:[%s1 + $0x4] sm:$0xf]
      %v285 = vld [vmem:[%s1 + $0x8] sm:$0xf]
      %v286 = vld [vmem:[%s1 + $0xc] sm:$0xf]
      %v287 = vld [vmem:[%s1 + $0x10] sm:$0xf]
      %v288 = vld [vmem:[%s1 + $0x14] sm:$0xf]
      %v289 = vld [vmem:[%s1 + $0x18] sm:$0xf]
      %v290 = vld [vmem:[%s1 + $0x1c] sm:$0xf]
      %v291 = vld [vmem:[%s1 + $0x20] sm:$0xf]
      %v292 = vld [vmem:[%s1 + $0x24] sm:$0xf]
      %v293 = vld [vmem:[%s1 + $0x28] sm:$0xf]
      %v294 = vld [vmem:[%s1 + $0x2c] sm:$0xf]
      %v295 = vld [vmem:[%s1 + $0x30] sm:$0xf]
      %v296 = vld [vmem:[%s1 + $0x34] sm:$0xf]
      %v297 = vld [vmem:[%s1 + $0x38] sm:$0xf]
      %v298 = vld [vmem:[%s1 + $0x3c] sm:$0xf]
      %v299 = vld [vmem:[%s1 + $0x40] sm:$0xf]
      %v300 = vld [vmem:[%s1 + $0x44] sm:$0xf]
      %v301 = vld [vmem:[%s1 + $0x48] sm:$0xf]
      %v302 = vld [vmem:[%s1 + $0x4c] sm:$0xf]
      %v303 = vld [vmem:[%s1 + $0x50] sm:$0xf]
      %v304 = vld [vmem:[%s1 + $0x54] sm:$0xf]
      %v305 = vld [vmem:[%s1 + $0x58] sm:$0xf]
      %v306 = vld [vmem:[%s1 + $0x5c] sm:$0xf]
      %v307 = vld [vmem:[%s1 + $0x60] sm:$0xf]
      %v308 = vld [vmem:[%s1 + $0x64] sm:$0xf]
      %v309 = vld [vmem:[%s1 + $0x68] sm:$0xf]
      %v310 = vld [vmem:[%s1 + $0x6c] sm:$0xf]
      %v311 = vld [vmem:[%s1 + $0x70] sm:$0xf]
      %v312 = vld [vmem:[%s1 + $0x74] sm:$0xf]
      %v313 = vld [vmem:[%s1 + $0x78] sm:$0xf]
      %v314 = vld [vmem:[%s1 + $0x7c] sm:$0xf]
      %v315 = vld [vmem:[%s2] sm:$0x1]
      %v317 = vlaneseq
      %v318 = vshrl.u32 %v317, 7
      %v319 = vsub.s32 0, %v318
      %v320 = vrot.slane %v315, %v319
      %v324 = vunpack.c.l.b16 %v281
      %v325 = vunpack.c.h.b16 %v281
      %v326 = vunpack.c.l.b16 %v282
      %v327 = vunpack.c.h.b16 %v282
      %v328 = vpack.c.b16 %v326, %v324
      %v329 = vpack.c.b16 %v327, %v325
      %v364 = vunpack.c.l.b16 %v283
      %v365 = vunpack.c.l.b16 %v284
      %v366 = vunpack.c.l.b16 %v285
      %v367 = vunpack.c.l.b16 %v286
      %v368 = vunpack.c.l.b16 %v287
      %v369 = vunpack.c.l.b16 %v288
      %v370 = vunpack.c.l.b16 %v289
      %v371 = vunpack.c.l.b16 %v290
      %v372 = vunpack.c.l.b16 %v291
      %v373 = vunpack.c.l.b16 %v292
      %v374 = vunpack.c.l.b16 %v293
      %v375 = vunpack.c.l.b16 %v294
      %v376 = vunpack.c.l.b16 %v295
      %v377 = vunpack.c.l.b16 %v296
      %v378 = vunpack.c.l.b16 %v297
      %v379 = vunpack.c.l.b16 %v298
      %v380 = vunpack.c.l.b16 %v299
      %v381 = vunpack.c.l.b16 %v300
      %v382 = vunpack.c.l.b16 %v301
      %v383 = vunpack.c.l.b16 %v302
      %v384 = vunpack.c.l.b16 %v303
      %v385 = vunpack.c.l.b16 %v304
      %v386 = vunpack.c.l.b16 %v305
      %v387 = vunpack.c.l.b16 %v306
      %v388 = vunpack.c.l.b16 %v307
      %v389 = vunpack.c.l.b16 %v308
      %v390 = vunpack.c.l.b16 %v309
      %v391 = vunpack.c.l.b16 %v310
      %v392 = vunpack.c.l.b16 %v311
      %v393 = vunpack.c.l.b16 %v312
      %v394 = vunpack.c.l.b16 %v313
      %v395 = vunpack.c.l.b16 %v314
      %v396 = vpack.c.b16 %v365, %v364
      %v397 = vpack.c.b16 %v367, %v366
      %v398 = vpack.c.b16 %v369, %v368
      %v399 = vpack.c.b16 %v371, %v370
      %v400 = vpack.c.b16 %v373, %v372
      %v401 = vpack.c.b16 %v375, %v374
      %v402 = vpack.c.b16 %v377, %v376
      %v403 = vpack.c.b16 %v379, %v378
      %v404 = vpack.c.b16 %v381, %v380
      %v405 = vpack.c.b16 %v383, %v382
      %v406 = vpack.c.b16 %v385, %v384
      %v407 = vpack.c.b16 %v387, %v386
      %v408 = vpack.c.b16 %v389, %v388
      %v409 = vpack.c.b16 %v391, %v390
      %v410 = vpack.c.b16 %v393, %v392
      %v411 = vpack.c.b16 %v395, %v394
      %428 = vmatprep.subr.bf16.mxu0 0
      %429 = vmatpush1.bf16.msra.mxu0 %v396
      %430 = vmatprep.subr.bf16.mxu0 0
      %431 = vmatpush1.bf16.msra.mxu0 %v397
      %432 = vmatprep.subr.bf16.mxu0 0
      %433 = vmatpush1.bf16.msra.mxu0 %v398
      %434 = vmatprep.subr.bf16.mxu0 0
      %435 = vmatpush1.bf16.msra.mxu0 %v399
      %436 = vmatprep.subr.bf16.mxu0 0
      %437 = vmatpush1.bf16.msra.mxu0 %v400
      %438 = vmatprep.subr.bf16.mxu0 0
      %439 = vmatpush1.bf16.msra.mxu0 %v401
      %440 = vmatprep.subr.bf16.mxu0 0
      %441 = vmatpush1.bf16.msra.mxu0 %v402
      %442 = vmatprep.subr.bf16.mxu0 0
      %443 = vmatpush1.bf16.msra.mxu0 %v403
      %444 = vmatprep.subr.bf16.mxu0 0
      %445 = vmatpush1.bf16.msra.mxu0 %v404
      %446 = vmatprep.subr.bf16.mxu0 0
      %447 = vmatpush1.bf16.msra.mxu0 %v405
      %448 = vmatprep.subr.bf16.mxu0 0
      %449 = vmatpush1.bf16.msra.mxu0 %v406
      %450 = vmatprep.subr.bf16.mxu0 0
      %451 = vmatpush1.bf16.msra.mxu0 %v407
      %452 = vmatprep.subr.bf16.mxu0 0
      %453 = vmatpush1.bf16.msra.mxu0 %v408
      %454 = vmatprep.subr.bf16.mxu0 0
      %455 = vmatpush1.bf16.msra.mxu0 %v409
      %456 = vmatprep.subr.bf16.mxu0 0
      %457 = vmatpush1.bf16.msra.mxu0 %v410
      %458 = vmatprep.subr.bf16.mxu0 0
      %459 = vmatpush1.bf16.msra.mxu0 %v411
      %460 = vmatprep.mubr.bf16.mxu0 %v329
      %461 = vmatmul.mubr.bf16.gmra.mrb[0].mxu0 %v328
      %v462 = vpop.f32.mrb[0].mxu0
      %v463 = vadd.f32 %v320, %v462
      %v464 = vpop.f32.mrb[0].mxu0
      %v465 = vpop.f32.mrb[0].mxu0
      %v466 = vadd.f32 %v320, %v465
      %v467 = vpop.f32.mrb[0].mxu0
      %468 = vdwg.mxu0
      %v469 = vld [vmem:[%s272] sm:$0xf]
      %v470 = vld [vmem:[%s272 + $0x4] sm:$0xf]
      %v471 = vunpack.c.l.bf16 %v469
      %v472 = vunpack.c.l.bf16 %v470
      %v473 = vadd.f32 %v463, %v471
      %v474 = vadd.f32 %v466, %v472
      %475 = vadd.xlane.f32.xlu0 %v473
      %v476 = vpop.xlane.xlu0 %475
      %477 = vadd.xlane.f32.xlu0 %v474
      %v478 = vpop.xlane.xlu0 %477
      %v479 = vrcp.pop 128.0
      %v480 = vmul.f32 %v476, %v479
      %v481 = vmul.f32 %v478, %v479
      %v482 = vsub.f32 %v473, %v480
      %v483 = vsub.f32 %v474, %v481
      %v484 = vmul.f32 %v482, %v482
      %v485 = vmul.f32 %v483, %v483
      %486 = vadd.xlane.f32.xlu0 %v484
      %v487 = vpop.xlane.xlu0 %486
      %488 = vadd.xlane.f32.xlu0 %v485
      %v489 = vpop.xlane.xlu0 %488
      %v490 = vmul.f32 %v487, %v479
      %v491 = vmul.f32 %v489, %v479
      %v492 = vadd.f32 %v490, 1e-12
      %v493 = vadd.f32 %v491, 1e-12
      %v494 = vrsqrt.pop %v492
      %v495 = vrsqrt.pop %v493
      %v496 = vmul.f32 %v482, %v494
      %v497 = vmul.f32 %v483, %v495
      %v498 = vld [vmem:[%s4] sm:$0x1]
      %v500 = vlaneseq
      %v501 = vshrl.u32 %v500, 7
      %v502 = vsub.s32 0, %v501
      %v503 = vrot.slane %v498, %v502
      %v505 = vmul.f32 %v496, %v503
      %v506 = vmul.f32 %v497, %v503
      %v507 = vld [vmem:[%s5] sm:$0x1]
      %v509 = vlaneseq
      %v510 = vshrl.u32 %v509, 7
      %v511 = vsub.s32 0, %v510
      %v512 = vrot.slane %v507, %v511
      %v514 = vadd.f32 %v505, %v512
      %v515 = vadd.f32 %v506, %v512
      %v516 = vpack.c.bf16 %v515, %v514
      %v518 = vunpack.c.l.b16 %v516
      %v519 = vunpack.c.h.b16 %v516
      %v520 = vpack.c.b16 %v518, %v518
      %v521 = vpack.c.b16 %v519, %v519
      %524 = vst [vmem:[%s278] sm:$0xf] %v520
      %525 = vst [vmem:[%s278 + $0x4] sm:$0xf] %v521
      %s526 = smul.u32 2, %s17
      %p527 = scmp.lt.s32.totalorder %s526, 3
      %s528 = scalar_select %p527, %s526, 3
      %s529 = smul.addr %s528, 4
      %s530 = scalar_lea.vmem %s6, %s529
      // Predicated region
      $region45: #{bertsum_forward.17} parent=43 // pred_check
        %p531 = pneg %p171
      $region46: #{bertsum_forward.17} parent=43 // pred_check_branch
        %533 = sbr.rel (%p531) target = $region48
      $region47: #{bertsum_forward.17} parent=43 // pred_region
        %s534 = smul.u32 2, %s17
      $region48: #{bertsum_forward.17} parent=43 // pred_fallthru
        _
    $region44: #{bertsum_forward.17} parent=5 // pred_fallthru
      _
    %p535 = scmp.le.s32.totalorder 2, %s12
    // Predicated region
    $region49: #{bertsum_forward.17} parent=5 // pred_check
      %p536 = pneg %p535
    $region50: #{bertsum_forward.17} parent=5 // pred_check_branch
      %538 = sbr.rel (%p536) target = $region52
    $region51: #{bertsum_forward.17} parent=5 // pred_region
      %s539 = ssub.s32 %s12, 2
      // Predicated region
      $region53: #{bertsum_forward.17} parent=51 // pred_check
        %p540 = pneg %p177
      $region54: #{bertsum_forward.17} parent=51 // pred_check_branch
        %542 = sbr.rel (%p540) target = $region56
      $region55: #{bertsum_forward.17} parent=51 // pred_region
        %s543 = smul.u32 2, %s18
        %p544 = scmp.lt.s32.totalorder %s543, 3
        %s545 = scalar_select %p544, %s543, 3
        %s546 = smul.addr %s545, 4
        %s547 = scalar_lea.vmem %s6, %s546
      $region56: #{bertsum_forward.17} parent=51 // pred_fallthru
        _
    $region52: #{bertsum_forward.17} parent=5 // pred_fallthru
      _
  $region6: #{bertsum_forward.17} parent=0 // loop_footer
    %s16 = sadd.s32 1, %s12
  $region7: #{bertsum_forward.17} parent=0 // loop_footer_branch
    %11 = sbr.rel target = $region3
  $region8: #{bertsum_forward.17} parent=0 // loop_exit
    _

// kernel: bertsum_forward.23
$region0: #{bertsum_forward.23}
  #allocation0 [shape = 'u32[]', space=smem, size = 0x4, offset = 0x4, fixed_abs, tag = 'smem constant byte address 0x4 - core index']
  #allocation1 [shape = 'u32[144,128]{1,0:T(1,128)}', space=vmem, size = 0x12000, scoped, tag = 'internal scratch']
  #allocation2 [shape = 'f32[1,1]{1,0:T(1,128)S(1)}', space=vmem, size = 0x200, scoped, tag = 'scoped memory for bertsum_forward.23']
  %s0 = inlined_call_operand.vmem [shape: bf16[8,128], index: 0, kind: input, shape index: {}]
  %s1 = inlined_call_operand.vmem [shape: f32[1,128], index: 1, kind: input, shape index: {}]
  %s2 = inlined_call_operand.<no memory space> [shape: f32[1,1], index: 2, kind: input, shape index: {}]
  %s3 = inlined_call_operand.vmem [shape: f32[8,1], index: 3, kind: input, shape index: {}]
  %s4 = inlined_call_operand.vmem [shape: f32[8,1], index: 4, kind: output, shape index: {}]
  %s5 = sld [smem:[#allocation0]]
  $region26: #{bertsum_forward.23} parent=0
    _
  %s7 = ssub.s32 1, %s5
  %s8 = scalar_select 0, %s7, %s5
  %v9 = vstv %s2
  %10 = vst [vmem:[#allocation2] sm:$0x1] %v9
  // Predicated region
  $region2: #{bertsum_forward.23} parent=0 // pred_check
    _
  $region3: #{bertsum_forward.23} parent=0 // pred_check_branch
    %12 = sbr.rel (0) target = $region5
  $region4: #{bertsum_forward.23} parent=0 // pred_region
    _
  $region5: #{bertsum_forward.23} parent=0 // pred_fallthru
    _
  // Predicated region
  $region6: #{bertsum_forward.23} parent=0 // pred_check
    _
  $region7: #{bertsum_forward.23} parent=0 // pred_check_branch
    %14 = sbr.rel (0) target = $region9
  $region8: #{bertsum_forward.23} parent=0 // pred_region
    _
  $region9: #{bertsum_forward.23} parent=0 // pred_fallthru
    _
  // Predicated region
  $region10: #{bertsum_forward.23} parent=0 // pred_check
    _
  $region11: #{bertsum_forward.23} parent=0 // pred_check_branch
    %16 = sbr.rel (0) target = $region13
  $region12: #{bertsum_forward.23} parent=0 // pred_region
    _
  $region13: #{bertsum_forward.23} parent=0 // pred_fallthru
    _
  // Predicated region
  $region14: #{bertsum_forward.23} parent=0 // pred_check
    _
  $region15: #{bertsum_forward.23} parent=0 // pred_check_branch
    %18 = sbr.rel (0) target = $region17
  $region16: #{bertsum_forward.23} parent=0 // pred_region
    _
  $region17: #{bertsum_forward.23} parent=0 // pred_fallthru
    _
  %v19 = vld [vmem:[%s0] sm:$0xf]
  %v20 = vunpack.c.l.bf16 %v19
  %v21 = vld [vmem:[%s1] sm:$0x1]
  %v23 = vlaneseq
  %v24 = vshrl.u32 %v23, 7
  %v25 = vsub.s32 0, %v24
  %v26 = vrot.slane %v21, %v25
  %v28 = vmul.f32 %v20, %v26
  %29 = vadd.xlane.f32.xlu0 %v28
  %v30 = vpop.xlane.xlu0 %29
  %v31 = vld [vmem:[#allocation2] sm:$0x1]
  %v33 = vlaneseq
  %v34 = vshrl.u32 %v33, 7
  %v35 = vsub.s32 0, %v34
  %v36 = vrot.slane %v31, %v35
  %v38 = vadd.f32 %v30, %v36
  %v39 = vxor.u32 %v38, 2147483648
  %v40 = vmul.f32 %v39, 1.442695
  %v41 = vpow.pop %v40
  %v42 = vadd.f32 %v41, 1.0
  %v43 = vrcp.pop %v42
  %v44 = vmul.f32 1.0, %v43
  %v45 = vld [vmem:[%s3] sm:$0xff]
  %v46 = vmul.f32 %v44, %v45
  %vm47 = vcmask 7168
  %48 = vst.msk [vmem:[%s4] sm:$0xff] %vm47, %v46
  // Predicated region
  $region18: #{bertsum_forward.23} parent=0 // pred_check
    _
  $region19: #{bertsum_forward.23} parent=0 // pred_check_branch
    %50 = sbr.rel (0) target = $region21
  $region20: #{bertsum_forward.23} parent=0 // pred_region
    _
  $region21: #{bertsum_forward.23} parent=0 // pred_fallthru
    _
  // Predicated region
  $region22: #{bertsum_forward.23} parent=0 // pred_check
    _
  $region23: #{bertsum_forward.23} parent=0 // pred_check_branch
    %52 = sbr.rel (0) target = $region25
  $region24: #{bertsum_forward.23} parent=0 // pred_region
    _
  $region25: #{bertsum_forward.23} parent=0 // pred_fallthru
    _

</llo_original>
